<compile_context>
chip_gen: v6e
topology: v6e:2x2x1
jax: 0.10.0
libtpu: 0.0.40
codegen_flags: <defaults>
</compile_context>

<pallas_src>
import numpy as np
import jax
import jax.numpy as jnp
from jax.experimental import pallas as pl
from jax.experimental.pallas import tpu as pltpu

BN_EPS = 1e-5
VMEM_LIMIT = 32 * 1024 * 1024   # safe scoped-VMEM budget on v5e/v6e/v7x


def fold_bn(gamma, beta, mean, var):
    scale = gamma / jnp.sqrt(var + BN_EPS)
    shift = beta - mean * scale
    return scale, shift


def _shl(x, s, Lp):
    """Lane-axis left shift by s: out[:, f] = x[:, (f + s) % Lp] (XLU rotate)."""
    if s == 0:
        return x
    return pltpu.roll(x, (Lp - s) % Lp, axis=1)


# ---------------------------------------------------------------------------
# Fused conv1 + conv2 + MaxPool2d(2) + NCHW-flatten kernel (one sample / step)
# ---------------------------------------------------------------------------

def make_conv_fused_kernel(KH1, KW1, KH2, KW2, C1, C2, W, Lp, mm_dtype):
    """VALID convs (stride 1) + bias + ReLU + folded BN, fused 2x2 max-pool.

    Activations live as channel-first flat matrices (C, Lp) with row stride W;
    only the top-left valid window is meaningful, trailing rows/cols and the
    lane padding [H*W, Lp) are don't-care (finite, never selected).
    """
    def kernel(x_ref, w1_ref, b1_ref, s1_ref, t1_ref,
               w2_ref, b2_ref, s2_ref, t2_ref,
               sel_ref, o_ref, tap_ref):
        # --- conv1: stack the 9 rolled rows (Cin=1) -> one K=9 MXU matmul ---
        x = x_ref[0].astype(mm_dtype)                        # (1, Lp)
        rows = [_shl(x, kh * W + kw, Lp)
                for kh in range(KH1) for kw in range(KW1)]
        x9 = jnp.concatenate(rows, axis=0)                   # (KH1*KW1, Lp)
        a1 = jnp.dot(w1_ref[...], x9, preferred_element_type=jnp.float32)
        y1 = jnp.maximum(a1 + b1_ref[...], 0.0) * s1_ref[...] + t1_ref[...]

        # --- conv2: 25 rolled copies into VMEM scratch -> ONE K=400 matmul ---
        y1m = y1.astype(mm_dtype)                            # (C1, Lp)
        for tap in range(KH2 * KW2):
            kh, kw = divmod(tap, KW2)
            tap_ref[tap * C1:(tap + 1) * C1, :] = _shl(y1m, kh * W + kw, Lp)
        a2 = jnp.dot(w2_ref[...], tap_ref[...],
                     preferred_element_type=jnp.float32)     # (C2, Lp)
        y2 = jnp.maximum(a2 + b2_ref[...], 0.0) * s2_ref[...] + t2_ref[...]

        # --- fused MaxPool2d(2): two rolled maxima + lane-dense compaction ---
        p = jnp.maximum(y2, _shl(y2, 1, Lp))                 # cols j, j+1
        p = jnp.maximum(p, _shl(p, W, Lp))                   # rows i, i+1
        # 0/1 selection matmul (kept f32): picks the stride-2 lattice and emits
        # a 128-lane padded, NCHW-flatten-ordered feature slab per channel.
        # TODO(synk): at the nominal 256x256 input replace this dense selection
        # matmul with strided compaction (the (L, Hp*Wp) matrix does not scale).
        res = jnp.dot(p, sel_ref[...], preferred_element_type=jnp.float32)
        o_ref[0] = res.astype(o_ref.dtype)                   # (C2, 128)
    return kernel


def conv_fused(x_flat, prep, sel, *, KH1, KW1, KH2, KW2, W, Lp, out_lanes):
    """x_flat: (N, 1, Lp) zero-padded channel-first flat images."""
    N = x_flat.shape[0]
    C1 = prep["w1m"].shape[0]
    C2 = prep["w2m"].shape[0]
    mm_dtype = prep["w2m"].dtype
    K2 = KH2 * KW2 * C1
    kernel = make_conv_fused_kernel(KH1, KW1, KH2, KW2, C1, C2, W, Lp, mm_dtype)

    cst = lambda shape: pl.BlockSpec(shape, lambda n, _s=len(shape): (0,) * _s)
    return pl.pallas_call(
        kernel,
        out_shape=jax.ShapeDtypeStruct((N, C2, out_lanes), mm_dtype),
        grid=(N,),
        in_specs=[
            pl.BlockSpec((1, 1, Lp), lambda n: (n, 0, 0)),    # one sample / step
            cst(prep["w1m"].shape),                           # (C1, KH1*KW1)
            cst((C1, 1)), cst((C1, 1)), cst((C1, 1)),         # bias / BN
            cst(prep["w2m"].shape),                           # (C2, K2)
            cst((C2, 1)), cst((C2, 1)), cst((C2, 1)),
            cst(sel.shape),                                   # (Lp, out_lanes)
        ],
        out_specs=pl.BlockSpec((1, C2, out_lanes), lambda n: (n, 0, 0)),
        scratch_shapes=[pltpu.VMEM((K2, Lp), mm_dtype)],      # stacked conv2 rhs
        compiler_params=pltpu.CompilerParams(
            dimension_semantics=("parallel",),                # v7x dual-TC batch
            vmem_limit_bytes=VMEM_LIMIT),
    )(x_flat, prep["w1m"], prep["b1"], prep["s1"], prep["t1"],
      prep["w2m"], prep["b2"], prep["s2"], prep["t2"], sel)


# ---------------------------------------------------------------------------
# Fused dense head: lin1(+ReLU+BN) K-streamed, lin2(+ReLU+BN), lin3(+softmax)
# ---------------------------------------------------------------------------

def dense_fused_kernel(x_ref, w1_ref, b1_ref, s1_ref, t1_ref,
                       w2_ref, b2_ref, s2_ref, t2_ref,
                       w3_ref, b3_ref, o_ref, acc_ref):
    k = pl.program_id(0)

    @pl.when(k == 0)
    def _():
        acc_ref[...] = jnp.zeros_like(acc_ref)

    acc_ref[...] += jnp.dot(x_ref[...].astype(w1_ref.dtype), w1_ref[...],
                            preferred_element_type=jnp.float32)

    @pl.when(k == pl.num_programs(0) - 1)
    def _():
        h1 = jnp.maximum(acc_ref[...] + b1_ref[...], 0.0) * s1_ref[...] + t1_ref[...]
        h2 = jnp.dot(h1.astype(w2_ref.dtype), w2_ref[...],
                     preferred_element_type=jnp.float32) + b2_ref[...]
        h2 = jnp.maximum(h2, 0.0) * s2_ref[...] + t2_ref[...]
        logits = jnp.dot(h2.astype(w3_ref.dtype), w3_ref[...],
                         preferred_element_type=jnp.float32) + b3_ref[...]
        m = jnp.max(logits, axis=-1, keepdims=True)
        e = jnp.exp(logits - m)
        o_ref[...] = e / jnp.sum(e, axis=-1, keepdims=True)


def dense_fused(feat, w1, b1, s1, t1, w2, b2, s2, t2, w3, b3, *, tk=1024):
    Nb, Kp = feat.shape
    K1, H1 = w1.shape
    assert K1 == Kp and Kp % tk == 0
    H2 = w2.shape[1]
    C = w3.shape[1]
    kt = Kp // tk
    row = lambda v: v.reshape(1, -1).astype(jnp.float32)
    return pl.pallas_call(
        dense_fused_kernel,
        out_shape=jax.ShapeDtypeStruct((Nb, C), jnp.float32),
        grid=(kt,),                                       # stream w1 over K tiles
        in_specs=[
            pl.BlockSpec((Nb, tk), lambda k: (0, k)),
            pl.BlockSpec((tk, H1), lambda k: (k, 0),
                         pipeline_mode=pl.Buffered(3)),   # deeper weight stream
            pl.BlockSpec((1, H1), lambda k: (0, 0)),
            pl.BlockSpec((1, H1), lambda k: (0, 0)),
            pl.BlockSpec((1, H1), lambda k: (0, 0)),
            pl.BlockSpec((H1, H2), lambda k: (0, 0)),
            pl.BlockSpec((1, H2), lambda k: (0, 0)),
            pl.BlockSpec((1, H2), lambda k: (0, 0)),
            pl.BlockSpec((1, H2), lambda k: (0, 0)),
            pl.BlockSpec((H2, C), lambda k: (0, 0)),
            pl.BlockSpec((1, C), lambda k: (0, 0)),
        ],
        out_specs=pl.BlockSpec((Nb, C), lambda k: (0, 0)),
        scratch_shapes=[pltpu.VMEM((Nb, H1), jnp.float32)],
        compiler_params=pltpu.CompilerParams(
            dimension_semantics=("arbitrary",),           # reduction axis
            vmem_limit_bytes=VMEM_LIMIT),
    )(feat, w1, row(b1), row(s1), row(t1),
      w2, row(b2), row(s2), row(t2), w3, row(b3))


# ---------------------------------------------------------------------------
# Offline parameter preparation: pack conv taps, fold BN, re-index lin1 rows
# ---------------------------------------------------------------------------

def make_pool_select(W, Hp, Wp, Lp, lane_pad):
    """(Lp, lane_pad) 0/1 matrix: flat pos (2*ip*W + 2*jp) -> lane (ip*Wp+jp)."""
    S = np.zeros((Lp, lane_pad), np.float32)
    for ip in range(Hp):
        for jp in range(Wp):
            S[2 * ip * W + 2 * jp, ip * Wp + jp] = 1.0
    return jnp.asarray(S)


def prepare_params(p, *, Hp, Wp, lane_pad, mm_dtype):
    def pack_conv(w_hwio):
        KH, KW, Cin, Cout = w_hwio.shape
        # (Cout, KH*KW*Cin): column (kh*KW+kw)*Cin + ci  <->  w[kh, kw, ci, co]
        return (jnp.transpose(w_hwio, (3, 0, 1, 2))
                .reshape(Cout, KH * KW * Cin).astype(mm_dtype))

    s1, t1 = fold_bn(*p["bn1"])
    s2, t2 = fold_bn(*p["bn2"])
    s3, t3 = fold_bn(*p["bn3"])
    s4, t4 = fold_bn(*p["bn4"])

    C2 = p["w2"].shape[3]
    HW = Hp * Wp
    H1 = p["lw1"].shape[1]
    assert p["lw1"].shape[0] == C2 * HW
    # re-index lin1 rows from compact NCHW flatten (C2*HW) to the lane-dense
    # padded layout (C2*lane_pad) that the fused conv kernel emits
    lw1_pad = jnp.zeros((C2 * lane_pad, H1), jnp.float32)
    rows = (jnp.arange(C2)[:, None] * lane_pad + jnp.arange(HW)[None, :]).reshape(-1)
    lw1_pad = lw1_pad.at[rows].set(p["lw1"])

    col = lambda v: v.reshape(-1, 1).astype(jnp.float32)
    return dict(
        w1m=pack_conv(p["w1"]), b1=col(p["b1"]), s1=col(s1), t1=col(t1),
        w2m=pack_conv(p["w2"]), b2=col(p["b2"]), s2=col(s2), t2=col(t2),
        lw1=lw1_pad.astype(mm_dtype), lb1=p["lb1"], s3=s3, t3=t3,
        lw2=p["lw2"].astype(mm_dtype), lb2=p["lb2"], s4=s4, t4=t4,
        lw3=p["lw3"].astype(mm_dtype), lb3=p["lb3"],
    )


# ---------------------------------------------------------------------------
# Forward pass using the Pallas kernels
# ---------------------------------------------------------------------------

def forward(prep, sel, x_nchw, *, Lp, lane_pad,
            KH1=3, KW1=3, KH2=5, KW2=5, tk=1024):
    N, Cin, H0, W0 = x_nchw.shape
    assert Cin == 1
    L = H0 * W0
    Hp = (H0 - KH1 - KH2 + 2) // 2
    Wp = (W0 - KW1 - KW2 + 2) // 2
    # (review) safety asserts for the roll-based shift scheme:
    #  1) a valid pooled output never reads past the original image extent
    max_read = ((2 * (Hp - 1) + 1 + (KH2 - 1) + (KH1 - 1)) * W0
                + (2 * (Wp - 1) + 1 + (KW2 - 1) + (KW1 - 1)))
    assert max_read < L, "conv/pool reach exceeds image flat extent"
    #  2) roll wrap-around only contaminates the zero-padded lane region
    max_shift = max((KH2 - 1) * W0 + (KW2 - 1), (KH1 - 1) * W0 + (KW1 - 1), W0 + 1)
    assert max_shift <= Lp - L, "lane padding too small for wrap-free rolls"
    assert Hp * Wp <= lane_pad

    x = jnp.pad(x_nchw.reshape(N, 1, L), ((0, 0), (0, 0), (0, Lp - L)))
    # conv1 + conv2 + MaxPool2d(2) + flatten, one kernel (Dropout2d = identity)
    y = conv_fused(x, prep, sel, KH1=KH1, KW1=KW1, KH2=KH2, KW2=KW2,
                   W=W0, Lp=Lp, out_lanes=lane_pad)      # (N, 32, lane_pad)
    feat = y.reshape(N, -1)                              # lane-dense, zero-padded
    # lin1/lin2 (+ReLU+BN1d, Dropout = identity) and lin3 + Softmax, fused
    return dense_fused(feat, prep["lw1"], prep["lb1"], prep["s3"], prep["t3"],
                       prep["lw2"], prep["lb2"], prep["s4"], prep["t4"],
                       prep["lw3"], prep["lb3"], tk=tk)


# Pure-JAX reference (no Pallas) for the numerical check.
def forward_ref(params, x_nchw):
    p = params
    x = jnp.transpose(x_nchw, (0, 2, 3, 1))

    def conv(x, w, b, bn):
        y = jax.lax.conv_general_dilated(
            x, w, (1, 1), "VALID",
            dimension_numbers=("NHWC", "HWIO", "NHWC"),
            precision=jax.lax.Precision.HIGHEST)
        y = jnp.maximum(y + b, 0.0)
        s, t = fold_bn(*bn)
        return y * s + t

    x = conv(x, p["w1"], p["b1"], p["bn1"])
    x = conv(x, p["w2"], p["b2"], p["bn2"])
    x = jax.lax.reduce_window(x, -jnp.inf, jax.lax.max,
                              (1, 2, 2, 1), (1, 2, 2, 1), "VALID")
    x = jnp.transpose(x, (0, 3, 1, 2)).reshape(x.shape[0], -1)

    def dense(x, w, b, bn):
        y = jnp.maximum(jnp.dot(x, w, precision=jax.lax.Precision.HIGHEST) + b, 0.0)
        s, t = fold_bn(*bn)
        return y * s + t

    x = dense(x, p["lw1"], p["lb1"], p["bn3"])
    x = dense(x, p["lw2"], p["lb2"], p["bn4"])
    logits = jnp.dot(x, p["lw3"], precision=jax.lax.Precision.HIGHEST) + p["lb3"]
    return jax.nn.softmax(logits, axis=1)


# ---------------------------------------------------------------------------
# Deterministic parameter construction + demo
# ---------------------------------------------------------------------------

def make_params(key, in_feats, classes):
    ks = jax.random.split(key, 32)

    def bn(i, c):
        gamma = 1.0 + 0.1 * jax.random.normal(ks[i], (c,), jnp.float32)
        beta = 0.05 * jax.random.normal(ks[i + 1], (c,), jnp.float32)
        mean = 0.05 * jax.random.normal(ks[i + 2], (c,), jnp.float32)
        var = jax.random.uniform(ks[i + 3], (c,), jnp.float32, 0.5, 1.5)
        return (gamma, beta, mean, var)

    return dict(
        w1=0.10 * jax.random.normal(ks[0], (3, 3, 1, 16), jnp.float32),
        b1=0.05 * jax.random.normal(ks[1], (16,), jnp.float32),
        bn1=bn(2, 16),
        w2=0.05 * jax.random.normal(ks[6], (5, 5, 16, 32), jnp.float32),
        b2=0.05 * jax.random.normal(ks[7], (32,), jnp.float32),
        bn2=bn(8, 32),
        lw1=0.02 * jax.random.normal(ks[12], (in_feats, 512), jnp.float32),
        lb1=0.05 * jax.random.normal(ks[13], (512,), jnp.float32),
        bn3=bn(14, 512),
        lw2=0.05 * jax.random.normal(ks[18], (512, 64), jnp.float32),
        lb2=0.05 * jax.random.normal(ks[19], (64,), jnp.float32),
        bn4=bn(20, 64),
        lw3=0.10 * jax.random.normal(ks[24], (64, 10), jnp.float32),
        lb3=0.05 * jax.random.normal(ks[25], (10,), jnp.float32),
    )


if __name__ == "__main__":
    # Small shapes: batch=2, 1 input channel, 20x20 spatial.
    # conv1(3x3) -> 18x18, conv2(5x5) -> 14x14, maxpool(2) -> 7x7
    # => flatten features = 32*7*7 = 1568 (scaled-down analogue of 32*125*125),
    #    emitted lane-dense as 32*128 = 4096 for 128-aligned K-streaming of lin1.
    # TODO(synk): training-mode Dropout / batch-statistics BatchNorm not
    # implemented (eval-mode semantics only).
    # TODO(synk): at the nominal 256x256 input the fused conv kernel needs
    # L-tiling with a (KH-1)-row halo; at the demo scale one block suffices.
    N, S, CLASSES = 2, 20, 10
    H0 = W0 = S
    KH1 = KW1 = 3
    KH2 = KW2 = 5
    Hp = (H0 - KH1 - KH2 + 2) // 2          # 7
    Wp = (W0 - KW1 - KW2 + 2) // 2          # 7
    F = 32 * Hp * Wp                        # 1568 (lin1 logical fan-in)
    L = H0 * W0                             # 400
    LANE_PAD = 128                          # lane-dense pooled features / channel
    max_shift = (KH2 - 1) * W0 + (KW2 - 1)  # largest roll used (84)
    LP = -(-(L + max_shift) // 128) * 128   # 512: padded flat-activation lanes

    key = jax.random.PRNGKey(0)
    kx, kp = jax.random.split(key)
    x = jax.random.normal(kx, (N, 1, S, S), jnp.float32)    # NCHW like PyTorch
    params = make_params(kp, F, CLASSES)
    sel = make_pool_select(W0, Hp, Wp, LP, LANE_PAD)

    ref = jax.block_until_ready(forward_ref(params, x))

    # f32 MXU operands: tight numerical check against the f32 reference.
    prep32 = prepare_params(params, Hp=Hp, Wp=Wp, lane_pad=LANE_PAD,
                            mm_dtype=jnp.float32)
    out32 = jax.block_until_ready(
        forward(prep32, sel, x, Lp=LP, lane_pad=LANE_PAD, tk=1024))

    # bf16 MXU operands (f32 accumulation, f32 epilogue): perf config for
    # v5e/v6e/v7x — 2x+ MXU rate, half the streamed-weight / activation bytes.
    prep16 = prepare_params(params, Hp=Hp, Wp=Wp, lane_pad=LANE_PAD,
                            mm_dtype=jnp.bfloat16)
    out16 = jax.block_until_ready(
        forward(prep16, sel, x, Lp=LP, lane_pad=LANE_PAD, tk=1024))

    for o in (out32, out16):
        assert o.shape == (N, CLASSES)
        assert bool(jnp.all(jnp.isfinite(o)))
        assert np.allclose(np.asarray(jnp.sum(o, axis=1)), 1.0, atol=1e-4)
    assert np.allclose(np.asarray(out32), np.asarray(ref), atol=5e-3, rtol=5e-2)
    assert np.allclose(np.asarray(out16), np.asarray(ref), atol=2.5e-2)

    print("KERNEL_OK")
</pallas_src>

<mosaic_0001>
module attributes {stable_mosaic.version = 11 : i64} {
  func.func @kernel(%arg0: i32, %arg1: memref<1x1x512xf32, #tpu.memory_space<vmem>>, %arg2: memref<16x9xf32, #tpu.memory_space<vmem>>, %arg3: memref<16x1xf32, #tpu.memory_space<vmem>>, %arg4: memref<16x1xf32, #tpu.memory_space<vmem>>, %arg5: memref<16x1xf32, #tpu.memory_space<vmem>>, %arg6: memref<32x400xf32, #tpu.memory_space<vmem>>, %arg7: memref<32x1xf32, #tpu.memory_space<vmem>>, %arg8: memref<32x1xf32, #tpu.memory_space<vmem>>, %arg9: memref<32x1xf32, #tpu.memory_space<vmem>>, %arg10: memref<512x128xf32, #tpu.memory_space<vmem>>, %arg11: memref<1x32x128xf32, #tpu.memory_space<vmem>>, %arg12: memref<400x512xf32, #tpu.memory_space<vmem>>) attributes {dimension_semantics = [#tpu.dimension_semantics<parallel>], iteration_bounds = array<i64: 2>, scalar_prefetch = 0 : i64, scratch_operands = 1 : i64, tpu.core_type = #tpu.core_type<tc>, window_params = [{transform_indices = @transform_0, window_bounds = array<i64: 1, 1, 512>}, {pipeline_mode = #tpu.pipeline_mode<synchronous>, transform_indices = @transform_1, window_bounds = array<i64: 16, 9>}, {pipeline_mode = #tpu.pipeline_mode<synchronous>, transform_indices = @transform_2, window_bounds = array<i64: 16, 1>}, {pipeline_mode = #tpu.pipeline_mode<synchronous>, transform_indices = @transform_3, window_bounds = array<i64: 16, 1>}, {pipeline_mode = #tpu.pipeline_mode<synchronous>, transform_indices = @transform_4, window_bounds = array<i64: 16, 1>}, {pipeline_mode = #tpu.pipeline_mode<synchronous>, transform_indices = @transform_5, window_bounds = array<i64: 32, 400>}, {pipeline_mode = #tpu.pipeline_mode<synchronous>, transform_indices = @transform_6, window_bounds = array<i64: 32, 1>}, {pipeline_mode = #tpu.pipeline_mode<synchronous>, transform_indices = @transform_7, window_bounds = array<i64: 32, 1>}, {pipeline_mode = #tpu.pipeline_mode<synchronous>, transform_indices = @transform_8, window_bounds = array<i64: 32, 1>}, {pipeline_mode = #tpu.pipeline_mode<synchronous>, transform_indices = @transform_9, window_bounds = array<i64: 512, 128>}, {transform_indices = @transform_10, window_bounds = array<i64: 1, 32, 128>}]} {
    %c0 = arith.constant 0 : index
    %c0_0 = arith.constant 0 : index
    %c0_1 = arith.constant 0 : index
    %0 = vector.load %arg1[%c0, %c0_0, %c0_1] : memref<1x1x512xf32, #tpu.memory_space<vmem>>, vector<1x1x512xf32>
    %1 = vector.shape_cast %0 : vector<1x1x512xf32> to vector<1x512xf32>
    %c511_i32 = arith.constant 511 : i32
    %2 = tpu.dynamic_rotate %1 by %c511_i32 dim 1 : vector<1x512xf32>, i32 -> vector<1x512xf32>
    %c510_i32 = arith.constant 510 : i32
    %3 = tpu.dynamic_rotate %1 by %c510_i32 dim 1 : vector<1x512xf32>, i32 -> vector<1x512xf32>
    %c492_i32 = arith.constant 492 : i32
    %4 = tpu.dynamic_rotate %1 by %c492_i32 dim 1 : vector<1x512xf32>, i32 -> vector<1x512xf32>
    %c491_i32 = arith.constant 491 : i32
    %5 = tpu.dynamic_rotate %1 by %c491_i32 dim 1 : vector<1x512xf32>, i32 -> vector<1x512xf32>
    %c490_i32 = arith.constant 490 : i32
    %6 = tpu.dynamic_rotate %1 by %c490_i32 dim 1 : vector<1x512xf32>, i32 -> vector<1x512xf32>
    %c472_i32 = arith.constant 472 : i32
    %7 = tpu.dynamic_rotate %1 by %c472_i32 dim 1 : vector<1x512xf32>, i32 -> vector<1x512xf32>
    %c471_i32 = arith.constant 471 : i32
    %8 = tpu.dynamic_rotate %1 by %c471_i32 dim 1 : vector<1x512xf32>, i32 -> vector<1x512xf32>
    %c470_i32 = arith.constant 470 : i32
    %9 = tpu.dynamic_rotate %1 by %c470_i32 dim 1 : vector<1x512xf32>, i32 -> vector<1x512xf32>
    %10 = tpu.concatenate %1, %2, %3, %4, %5, %6, %7, %8, %9 in 0 : vector<1x512xf32>, vector<1x512xf32>, vector<1x512xf32>, vector<1x512xf32>, vector<1x512xf32>, vector<1x512xf32>, vector<1x512xf32>, vector<1x512xf32>, vector<1x512xf32> -> vector<9x512xf32>
    %c0_2 = arith.constant 0 : index
    %c0_3 = arith.constant 0 : index
    %11 = vector.load %arg2[%c0_2, %c0_3] : memref<16x9xf32, #tpu.memory_space<vmem>>, vector<16x9xf32>
    %cst = arith.constant dense<0.000000e+00> : vector<16x512xf32>
    %12 = tpu.matmul %11, %10, %cst {dimension_numbers = #tpu.dot_dimension_numbers<[1], [0], [0], [1], [0, 0, 1, 1], [], []>} : vector<16x9xf32>, vector<9x512xf32>, vector<16x512xf32> -> vector<16x512xf32>
    %c0_4 = arith.constant 0 : index
    %c0_5 = arith.constant 0 : index
    %13 = vector.load %arg3[%c0_4, %c0_5] : memref<16x1xf32, #tpu.memory_space<vmem>>, vector<16x1xf32>
    %14 = vector.broadcast %13 : vector<16x1xf32> to vector<16x512xf32>
    %15 = arith.addf %12, %14 : vector<16x512xf32>
    %cst_6 = arith.constant 0.000000e+00 : f32
    %16 = vector.broadcast %cst_6 : f32 to vector<16x512xf32>
    %17 = arith.maximumf %15, %16 : vector<16x512xf32>
    %c0_7 = arith.constant 0 : index
    %c0_8 = arith.constant 0 : index
    %18 = vector.load %arg4[%c0_7, %c0_8] : memref<16x1xf32, #tpu.memory_space<vmem>>, vector<16x1xf32>
    %19 = vector.broadcast %18 : vector<16x1xf32> to vector<16x512xf32>
    %20 = arith.mulf %17, %19 : vector<16x512xf32>
    %c0_9 = arith.constant 0 : index
    %c0_10 = arith.constant 0 : index
    %21 = vector.load %arg5[%c0_9, %c0_10] : memref<16x1xf32, #tpu.memory_space<vmem>>, vector<16x1xf32>
    %22 = vector.broadcast %21 : vector<16x1xf32> to vector<16x512xf32>
    %23 = arith.addf %20, %22 : vector<16x512xf32>
    %c0_11 = arith.constant 0 : index
    %c0_12 = arith.constant 0 : index
    %24 = vector.load %arg12[%c0_11, %c0_12] : memref<400x512xf32, #tpu.memory_space<vmem>>, vector<16x512xf32>
    tpu.vector_store %arg12[%c0_11, %c0_12], %23 {strides = array<i32>} : memref<400x512xf32, #tpu.memory_space<vmem>>, vector<16x512xf32>,
    %c511_i32_13 = arith.constant 511 : i32
    %25 = tpu.dynamic_rotate %23 by %c511_i32_13 dim 1 : vector<16x512xf32>, i32 -> vector<16x512xf32>
    %c16 = arith.constant 16 : index
    %c0_14 = arith.constant 0 : index
    %26 = vector.load %arg12[%c16, %c0_14] : memref<400x512xf32, #tpu.memory_space<vmem>>, vector<16x512xf32>
    tpu.vector_store %arg12[%c16, %c0_14], %25 {strides = array<i32>} : memref<400x512xf32, #tpu.memory_space<vmem>>, vector<16x512xf32>,
    %c510_i32_15 = arith.constant 510 : i32
    %27 = tpu.dynamic_rotate %23 by %c510_i32_15 dim 1 : vector<16x512xf32>, i32 -> vector<16x512xf32>
    %c32 = arith.constant 32 : index
    %c0_16 = arith.constant 0 : index
    %28 = vector.load %arg12[%c32, %c0_16] : memref<400x512xf32, #tpu.memory_space<vmem>>, vector<16x512xf32>
    tpu.vector_store %arg12[%c32, %c0_16], %27 {strides = array<i32>} : memref<400x512xf32, #tpu.memory_space<vmem>>, vector<16x512xf32>,
    %c509_i32 = arith.constant 509 : i32
    %29 = tpu.dynamic_rotate %23 by %c509_i32 dim 1 : vector<16x512xf32>, i32 -> vector<16x512xf32>
    %c48 = arith.constant 48 : index
    %c0_17 = arith.constant 0 : index
    %30 = vector.load %arg12[%c48, %c0_17] : memref<400x512xf32, #tpu.memory_space<vmem>>, vector<16x512xf32>
    tpu.vector_store %arg12[%c48, %c0_17], %29 {strides = array<i32>} : memref<400x512xf32, #tpu.memory_space<vmem>>, vector<16x512xf32>,
    %c508_i32 = arith.constant 508 : i32
    %31 = tpu.dynamic_rotate %23 by %c508_i32 dim 1 : vector<16x512xf32>, i32 -> vector<16x512xf32>
    %c64 = arith.constant 64 : index
    %c0_18 = arith.constant 0 : index
    %32 = vector.load %arg12[%c64, %c0_18] : memref<400x512xf32, #tpu.memory_space<vmem>>, vector<16x512xf32>
    tpu.vector_store %arg12[%c64, %c0_18], %31 {strides = array<i32>} : memref<400x512xf32, #tpu.memory_space<vmem>>, vector<16x512xf32>,
    %c492_i32_19 = arith.constant 492 : i32
    %33 = tpu.dynamic_rotate %23 by %c492_i32_19 dim 1 : vector<16x512xf32>, i32 -> vector<16x512xf32>
    %c80 = arith.constant 80 : index
    %c0_20 = arith.constant 0 : index
    %34 = vector.load %arg12[%c80, %c0_20] : memref<400x512xf32, #tpu.memory_space<vmem>>, vector<16x512xf32>
    tpu.vector_store %arg12[%c80, %c0_20], %33 {strides = array<i32>} : memref<400x512xf32, #tpu.memory_space<vmem>>, vector<16x512xf32>,
    %c491_i32_21 = arith.constant 491 : i32
    %35 = tpu.dynamic_rotate %23 by %c491_i32_21 dim 1 : vector<16x512xf32>, i32 -> vector<16x512xf32>
    %c96 = arith.constant 96 : index
    %c0_22 = arith.constant 0 : index
    %36 = vector.load %arg12[%c96, %c0_22] : memref<400x512xf32, #tpu.memory_space<vmem>>, vector<16x512xf32>
    tpu.vector_store %arg12[%c96, %c0_22], %35 {strides = array<i32>} : memref<400x512xf32, #tpu.memory_space<vmem>>, vector<16x512xf32>,
    %c490_i32_23 = arith.constant 490 : i32
    %37 = tpu.dynamic_rotate %23 by %c490_i32_23 dim 1 : vector<16x512xf32>, i32 -> vector<16x512xf32>
    %c112 = arith.constant 112 : index
    %c0_24 = arith.constant 0 : index
    %38 = vector.load %arg12[%c112, %c0_24] : memref<400x512xf32, #tpu.memory_space<vmem>>, vector<16x512xf32>
    tpu.vector_store %arg12[%c112, %c0_24], %37 {strides = array<i32>} : memref<400x512xf32, #tpu.memory_space<vmem>>, vector<16x512xf32>,
    %c489_i32 = arith.constant 489 : i32
    %39 = tpu.dynamic_rotate %23 by %c489_i32 dim 1 : vector<16x512xf32>, i32 -> vector<16x512xf32>
    %c128 = arith.constant 128 : index
    %c0_25 = arith.constant 0 : index
    %40 = vector.load %arg12[%c128, %c0_25] : memref<400x512xf32, #tpu.memory_space<vmem>>, vector<16x512xf32>
    tpu.vector_store %arg12[%c128, %c0_25], %39 {strides = array<i32>} : memref<400x512xf32, #tpu.memory_space<vmem>>, vector<16x512xf32>,
    %c488_i32 = arith.constant 488 : i32
    %41 = tpu.dynamic_rotate %23 by %c488_i32 dim 1 : vector<16x512xf32>, i32 -> vector<16x512xf32>
    %c144 = arith.constant 144 : index
    %c0_26 = arith.constant 0 : index
    %42 = vector.load %arg12[%c144, %c0_26] : memref<400x512xf32, #tpu.memory_space<vmem>>, vector<16x512xf32>
    tpu.vector_store %arg12[%c144, %c0_26], %41 {strides = array<i32>} : memref<400x512xf32, #tpu.memory_space<vmem>>, vector<16x512xf32>,
    %c472_i32_27 = arith.constant 472 : i32
    %43 = tpu.dynamic_rotate %23 by %c472_i32_27 dim 1 : vector<16x512xf32>, i32 -> vector<16x512xf32>
    %c160 = arith.constant 160 : index
    %c0_28 = arith.constant 0 : index
    %44 = vector.load %arg12[%c160, %c0_28] : memref<400x512xf32, #tpu.memory_space<vmem>>, vector<16x512xf32>
    tpu.vector_store %arg12[%c160, %c0_28], %43 {strides = array<i32>} : memref<400x512xf32, #tpu.memory_space<vmem>>, vector<16x512xf32>,
    %c471_i32_29 = arith.constant 471 : i32
    %45 = tpu.dynamic_rotate %23 by %c471_i32_29 dim 1 : vector<16x512xf32>, i32 -> vector<16x512xf32>
    %c176 = arith.constant 176 : index
    %c0_30 = arith.constant 0 : index
    %46 = vector.load %arg12[%c176, %c0_30] : memref<400x512xf32, #tpu.memory_space<vmem>>, vector<16x512xf32>
    tpu.vector_store %arg12[%c176, %c0_30], %45 {strides = array<i32>} : memref<400x512xf32, #tpu.memory_space<vmem>>, vector<16x512xf32>,
    %c470_i32_31 = arith.constant 470 : i32
    %47 = tpu.dynamic_rotate %23 by %c470_i32_31 dim 1 : vector<16x512xf32>, i32 -> vector<16x512xf32>
    %c192 = arith.constant 192 : index
    %c0_32 = arith.constant 0 : index
    %48 = vector.load %arg12[%c192, %c0_32] : memref<400x512xf32, #tpu.memory_space<vmem>>, vector<16x512xf32>
    tpu.vector_store %arg12[%c192, %c0_32], %47 {strides = array<i32>} : memref<400x512xf32, #tpu.memory_space<vmem>>, vector<16x512xf32>,
    %c469_i32 = arith.constant 469 : i32
    %49 = tpu.dynamic_rotate %23 by %c469_i32 dim 1 : vector<16x512xf32>, i32 -> vector<16x512xf32>
    %c208 = arith.constant 208 : index
    %c0_33 = arith.constant 0 : index
    %50 = vector.load %arg12[%c208, %c0_33] : memref<400x512xf32, #tpu.memory_space<vmem>>, vector<16x512xf32>
    tpu.vector_store %arg12[%c208, %c0_33], %49 {strides = array<i32>} : memref<400x512xf32, #tpu.memory_space<vmem>>, vector<16x512xf32>,
    %c468_i32 = arith.constant 468 : i32
    %51 = tpu.dynamic_rotate %23 by %c468_i32 dim 1 : vector<16x512xf32>, i32 -> vector<16x512xf32>
    %c224 = arith.constant 224 : index
    %c0_34 = arith.constant 0 : index
    %52 = vector.load %arg12[%c224, %c0_34] : memref<400x512xf32, #tpu.memory_space<vmem>>, vector<16x512xf32>
    tpu.vector_store %arg12[%c224, %c0_34], %51 {strides = array<i32>} : memref<400x512xf32, #tpu.memory_space<vmem>>, vector<16x512xf32>,
    %c452_i32 = arith.constant 452 : i32
    %53 = tpu.dynamic_rotate %23 by %c452_i32 dim 1 : vector<16x512xf32>, i32 -> vector<16x512xf32>
    %c240 = arith.constant 240 : index
    %c0_35 = arith.constant 0 : index
    %54 = vector.load %arg12[%c240, %c0_35] : memref<400x512xf32, #tpu.memory_space<vmem>>, vector<16x512xf32>
    tpu.vector_store %arg12[%c240, %c0_35], %53 {strides = array<i32>} : memref<400x512xf32, #tpu.memory_space<vmem>>, vector<16x512xf32>,
    %c451_i32 = arith.constant 451 : i32
    %55 = tpu.dynamic_rotate %23 by %c451_i32 dim 1 : vector<16x512xf32>, i32 -> vector<16x512xf32>
    %c256 = arith.constant 256 : index
    %c0_36 = arith.constant 0 : index
    %56 = vector.load %arg12[%c256, %c0_36] : memref<400x512xf32, #tpu.memory_space<vmem>>, vector<16x512xf32>
    tpu.vector_store %arg12[%c256, %c0_36], %55 {strides = array<i32>} : memref<400x512xf32, #tpu.memory_space<vmem>>, vector<16x512xf32>,
    %c450_i32 = arith.constant 450 : i32
    %57 = tpu.dynamic_rotate %23 by %c450_i32 dim 1 : vector<16x512xf32>, i32 -> vector<16x512xf32>
    %c272 = arith.constant 272 : index
    %c0_37 = arith.constant 0 : index
    %58 = vector.load %arg12[%c272, %c0_37] : memref<400x512xf32, #tpu.memory_space<vmem>>, vector<16x512xf32>
    tpu.vector_store %arg12[%c272, %c0_37], %57 {strides = array<i32>} : memref<400x512xf32, #tpu.memory_space<vmem>>, vector<16x512xf32>,
    %c449_i32 = arith.constant 449 : i32
    %59 = tpu.dynamic_rotate %23 by %c449_i32 dim 1 : vector<16x512xf32>, i32 -> vector<16x512xf32>
    %c288 = arith.constant 288 : index
    %c0_38 = arith.constant 0 : index
    %60 = vector.load %arg12[%c288, %c0_38] : memref<400x512xf32, #tpu.memory_space<vmem>>, vector<16x512xf32>
    tpu.vector_store %arg12[%c288, %c0_38], %59 {strides = array<i32>} : memref<400x512xf32, #tpu.memory_space<vmem>>, vector<16x512xf32>,
    %c448_i32 = arith.constant 448 : i32
    %61 = tpu.dynamic_rotate %23 by %c448_i32 dim 1 : vector<16x512xf32>, i32 -> vector<16x512xf32>
    %c304 = arith.constant 304 : index
    %c0_39 = arith.constant 0 : index
    %62 = vector.load %arg12[%c304, %c0_39] : memref<400x512xf32, #tpu.memory_space<vmem>>, vector<16x512xf32>
    tpu.vector_store %arg12[%c304, %c0_39], %61 {strides = array<i32>} : memref<400x512xf32, #tpu.memory_space<vmem>>, vector<16x512xf32>,
    %c432_i32 = arith.constant 432 : i32
    %63 = tpu.dynamic_rotate %23 by %c432_i32 dim 1 : vector<16x512xf32>, i32 -> vector<16x512xf32>
    %c320 = arith.constant 320 : index
    %c0_40 = arith.constant 0 : index
    %64 = vector.load %arg12[%c320, %c0_40] : memref<400x512xf32, #tpu.memory_space<vmem>>, vector<16x512xf32>
    tpu.vector_store %arg12[%c320, %c0_40], %63 {strides = array<i32>} : memref<400x512xf32, #tpu.memory_space<vmem>>, vector<16x512xf32>,
    %c431_i32 = arith.constant 431 : i32
    %65 = tpu.dynamic_rotate %23 by %c431_i32 dim 1 : vector<16x512xf32>, i32 -> vector<16x512xf32>
    %c336 = arith.constant 336 : index
    %c0_41 = arith.constant 0 : index
    %66 = vector.load %arg12[%c336, %c0_41] : memref<400x512xf32, #tpu.memory_space<vmem>>, vector<16x512xf32>
    tpu.vector_store %arg12[%c336, %c0_41], %65 {strides = array<i32>} : memref<400x512xf32, #tpu.memory_space<vmem>>, vector<16x512xf32>,
    %c430_i32 = arith.constant 430 : i32
    %67 = tpu.dynamic_rotate %23 by %c430_i32 dim 1 : vector<16x512xf32>, i32 -> vector<16x512xf32>
    %c352 = arith.constant 352 : index
    %c0_42 = arith.constant 0 : index
    %68 = vector.load %arg12[%c352, %c0_42] : memref<400x512xf32, #tpu.memory_space<vmem>>, vector<16x512xf32>
    tpu.vector_store %arg12[%c352, %c0_42], %67 {strides = array<i32>} : memref<400x512xf32, #tpu.memory_space<vmem>>, vector<16x512xf32>,
    %c429_i32 = arith.constant 429 : i32
    %69 = tpu.dynamic_rotate %23 by %c429_i32 dim 1 : vector<16x512xf32>, i32 -> vector<16x512xf32>
    %c368 = arith.constant 368 : index
    %c0_43 = arith.constant 0 : index
    %70 = vector.load %arg12[%c368, %c0_43] : memref<400x512xf32, #tpu.memory_space<vmem>>, vector<16x512xf32>
    tpu.vector_store %arg12[%c368, %c0_43], %69 {strides = array<i32>} : memref<400x512xf32, #tpu.memory_space<vmem>>, vector<16x512xf32>,
    %c428_i32 = arith.constant 428 : i32
    %71 = tpu.dynamic_rotate %23 by %c428_i32 dim 1 : vector<16x512xf32>, i32 -> vector<16x512xf32>
    %c384 = arith.constant 384 : index
    %c0_44 = arith.constant 0 : index
    %72 = vector.load %arg12[%c384, %c0_44] : memref<400x512xf32, #tpu.memory_space<vmem>>, vector<16x512xf32>
    tpu.vector_store %arg12[%c384, %c0_44], %71 {strides = array<i32>} : memref<400x512xf32, #tpu.memory_space<vmem>>, vector<16x512xf32>,
    %c0_45 = arith.constant 0 : index
    %c0_46 = arith.constant 0 : index
    %73 = vector.load %arg6[%c0_45, %c0_46] : memref<32x400xf32, #tpu.memory_space<vmem>>, vector<32x400xf32>
    %c0_47 = arith.constant 0 : index
    %c0_48 = arith.constant 0 : index
    %74 = vector.load %arg12[%c0_47, %c0_48] : memref<400x512xf32, #tpu.memory_space<vmem>>, vector<400x512xf32>
    %cst_49 = arith.constant dense<0.000000e+00> : vector<32x512xf32>
    %75 = tpu.matmul %73, %74, %cst_49 {dimension_numbers = #tpu.dot_dimension_numbers<[1], [0], [0], [1], [0, 0, 1, 1], [], []>} : vector<32x400xf32>, vector<400x512xf32>, vector<32x512xf32> -> vector<32x512xf32>
    %c0_50 = arith.constant 0 : index
    %c0_51 = arith.constant 0 : index
    %76 = vector.load %arg7[%c0_50, %c0_51] : memref<32x1xf32, #tpu.memory_space<vmem>>, vector<32x1xf32>
    %77 = vector.broadcast %76 : vector<32x1xf32> to vector<32x512xf32>
    %78 = arith.addf %75, %77 : vector<32x512xf32>
    %cst_52 = arith.constant 0.000000e+00 : f32
    %79 = vector.broadcast %cst_52 : f32 to vector<32x512xf32>
    %80 = arith.maximumf %78, %79 : vector<32x512xf32>
    %c0_53 = arith.constant 0 : index
    %c0_54 = arith.constant 0 : index
    %81 = vector.load %arg8[%c0_53, %c0_54] : memref<32x1xf32, #tpu.memory_space<vmem>>, vector<32x1xf32>
    %82 = vector.broadcast %81 : vector<32x1xf32> to vector<32x512xf32>
    %83 = arith.mulf %80, %82 : vector<32x512xf32>
    %c0_55 = arith.constant 0 : index
    %c0_56 = arith.constant 0 : index
    %84 = vector.load %arg9[%c0_55, %c0_56] : memref<32x1xf32, #tpu.memory_space<vmem>>, vector<32x1xf32>
    %85 = vector.broadcast %84 : vector<32x1xf32> to vector<32x512xf32>
    %86 = arith.addf %83, %85 : vector<32x512xf32>
    %c511_i32_57 = arith.constant 511 : i32
    %87 = tpu.dynamic_rotate %86 by %c511_i32_57 dim 1 : vector<32x512xf32>, i32 -> vector<32x512xf32>
    %88 = arith.maximumf %86, %87 : vector<32x512xf32>
    %c492_i32_58 = arith.constant 492 : i32
    %89 = tpu.dynamic_rotate %88 by %c492_i32_58 dim 1 : vector<32x512xf32>, i32 -> vector<32x512xf32>
    %90 = arith.maximumf %88, %89 : vector<32x512xf32>
    %c0_59 = arith.constant 0 : index
    %c0_60 = arith.constant 0 : index
    %91 = vector.load %arg10[%c0_59, %c0_60] : memref<512x128xf32, #tpu.memory_space<vmem>>, vector<512x128xf32>
    %cst_61 = arith.constant dense<0.000000e+00> : vector<32x128xf32>
    %92 = tpu.matmul %90, %91, %cst_61 {dimension_numbers = #tpu.dot_dimension_numbers<[1], [0], [0], [1], [0, 0, 1, 1], [], []>} : vector<32x512xf32>, vector<512x128xf32>, vector<32x128xf32> -> vector<32x128xf32>
    %c0_62 = arith.constant 0 : index
    %c0_63 = arith.constant 0 : index
    %c0_64 = arith.constant 0 : index
    %93 = vector.load %arg11[%c0_62, %c0_63, %c0_64] : memref<1x32x128xf32, #tpu.memory_space<vmem>>, vector<1x32x128xf32>
    %94 = vector.shape_cast %93 : vector<1x32x128xf32> to vector<32x128xf32>
    %95 = vector.shape_cast %92 : vector<32x128xf32> to vector<1x32x128xf32>
    tpu.vector_store %arg11[%c0_62, %c0_63, %c0_64], %95 {strides = array<i32>} : memref<1x32x128xf32, #tpu.memory_space<vmem>>, vector<1x32x128xf32>,
    return
  }
  func.func @transform_0(%arg0: i32) -> (i32, i32, i32) {
    %c0_i32 = arith.constant 0 : i32
    %c0_i32_0 = arith.constant 0 : i32
    %c0_i32_1 = arith.constant 0 : i32
    return %arg0, %c0_i32, %c0_i32_0 : i32, i32, i32
  }
  func.func @transform_1(%arg0: i32) -> (i32, i32) {
    %c0_i32 = arith.constant 0 : i32
    %c0_i32_0 = arith.constant 0 : i32
    %c0_i32_1 = arith.constant 0 : i32
    return %c0_i32, %c0_i32_0 : i32, i32
  }
  func.func @transform_2(%arg0: i32) -> (i32, i32) {
    %c0_i32 = arith.constant 0 : i32
    %c0_i32_0 = arith.constant 0 : i32
    %c0_i32_1 = arith.constant 0 : i32
    return %c0_i32, %c0_i32_0 : i32, i32
  }
  func.func @transform_3(%arg0: i32) -> (i32, i32) {
    %c0_i32 = arith.constant 0 : i32
    %c0_i32_0 = arith.constant 0 : i32
    %c0_i32_1 = arith.constant 0 : i32
    return %c0_i32, %c0_i32_0 : i32, i32
  }
  func.func @transform_4(%arg0: i32) -> (i32, i32) {
    %c0_i32 = arith.constant 0 : i32
    %c0_i32_0 = arith.constant 0 : i32
    %c0_i32_1 = arith.constant 0 : i32
    return %c0_i32, %c0_i32_0 : i32, i32
  }
  func.func @transform_5(%arg0: i32) -> (i32, i32) {
    %c0_i32 = arith.constant 0 : i32
    %c0_i32_0 = arith.constant 0 : i32
    %c0_i32_1 = arith.constant 0 : i32
    return %c0_i32, %c0_i32_0 : i32, i32
  }
  func.func @transform_6(%arg0: i32) -> (i32, i32) {
    %c0_i32 = arith.constant 0 : i32
    %c0_i32_0 = arith.constant 0 : i32
    %c0_i32_1 = arith.constant 0 : i32
    return %c0_i32, %c0_i32_0 : i32, i32
  }
  func.func @transform_7(%arg0: i32) -> (i32, i32) {
    %c0_i32 = arith.constant 0 : i32
    %c0_i32_0 = arith.constant 0 : i32
    %c0_i32_1 = arith.constant 0 : i32
    return %c0_i32, %c0_i32_0 : i32, i32
  }
  func.func @transform_8(%arg0: i32) -> (i32, i32) {
    %c0_i32 = arith.constant 0 : i32
    %c0_i32_0 = arith.constant 0 : i32
    %c0_i32_1 = arith.constant 0 : i32
    return %c0_i32, %c0_i32_0 : i32, i32
  }
  func.func @transform_9(%arg0: i32) -> (i32, i32) {
    %c0_i32 = arith.constant 0 : i32
    %c0_i32_0 = arith.constant 0 : i32
    %c0_i32_1 = arith.constant 0 : i32
    return %c0_i32, %c0_i32_0 : i32, i32
  }
  func.func @transform_10(%arg0: i32) -> (i32, i32, i32) {
    %c0_i32 = arith.constant 0 : i32
    %c0_i32_0 = arith.constant 0 : i32
    %c0_i32_1 = arith.constant 0 : i32
    return %arg0, %c0_i32, %c0_i32_0 : i32, i32, i32
  }
}

</mosaic_0001>

<llo_original>
// kernel: tpu_custom_call.1
$region0: #{tpu_custom_call.1}
  #allocation0 [shape = 'u32[]', space=smem, size = 0x4, offset = 0x4, fixed_abs, tag = 'smem constant byte address 0x4 - core index']
  #allocation1 [shape = 'u32[144,128]{1,0:T(1,128)}', space=vmem, size = 0x12000, scoped, tag = 'internal scratch']
  #allocation2 [shape = 'f32[400,512]{1,0:T(8,128)}', space=vmem, size = 0xc8000, scoped, tag = 'scratch operand']
  %s0 = inlined_call_operand.vmem [shape: f32[2,1,512], index: 0, kind: input, shape index: {}]
  %s1 = inlined_call_operand.vmem [shape: f32[16,9], index: 1, kind: input, shape index: {}]
  %s2 = inlined_call_operand.vmem [shape: f32[16,1], index: 2, kind: input, shape index: {}]
  %s3 = inlined_call_operand.vmem [shape: f32[16,1], index: 3, kind: input, shape index: {}]
  %s4 = inlined_call_operand.vmem [shape: f32[16,1], index: 4, kind: input, shape index: {}]
  %s5 = inlined_call_operand.vmem [shape: f32[32,400], index: 5, kind: input, shape index: {}]
  %s6 = inlined_call_operand.vmem [shape: f32[32,1], index: 6, kind: input, shape index: {}]
  %s7 = inlined_call_operand.vmem [shape: f32[32,1], index: 7, kind: input, shape index: {}]
  %s8 = inlined_call_operand.vmem [shape: f32[32,1], index: 8, kind: input, shape index: {}]
  %s9 = inlined_call_operand.hbm [shape: f32[512,128], index: 9, kind: input, shape index: {}]
  %s10 = inlined_call_operand.hbm [shape: f32[2,32,128], index: 10, kind: output, shape index: {}]
  %s11 = sld [smem:[#allocation0]]
  $region77: #{tpu_custom_call.1} parent=0
    _
  %s13 = ssub.s32 1, %s11
  %s14 = scalar_select 0, %s13, %s11
  $region1: #{tpu_custom_call.1} parent=0
    #allocation3 [shape = 'u8[262144]{0}', space=vmem, size = 0x40000, scoped, tag = 'input window, operand 9, single buffered']
    #allocation4 [shape = 's32[2]{0}', space=sflag, size = 0x8, scoped, tag = 'scoped memory for tpu_custom_call.1']
    #allocation5 [shape = 's32[2]{0}', space=sflag, size = 0x8, scoped, tag = 'scoped memory for tpu_custom_call.1']
    #allocation6 [shape = 'u8[32768]{0}', space=vmem, size = 0x8000, scoped, tag = 'output window, operand 0']
    %15 = vsyncpa [#allocation4], 0
    %16 = vsyncpa [#allocation5], 0
    %s17 = scalar_lea.sflag [#allocation5], 1
    %18 = vsyncpa %s17, 0
    loop: start=0, step=1, limit=4
    $region2: #{tpu_custom_call.1} parent=1 // loop_pre_header
      _
    $region3: #{tpu_custom_call.1} parent=1 // loop_header
      %s20 = sphi 0, %s24
      %p21 = scmp.ge.s32.totalorder %s20, 4
      %s30 = sphi 0, %s32
      %s33 = sphi 0, %s30
      %s34 = sphi 0, %s33
      %s50 = sphi 0, %s34
      %s54 = sphi 0, %s54
      %s56 = sphi 0, %s54
      %s57 = sphi 0, %s56
      %s71 = sphi 0, %s57
      %s75 = sphi 0, %s75
      %s77 = sphi 0, %s75
      %s78 = sphi 0, %s77
      %s92 = sphi 0, %s78
      %s96 = sphi 0, %s96
      %s98 = sphi 0, %s96
      %s99 = sphi 0, %s98
      %s113 = sphi 0, %s99
      %s117 = sphi 0, %s117
      %s119 = sphi 0, %s117
      %s120 = sphi 0, %s119
      %s134 = sphi 0, %s120
      %s138 = sphi 0, %s138
      %s140 = sphi 0, %s138
      %s141 = sphi 0, %s140
      %s155 = sphi 0, %s141
      %s159 = sphi 0, %s159
      %s161 = sphi 0, %s159
      %s162 = sphi 0, %s161
      %s176 = sphi 0, %s162
      %s180 = sphi 0, %s180
      %s182 = sphi 0, %s180
      %s183 = sphi 0, %s182
      %s197 = sphi 0, %s183
      %s201 = sphi 0, %s201
      %s203 = sphi 0, %s201
      %s204 = sphi 0, %s203
      %s218 = sphi 0, %s204
      %s222 = sphi 0, %s222
      %s224 = sphi 0, %s222
      %s225 = sphi 0, %s224
      %s239 = sphi 0, %s225
      %s245 = sphi 0, %s247
      %s248 = sphi 0, %s245
      %s249 = sphi 0, %s248
      %s265 = sphi 0, %s249
    $region4: #{tpu_custom_call.1} parent=1 // loop_header_branch
      %23 = sbr.rel (%p21) target = $region8
    $region5: #{tpu_custom_call.1} parent=1 // loop_body
      %s25 = ssub.s32 %s20, 1
      %s26 = ssub.s32 %s20, 2
      %s27 = sadd.s32 %s20, 1
      %s28 = ssub.s32 %s20, %s27
      %p29 = scmp.eq.s32.totalorder %s28, 0
      %s31 = sadd.s32 %s30, 1
      %s32 = scalar_select %p29, %s30, %s31
      %p35 = pneg %p29
      %p36 = scmp.eq.s32.totalorder %s20, 1
      %p37 = por %p35, %p36
      %p38 = scmp.ne.s32.totalorder %s30, %s33
      %p39 = scmp.eq.s32.totalorder %s20, 0
      %p40 = por %p38, %p39
      %p41 = scmp.ne.s32.totalorder %s30, %s33
      %p42 = scmp.eq.s32.totalorder %s25, 1
      %p43 = por %p41, %p42
      %p44 = scmp.ne.s32.totalorder %s33, %s34
      %p45 = scmp.eq.s32.totalorder %s25, 0
      %p46 = por %p44, %p45
      %p47 = scmp.ne.s32.totalorder %s33, %s34
      %p48 = scmp.eq.s32.totalorder %s26, 1
      %p49 = por %p47, %p48
      %p51 = scmp.ne.s32.totalorder %s34, %s50
      %p52 = scmp.eq.s32.totalorder %s26, 0
      %p53 = por %p51, %p52
      %s55 = sadd.s32 %s54, 1
      %p58 = scmp.eq.s32.totalorder %s20, 1
      %p59 = scmp.ne.s32.totalorder %s54, %s56
      %p60 = scmp.eq.s32.totalorder %s20, 0
      %p61 = por %p59, %p60
      %p62 = scmp.ne.s32.totalorder %s54, %s56
      %p63 = scmp.eq.s32.totalorder %s25, 1
      %p64 = por %p62, %p63
      %p65 = scmp.ne.s32.totalorder %s56, %s57
      %p66 = scmp.eq.s32.totalorder %s25, 0
      %p67 = por %p65, %p66
      %p68 = scmp.ne.s32.totalorder %s56, %s57
      %p69 = scmp.eq.s32.totalorder %s26, 1
      %p70 = por %p68, %p69
      %p72 = scmp.ne.s32.totalorder %s57, %s71
      %p73 = scmp.eq.s32.totalorder %s26, 0
      %p74 = por %p72, %p73
      %s76 = sadd.s32 %s75, 1
      %p79 = scmp.eq.s32.totalorder %s20, 1
      %p80 = scmp.ne.s32.totalorder %s75, %s77
      %p81 = scmp.eq.s32.totalorder %s20, 0
      %p82 = por %p80, %p81
      %p83 = scmp.ne.s32.totalorder %s75, %s77
      %p84 = scmp.eq.s32.totalorder %s25, 1
      %p85 = por %p83, %p84
      %p86 = scmp.ne.s32.totalorder %s77, %s78
      %p87 = scmp.eq.s32.totalorder %s25, 0
      %p88 = por %p86, %p87
      %p89 = scmp.ne.s32.totalorder %s77, %s78
      %p90 = scmp.eq.s32.totalorder %s26, 1
      %p91 = por %p89, %p90
      %p93 = scmp.ne.s32.totalorder %s78, %s92
      %p94 = scmp.eq.s32.totalorder %s26, 0
      %p95 = por %p93, %p94
      %s97 = sadd.s32 %s96, 1
      %p100 = scmp.eq.s32.totalorder %s20, 1
      %p101 = scmp.ne.s32.totalorder %s96, %s98
      %p102 = scmp.eq.s32.totalorder %s20, 0
      %p103 = por %p101, %p102
      %p104 = scmp.ne.s32.totalorder %s96, %s98
      %p105 = scmp.eq.s32.totalorder %s25, 1
      %p106 = por %p104, %p105
      %p107 = scmp.ne.s32.totalorder %s98, %s99
      %p108 = scmp.eq.s32.totalorder %s25, 0
      %p109 = por %p107, %p108
      %p110 = scmp.ne.s32.totalorder %s98, %s99
      %p111 = scmp.eq.s32.totalorder %s26, 1
      %p112 = por %p110, %p111
      %p114 = scmp.ne.s32.totalorder %s99, %s113
      %p115 = scmp.eq.s32.totalorder %s26, 0
      %p116 = por %p114, %p115
      %s118 = sadd.s32 %s117, 1
      %p121 = scmp.eq.s32.totalorder %s20, 1
      %p122 = scmp.ne.s32.totalorder %s117, %s119
      %p123 = scmp.eq.s32.totalorder %s20, 0
      %p124 = por %p122, %p123
      %p125 = scmp.ne.s32.totalorder %s117, %s119
      %p126 = scmp.eq.s32.totalorder %s25, 1
      %p127 = por %p125, %p126
      %p128 = scmp.ne.s32.totalorder %s119, %s120
      %p129 = scmp.eq.s32.totalorder %s25, 0
      %p130 = por %p128, %p129
      %p131 = scmp.ne.s32.totalorder %s119, %s120
      %p132 = scmp.eq.s32.totalorder %s26, 1
      %p133 = por %p131, %p132
      %p135 = scmp.ne.s32.totalorder %s120, %s134
      %p136 = scmp.eq.s32.totalorder %s26, 0
      %p137 = por %p135, %p136
      %s139 = sadd.s32 %s138, 1
      %p142 = scmp.eq.s32.totalorder %s20, 1
      %p143 = scmp.ne.s32.totalorder %s138, %s140
      %p144 = scmp.eq.s32.totalorder %s20, 0
      %p145 = por %p143, %p144
      %p146 = scmp.ne.s32.totalorder %s138, %s140
      %p147 = scmp.eq.s32.totalorder %s25, 1
      %p148 = por %p146, %p147
      %p149 = scmp.ne.s32.totalorder %s140, %s141
      %p150 = scmp.eq.s32.totalorder %s25, 0
      %p151 = por %p149, %p150
      %p152 = scmp.ne.s32.totalorder %s140, %s141
      %p153 = scmp.eq.s32.totalorder %s26, 1
      %p154 = por %p152, %p153
      %p156 = scmp.ne.s32.totalorder %s141, %s155
      %p157 = scmp.eq.s32.totalorder %s26, 0
      %p158 = por %p156, %p157
      %s160 = sadd.s32 %s159, 1
      %p163 = scmp.eq.s32.totalorder %s20, 1
      %p164 = scmp.ne.s32.totalorder %s159, %s161
      %p165 = scmp.eq.s32.totalorder %s20, 0
      %p166 = por %p164, %p165
      %p167 = scmp.ne.s32.totalorder %s159, %s161
      %p168 = scmp.eq.s32.totalorder %s25, 1
      %p169 = por %p167, %p168
      %p170 = scmp.ne.s32.totalorder %s161, %s162
      %p171 = scmp.eq.s32.totalorder %s25, 0
      %p172 = por %p170, %p171
      %p173 = scmp.ne.s32.totalorder %s161, %s162
      %p174 = scmp.eq.s32.totalorder %s26, 1
      %p175 = por %p173, %p174
      %p177 = scmp.ne.s32.totalorder %s162, %s176
      %p178 = scmp.eq.s32.totalorder %s26, 0
      %p179 = por %p177, %p178
      %s181 = sadd.s32 %s180, 1
      %p184 = scmp.eq.s32.totalorder %s20, 1
      %p185 = scmp.ne.s32.totalorder %s180, %s182
      %p186 = scmp.eq.s32.totalorder %s20, 0
      %p187 = por %p185, %p186
      %p188 = scmp.ne.s32.totalorder %s180, %s182
      %p189 = scmp.eq.s32.totalorder %s25, 1
      %p190 = por %p188, %p189
      %p191 = scmp.ne.s32.totalorder %s182, %s183
      %p192 = scmp.eq.s32.totalorder %s25, 0
      %p193 = por %p191, %p192
      %p194 = scmp.ne.s32.totalorder %s182, %s183
      %p195 = scmp.eq.s32.totalorder %s26, 1
      %p196 = por %p194, %p195
      %p198 = scmp.ne.s32.totalorder %s183, %s197
      %p199 = scmp.eq.s32.totalorder %s26, 0
      %p200 = por %p198, %p199
      %s202 = sadd.s32 %s201, 1
      %p205 = scmp.eq.s32.totalorder %s20, 1
      %p206 = scmp.ne.s32.totalorder %s201, %s203
      %p207 = scmp.eq.s32.totalorder %s20, 0
      %p208 = por %p206, %p207
      %p209 = scmp.ne.s32.totalorder %s201, %s203
      %p210 = scmp.eq.s32.totalorder %s25, 1
      %p211 = por %p209, %p210
      %p212 = scmp.ne.s32.totalorder %s203, %s204
      %p213 = scmp.eq.s32.totalorder %s25, 0
      %p214 = por %p212, %p213
      %p215 = scmp.ne.s32.totalorder %s203, %s204
      %p216 = scmp.eq.s32.totalorder %s26, 1
      %p217 = por %p215, %p216
      %p219 = scmp.ne.s32.totalorder %s204, %s218
      %p220 = scmp.eq.s32.totalorder %s26, 0
      %p221 = por %p219, %p220
      %s223 = sadd.s32 %s222, 1
      %p226 = scmp.eq.s32.totalorder %s20, 1
      %p227 = scmp.ne.s32.totalorder %s222, %s224
      %p228 = scmp.eq.s32.totalorder %s20, 0
      %p229 = por %p227, %p228
      %p230 = scmp.ne.s32.totalorder %s222, %s224
      %p231 = scmp.eq.s32.totalorder %s25, 1
      %p232 = por %p230, %p231
      %p233 = scmp.ne.s32.totalorder %s224, %s225
      %p234 = scmp.eq.s32.totalorder %s25, 0
      %p235 = por %p233, %p234
      %p236 = scmp.ne.s32.totalorder %s224, %s225
      %p237 = scmp.eq.s32.totalorder %s26, 1
      %p238 = por %p236, %p237
      %p240 = scmp.ne.s32.totalorder %s225, %s239
      %p241 = scmp.eq.s32.totalorder %s26, 0
      %p242 = por %p240, %p241
      %s243 = ssub.s32 %s20, %s27
      %p244 = scmp.eq.s32.totalorder %s243, 0
      %s246 = sadd.s32 %s245, 1
      %s247 = scalar_select %p244, %s245, %s246
      %p250 = pneg %p244
      %p251 = scmp.eq.s32.totalorder %s20, 1
      %p252 = por %p250, %p251
      %p253 = scmp.ne.s32.totalorder %s245, %s248
      %p254 = scmp.eq.s32.totalorder %s20, 0
      %p255 = por %p253, %p254
      %p256 = scmp.ne.s32.totalorder %s245, %s248
      %p257 = scmp.eq.s32.totalorder %s25, 1
      %p258 = por %p256, %p257
      %p259 = scmp.ne.s32.totalorder %s248, %s249
      %p260 = scmp.eq.s32.totalorder %s25, 0
      %p261 = por %p259, %p260
      %p262 = scmp.ne.s32.totalorder %s248, %s249
      %p263 = scmp.eq.s32.totalorder %s26, 1
      %p264 = por %p262, %p263
      %p266 = scmp.ne.s32.totalorder %s249, %s265
      %p267 = scmp.eq.s32.totalorder %s26, 0
      %p268 = por %p266, %p267
      %p269 = scmp.le.s32.totalorder 1, %s20
      %p270 = scmp.lt.s32.totalorder %s20, 3
      %p271 = pnand %p269, %p270
      %p272 = pneg %p271
      // Predicated region
      $region9: #{tpu_custom_call.1} parent=5 // pred_check
        _
      $region10: #{tpu_custom_call.1} parent=5 // pred_check_branch
        %274 = sbr.rel (%p271) target = $region12
      $region11: #{tpu_custom_call.1} parent=5 // pred_region
        %s275 = ssub.s32 %s20, 1
        // Predicated region
        $region13: #{tpu_custom_call.1} parent=11 // pred_check
          %p276 = pneg %p67
        $region14: #{tpu_custom_call.1} parent=11 // pred_check_branch
          %278 = sbr.rel (%p276) target = $region16
        $region15: #{tpu_custom_call.1} parent=11 // pred_region
          _
        $region16: #{tpu_custom_call.1} parent=11 // pred_fallthru
          _
        // Predicated region
        $region17: #{tpu_custom_call.1} parent=11 // pred_check
          %p279 = pneg %p88
        $region18: #{tpu_custom_call.1} parent=11 // pred_check_branch
          %281 = sbr.rel (%p279) target = $region20
        $region19: #{tpu_custom_call.1} parent=11 // pred_region
          _
        $region20: #{tpu_custom_call.1} parent=11 // pred_fallthru
          _
        // Predicated region
        $region21: #{tpu_custom_call.1} parent=11 // pred_check
          %p282 = pneg %p109
        $region22: #{tpu_custom_call.1} parent=11 // pred_check_branch
          %284 = sbr.rel (%p282) target = $region24
        $region23: #{tpu_custom_call.1} parent=11 // pred_region
          _
        $region24: #{tpu_custom_call.1} parent=11 // pred_fallthru
          _
        // Predicated region
        $region25: #{tpu_custom_call.1} parent=11 // pred_check
          %p285 = pneg %p130
        $region26: #{tpu_custom_call.1} parent=11 // pred_check_branch
          %287 = sbr.rel (%p285) target = $region28
        $region27: #{tpu_custom_call.1} parent=11 // pred_region
          _
        $region28: #{tpu_custom_call.1} parent=11 // pred_fallthru
          _
        // Predicated region
        $region29: #{tpu_custom_call.1} parent=11 // pred_check
          %p288 = pneg %p151
        $region30: #{tpu_custom_call.1} parent=11 // pred_check_branch
          %290 = sbr.rel (%p288) target = $region32
        $region31: #{tpu_custom_call.1} parent=11 // pred_region
          _
        $region32: #{tpu_custom_call.1} parent=11 // pred_fallthru
          _
        // Predicated region
        $region33: #{tpu_custom_call.1} parent=11 // pred_check
          %p291 = pneg %p172
        $region34: #{tpu_custom_call.1} parent=11 // pred_check_branch
          %293 = sbr.rel (%p291) target = $region36
        $region35: #{tpu_custom_call.1} parent=11 // pred_region
          _
        $region36: #{tpu_custom_call.1} parent=11 // pred_fallthru
          _
        // Predicated region
        $region37: #{tpu_custom_call.1} parent=11 // pred_check
          %p294 = pneg %p193
        $region38: #{tpu_custom_call.1} parent=11 // pred_check_branch
          %296 = sbr.rel (%p294) target = $region40
        $region39: #{tpu_custom_call.1} parent=11 // pred_region
          _
        $region40: #{tpu_custom_call.1} parent=11 // pred_fallthru
          _
        // Predicated region
        $region41: #{tpu_custom_call.1} parent=11 // pred_check
          %p297 = pneg %p214
        $region42: #{tpu_custom_call.1} parent=11 // pred_check_branch
          %299 = sbr.rel (%p297) target = $region44
        $region43: #{tpu_custom_call.1} parent=11 // pred_region
          _
        $region44: #{tpu_custom_call.1} parent=11 // pred_fallthru
          _
        // Predicated region
        $region45: #{tpu_custom_call.1} parent=11 // pred_check
          %p300 = pneg %p235
        $region46: #{tpu_custom_call.1} parent=11 // pred_check_branch
          %302 = sbr.rel (%p300) target = $region48
        $region47: #{tpu_custom_call.1} parent=11 // pred_region
          %s304 = ssub.s32 8192, 8192
          %305 = vsyncadd [#allocation4], %s304
          %s306 = sshll.u32 [#allocation3], 4
          %s307 = int_to_ptr.vmem [resolvable:$true] %s306
          %312 = dma.hbm_to_vmem [thread:$0]  %s9, 8192, %s307, [#allocation4], 128, 128, 8
        $region48: #{tpu_custom_call.1} parent=11 // pred_fallthru
          _
      $region12: #{tpu_custom_call.1} parent=5 // pred_fallthru
        _
      %p313 = scmp.lt.s32.totalorder %s20, 2
      // Predicated region
      $region49: #{tpu_custom_call.1} parent=5 // pred_check
        %p314 = pneg %p313
      $region50: #{tpu_custom_call.1} parent=5 // pred_check_branch
        %316 = sbr.rel (%p314) target = $region52
      $region51: #{tpu_custom_call.1} parent=5 // pred_region
        // Predicated region
        $region53: #{tpu_custom_call.1} parent=51 // pred_check
          %p317 = pneg %p40
        $region54: #{tpu_custom_call.1} parent=51 // pred_check_branch
          %319 = sbr.rel (%p317) target = $region56
        $region55: #{tpu_custom_call.1} parent=51 // pred_region
          %p320 = scmp.lt.s32.totalorder %s20, 1
          %s321 = scalar_select %p320, %s20, 1
          %s322 = smul.addr %s321, 4
          %s323 = scalar_lea.vmem %s0, %s322
        $region56: #{tpu_custom_call.1} parent=51 // pred_fallthru
          _
      $region52: #{tpu_custom_call.1} parent=5 // pred_fallthru
        _
      %p324 = scmp.le.s32.totalorder 1, %s20
      %p325 = scmp.lt.s32.totalorder %s20, 3
      %p326 = pnand %p324, %p325
      %p327 = pneg %p326
      // Predicated region
      $region57: #{tpu_custom_call.1} parent=5 // pred_check
        _
      $region58: #{tpu_custom_call.1} parent=5 // pred_check_branch
        %329 = sbr.rel (%p326) target = $region60
      $region59: #{tpu_custom_call.1} parent=5 // pred_region
        %s330 = ssub.s32 %s20, 1
        // Predicated region
        $region61: #{tpu_custom_call.1} parent=59 // pred_check
          %p331 = pneg %p235
        $region62: #{tpu_custom_call.1} parent=59 // pred_check_branch
          %333 = sbr.rel (%p331) target = $region64
        $region63: #{tpu_custom_call.1} parent=59 // pred_region
          %334 = dma.done [#allocation4], 8192
        $region64: #{tpu_custom_call.1} parent=59 // pred_fallthru
          _
        %p335 = scmp.lt.s32.totalorder %s25, 1
        %s336 = scalar_select %p335, %s25, 1
        %s337 = smul.addr %s336, 4
        %s338 = scalar_lea.vmem %s0, %s337
        %p339 = pneg %p46
        %p340 = pneg %p43
        %p341 = pneg %p67
        %p342 = pneg %p64
        %p343 = pneg %p88
        %p344 = pneg %p85
        %p345 = pneg %p109
        %p346 = pneg %p106
        %p347 = pneg %p130
        %p348 = pneg %p127
        %p349 = pneg %p151
        %p350 = pneg %p148
        %p351 = pneg %p172
        %p352 = pneg %p169
        %p353 = pneg %p193
        %p354 = pneg %p190
        %p355 = pneg %p214
        %p356 = pneg %p211
        %p357 = pneg %p235
        %p358 = pneg %p232
        %p359 = pneg %p261
        %p360 = pneg %p258
        %s361 = sand.u32 %s248, 1
        %s362 = scalar_lea.sflag [#allocation5], %s361
        %s363 = sand.u32 %s248, 1
        %s364 = smul.addr %s363, 32
        %s365 = scalar_lea.vmem [#allocation6], %s364
        %p366 = scmp.lt.s32.totalorder %s25, 1
        %s367 = scalar_select %p366, %s25, 1
        %s368 = smul.addr %s367, 4
        %s369 = scalar_lea.vmem %s0, %s368
        %v370 = vld [vmem:[%s369] sm:$0xf]
        %v372 = vlaneseq
        %v373 = vshrl.u32 %v372, 7
        %v374 = vsub.s32 0, %v373
        %v375 = vrot.slane %v370, %v374
        %v376 = vlaneseq
        %v377 = vshrl.u32 %v376, 7
        %v378 = vsub.s32 1, %v377
        %v379 = vrot.slane %v370, %v378
        %v380 = vlaneseq
        %v381 = vshrl.u32 %v380, 7
        %v382 = vsub.s32 2, %v381
        %v383 = vrot.slane %v370, %v382
        %v384 = vlaneseq
        %v385 = vshrl.u32 %v384, 7
        %v386 = vsub.s32 3, %v385
        %v387 = vrot.slane %v370, %v386
        %392 = vrot.lane.b32.xlu0 %v375, 127
        %v393 = vpop.permute.xlu0 %392
        %394 = vrot.lane.b32.xlu0 %v379, 127
        %v395 = vpop.permute.xlu0 %394
        %396 = vrot.lane.b32.xlu0 %v383, 127
        %v397 = vpop.permute.xlu0 %396
        %398 = vrot.lane.b32.xlu0 %v387, 127
        %v399 = vpop.permute.xlu0 %398
        %v400 = vlaneseq
        %v401 = vand.u32 %v400, 127
        %vm402 = vcmp.lt.s32.totalorder %v401, 127
        %v403 = vsel %vm402, %v397, %v399
        %v404 = vsel %vm402, %v395, %v397
        %v405 = vsel %vm402, %v393, %v395
        %v406 = vsel %vm402, %v399, %v393
        %407 = vrot.lane.b32.xlu0 %v375, 126
        %v408 = vpop.permute.xlu0 %407
        %409 = vrot.lane.b32.xlu0 %v379, 126
        %v410 = vpop.permute.xlu0 %409
        %411 = vrot.lane.b32.xlu0 %v383, 126
        %v412 = vpop.permute.xlu0 %411
        %413 = vrot.lane.b32.xlu0 %v387, 126
        %v414 = vpop.permute.xlu0 %413
        %vm415 = vcmp.lt.s32.totalorder %v401, 126
        %v416 = vsel %vm415, %v412, %v414
        %v417 = vsel %vm415, %v410, %v412
        %v418 = vsel %vm415, %v408, %v410
        %v419 = vsel %vm415, %v414, %v408
        %420 = vrot.lane.b32.xlu0 %v375, 108
        %v421 = vpop.permute.xlu0 %420
        %422 = vrot.lane.b32.xlu0 %v379, 108
        %v423 = vpop.permute.xlu0 %422
        %424 = vrot.lane.b32.xlu0 %v383, 108
        %v425 = vpop.permute.xlu0 %424
        %426 = vrot.lane.b32.xlu0 %v387, 108
        %v427 = vpop.permute.xlu0 %426
        %vm428 = vcmp.lt.s32.totalorder %v401, 108
        %v429 = vsel %vm428, %v425, %v427
        %v430 = vsel %vm428, %v423, %v425
        %v431 = vsel %vm428, %v421, %v423
        %v432 = vsel %vm428, %v427, %v421
        %433 = vrot.lane.b32.xlu0 %v375, 107
        %v434 = vpop.permute.xlu0 %433
        %435 = vrot.lane.b32.xlu0 %v379, 107
        %v436 = vpop.permute.xlu0 %435
        %437 = vrot.lane.b32.xlu0 %v383, 107
        %v438 = vpop.permute.xlu0 %437
        %439 = vrot.lane.b32.xlu0 %v387, 107
        %v440 = vpop.permute.xlu0 %439
        %vm441 = vcmp.lt.s32.totalorder %v401, 107
        %v442 = vsel %vm441, %v438, %v440
        %v443 = vsel %vm441, %v436, %v438
        %v444 = vsel %vm441, %v434, %v436
        %v445 = vsel %vm441, %v440, %v434
        %446 = vrot.lane.b32.xlu0 %v375, 106
        %v447 = vpop.permute.xlu0 %446
        %448 = vrot.lane.b32.xlu0 %v379, 106
        %v449 = vpop.permute.xlu0 %448
        %450 = vrot.lane.b32.xlu0 %v383, 106
        %v451 = vpop.permute.xlu0 %450
        %452 = vrot.lane.b32.xlu0 %v387, 106
        %v453 = vpop.permute.xlu0 %452
        %vm454 = vcmp.lt.s32.totalorder %v401, 106
        %v455 = vsel %vm454, %v451, %v453
        %v456 = vsel %vm454, %v449, %v451
        %v457 = vsel %vm454, %v447, %v449
        %v458 = vsel %vm454, %v453, %v447
        %459 = vrot.lane.b32.xlu0 %v375, 88
        %v460 = vpop.permute.xlu0 %459
        %461 = vrot.lane.b32.xlu0 %v379, 88
        %v462 = vpop.permute.xlu0 %461
        %463 = vrot.lane.b32.xlu0 %v383, 88
        %v464 = vpop.permute.xlu0 %463
        %465 = vrot.lane.b32.xlu0 %v387, 88
        %v466 = vpop.permute.xlu0 %465
        %vm467 = vcmp.lt.s32.totalorder %v401, 88
        %v468 = vsel %vm467, %v464, %v466
        %v469 = vsel %vm467, %v462, %v464
        %v470 = vsel %vm467, %v460, %v462
        %v471 = vsel %vm467, %v466, %v460
        %472 = vrot.lane.b32.xlu0 %v375, 87
        %v473 = vpop.permute.xlu0 %472
        %474 = vrot.lane.b32.xlu0 %v379, 87
        %v475 = vpop.permute.xlu0 %474
        %476 = vrot.lane.b32.xlu0 %v383, 87
        %v477 = vpop.permute.xlu0 %476
        %478 = vrot.lane.b32.xlu0 %v387, 87
        %v479 = vpop.permute.xlu0 %478
        %vm480 = vcmp.lt.s32.totalorder %v401, 87
        %v481 = vsel %vm480, %v477, %v479
        %v482 = vsel %vm480, %v475, %v477
        %v483 = vsel %vm480, %v473, %v475
        %v484 = vsel %vm480, %v479, %v473
        %485 = vrot.lane.b32.xlu0 %v375, 86
        %v486 = vpop.permute.xlu0 %485
        %487 = vrot.lane.b32.xlu0 %v379, 86
        %v488 = vpop.permute.xlu0 %487
        %489 = vrot.lane.b32.xlu0 %v383, 86
        %v490 = vpop.permute.xlu0 %489
        %491 = vrot.lane.b32.xlu0 %v387, 86
        %v492 = vpop.permute.xlu0 %491
        %vm493 = vcmp.lt.s32.totalorder %v401, 86
        %v494 = vsel %vm493, %v490, %v492
        %v495 = vsel %vm493, %v488, %v490
        %v496 = vsel %vm493, %v486, %v488
        %v497 = vsel %vm493, %v492, %v486
        %v502 = vrot.slane %v405, 7
        %v503 = vrot.slane %v404, 7
        %v504 = vrot.slane %v403, 7
        %v505 = vrot.slane %v406, 7
        %v514 = vrot.slane %v418, 6
        %v515 = vrot.slane %v417, 6
        %v516 = vrot.slane %v416, 6
        %v517 = vrot.slane %v419, 6
        %v526 = vrot.slane %v431, 5
        %v527 = vrot.slane %v430, 5
        %v528 = vrot.slane %v429, 5
        %v529 = vrot.slane %v432, 5
        %v538 = vrot.slane %v444, 4
        %v539 = vrot.slane %v443, 4
        %v540 = vrot.slane %v442, 4
        %v541 = vrot.slane %v445, 4
        %v550 = vrot.slane %v457, 3
        %v551 = vrot.slane %v456, 3
        %v552 = vrot.slane %v455, 3
        %v553 = vrot.slane %v458, 3
        %v562 = vrot.slane %v470, 2
        %v563 = vrot.slane %v469, 2
        %v564 = vrot.slane %v468, 2
        %v565 = vrot.slane %v471, 2
        %v574 = vrot.slane %v483, 1
        %v575 = vrot.slane %v482, 1
        %v576 = vrot.slane %v481, 1
        %v577 = vrot.slane %v484, 1
        %vm582 = vcmask 1040384
        %v583 = vsel %vm582, %v375, %v502
        %v584 = vsel %vm582, %v379, %v503
        %v585 = vsel %vm582, %v383, %v504
        %v586 = vsel %vm582, %v387, %v505
        %vm587 = vcmask 1041408
        %v588 = vsel %vm587, %v583, %v514
        %v589 = vsel %vm587, %v584, %v515
        %v590 = vsel %vm587, %v585, %v516
        %v591 = vsel %vm587, %v586, %v517
        %vm592 = vcmask 1042432
        %v593 = vsel %vm592, %v588, %v526
        %v594 = vsel %vm592, %v589, %v527
        %v595 = vsel %vm592, %v590, %v528
        %v596 = vsel %vm592, %v591, %v529
        %vm597 = vcmask 1043456
        %v598 = vsel %vm597, %v593, %v538
        %v599 = vsel %vm597, %v594, %v539
        %v600 = vsel %vm597, %v595, %v540
        %v601 = vsel %vm597, %v596, %v541
        %vm602 = vcmask 1044480
        %v603 = vsel %vm602, %v598, %v550
        %v604 = vsel %vm602, %v599, %v551
        %v605 = vsel %vm602, %v600, %v552
        %v606 = vsel %vm602, %v601, %v553
        %vm607 = vcmask 1045504
        %v608 = vsel %vm607, %v603, %v562
        %v609 = vsel %vm607, %v604, %v563
        %v610 = vsel %vm607, %v605, %v564
        %v611 = vsel %vm607, %v606, %v565
        %vm612 = vcmask 1046528
        %v613 = vsel %vm612, %v608, %v574
        %v614 = vsel %vm612, %v609, %v575
        %v615 = vsel %vm612, %v610, %v576
        %v616 = vsel %vm612, %v611, %v577
        %v617 = vld [vmem:[%s1] sm:$0xff]
        %v618 = vld [vmem:[%s1 + $0x8] sm:$0xff]
        %v619 = vld [vmem:[%s2] sm:$0xff]
        %v620 = vld [vmem:[%s2 + $0x8] sm:$0xff]
        %622 = vset.pattern.permute.xlu0 0
        %623 = vperm.xlu0 %622, %v619
        %v624 = vpop.permute.xlu0 %623
        %627 = vset.pattern.permute.xlu0 0
        %628 = vperm.xlu0 %627, %v620
        %v629 = vpop.permute.xlu0 %628
        %vm631 = vcmask 72704
        %v633 = vsel %vm631, %v617, 0
        %v636 = vsel %vm631, %v618, 0
        %v639 = vsel %vm582, %v496, 0
        %v642 = vsel %vm582, %v495, 0
        %v645 = vsel %vm582, %v494, 0
        %v648 = vsel %vm582, %v497, 0
        %650 = vmatprep.subr.mxu0 0.0
        %651 = vmatpush1.msra.mxu0 0.0
        %652 = vmatprep.subr.mxu0 0.0
        %653 = vmatpush1.msra.mxu0 0.0
        %654 = vmatprep.subr.mxu0 0.0
        %655 = vmatpush1.msra.mxu0 0.0
        %656 = vmatprep.subr.mxu0 0.0
        %657 = vmatpush1.msra.mxu0 0.0
        %658 = vmatprep.subr.mxu0 0.0
        %659 = vmatpush1.msra.mxu0 0.0
        %660 = vmatprep.subr.mxu0 0.0
        %661 = vmatpush1.msra.mxu0 0.0
        %662 = vmatprep.subr.mxu0 0.0
        %663 = vmatpush1.msra.mxu0 0.0
        %664 = vmatprep.subr.mxu0 0.0
        %665 = vmatpush1.msra.mxu0 0.0
        %666 = vmatprep.subr.mxu0 0.0
        %667 = vmatpush1.msra.mxu0 0.0
        %668 = vmatprep.subr.mxu0 0.0
        %669 = vmatpush1.msra.mxu0 0.0
        %670 = vmatprep.subr.mxu0 0.0
        %671 = vmatpush1.msra.mxu0 0.0
        %672 = vmatprep.subr.mxu0 0.0
        %673 = vmatpush1.msra.mxu0 0.0
        %674 = vmatprep.subr.mxu0 0.0
        %675 = vmatpush1.msra.mxu0 0.0
        %676 = vmatprep.subr.mxu0 0.0
        %677 = vmatpush1.msra.mxu0 0.0
        %678 = vmatprep.subr.mxu0 %v642
        %679 = vmatpush1.msra.mxu0 %v639
        %680 = vmatprep.subr.mxu0 %v614
        %681 = vmatpush1.msra.mxu0 %v613
        %682 = vmatprep.subr.mxu0 0.0
        %683 = vmatpush2.msra.mxu0 0.0
        %684 = vmatprep.subr.mxu0 0.0
        %685 = vmatpush2.msra.mxu0 0.0
        %686 = vmatprep.subr.mxu0 0.0
        %687 = vmatpush2.msra.mxu0 0.0
        %688 = vmatprep.subr.mxu0 0.0
        %689 = vmatpush2.msra.mxu0 0.0
        %690 = vmatprep.subr.mxu0 0.0
        %691 = vmatpush2.msra.mxu0 0.0
        %692 = vmatprep.subr.mxu0 0.0
        %693 = vmatpush2.msra.mxu0 0.0
        %694 = vmatprep.subr.mxu0 0.0
        %695 = vmatpush2.msra.mxu0 0.0
        %696 = vmatprep.subr.mxu0 0.0
        %697 = vmatpush2.msra.mxu0 0.0
        %698 = vmatprep.subr.mxu0 0.0
        %699 = vmatpush2.msra.mxu0 0.0
        %700 = vmatprep.subr.mxu0 0.0
        %701 = vmatpush2.msra.mxu0 0.0
        %702 = vmatprep.subr.mxu0 0.0
        %703 = vmatpush2.msra.mxu0 0.0
        %704 = vmatprep.subr.mxu0 0.0
        %705 = vmatpush2.msra.mxu0 0.0
        %706 = vmatprep.subr.mxu0 0.0
        %707 = vmatpush2.msra.mxu0 0.0
        %708 = vmatprep.subr.mxu0 0.0
        %709 = vmatpush2.msra.mxu0 0.0
        %710 = vmatprep.subr.mxu0 0.0
        %711 = vmatpush2.msra.mxu0 0.0
        %712 = vmatprep.subr.mxu0 0.0
        %713 = vmatpush2.msra.mxu0 0.0
        %714 = vmatprep.mubr.f32.mxu0 0.0
        %715 = vmatmul.mubr.f32.gmra.mxu0 %v633
        %v716 = vpop.f32.mrf.mxu0
        %v717 = vadd.f32 %v624, %v716
        %v718 = vpop.f32.mrf.mxu0
        %v719 = vadd.f32 %v624, %v718
        %720 = vmatprep.mubr.f32.mxu0 0.0
        %721 = vmatmul.mubr.f32.gmra.mxu0 %v636
        %v722 = vpop.f32.mrf.mxu0
        %v723 = vadd.f32 %v629, %v722
        %v724 = vpop.f32.mrf.mxu0
        %v725 = vadd.f32 %v629, %v724
        %726 = vdwg.mxu0
        %727 = vmatprep.subr.mxu0 0.0
        %728 = vmatpush1.msra.mxu0 0.0
        %729 = vmatprep.subr.mxu0 0.0
        %730 = vmatpush1.msra.mxu0 0.0
        %731 = vmatprep.subr.mxu0 0.0
        %732 = vmatpush1.msra.mxu0 0.0
        %733 = vmatprep.subr.mxu0 0.0
        %734 = vmatpush1.msra.mxu0 0.0
        %735 = vmatprep.subr.mxu0 0.0
        %736 = vmatpush1.msra.mxu0 0.0
        %737 = vmatprep.subr.mxu0 0.0
        %738 = vmatpush1.msra.mxu0 0.0
        %739 = vmatprep.subr.mxu0 0.0
        %740 = vmatpush1.msra.mxu0 0.0
        %741 = vmatprep.subr.mxu0 0.0
        %742 = vmatpush1.msra.mxu0 0.0
        %743 = vmatprep.subr.mxu0 0.0
        %744 = vmatpush1.msra.mxu0 0.0
        %745 = vmatprep.subr.mxu0 0.0
        %746 = vmatpush1.msra.mxu0 0.0
        %747 = vmatprep.subr.mxu0 0.0
        %748 = vmatpush1.msra.mxu0 0.0
        %749 = vmatprep.subr.mxu0 0.0
        %750 = vmatpush1.msra.mxu0 0.0
        %751 = vmatprep.subr.mxu0 0.0
        %752 = vmatpush1.msra.mxu0 0.0
        %753 = vmatprep.subr.mxu0 0.0
        %754 = vmatpush1.msra.mxu0 0.0
        %755 = vmatprep.subr.mxu0 %v648
        %756 = vmatpush1.msra.mxu0 %v645
        %757 = vmatprep.subr.mxu0 %v616
        %758 = vmatpush1.msra.mxu0 %v615
        %759 = vmatprep.subr.mxu0 0.0
        %760 = vmatpush2.msra.mxu0 0.0
        %761 = vmatprep.subr.mxu0 0.0
        %762 = vmatpush2.msra.mxu0 0.0
        %763 = vmatprep.subr.mxu0 0.0
        %764 = vmatpush2.msra.mxu0 0.0
        %765 = vmatprep.subr.mxu0 0.0
        %766 = vmatpush2.msra.mxu0 0.0
        %767 = vmatprep.subr.mxu0 0.0
        %768 = vmatpush2.msra.mxu0 0.0
        %769 = vmatprep.subr.mxu0 0.0
        %770 = vmatpush2.msra.mxu0 0.0
        %771 = vmatprep.subr.mxu0 0.0
        %772 = vmatpush2.msra.mxu0 0.0
        %773 = vmatprep.subr.mxu0 0.0
        %774 = vmatpush2.msra.mxu0 0.0
        %775 = vmatprep.subr.mxu0 0.0
        %776 = vmatpush2.msra.mxu0 0.0
        %777 = vmatprep.subr.mxu0 0.0
        %778 = vmatpush2.msra.mxu0 0.0
        %779 = vmatprep.subr.mxu0 0.0
        %780 = vmatpush2.msra.mxu0 0.0
        %781 = vmatprep.subr.mxu0 0.0
        %782 = vmatpush2.msra.mxu0 0.0
        %783 = vmatprep.subr.mxu0 0.0
        %784 = vmatpush2.msra.mxu0 0.0
        %785 = vmatprep.subr.mxu0 0.0
        %786 = vmatpush2.msra.mxu0 0.0
        %787 = vmatprep.subr.mxu0 0.0
        %788 = vmatpush2.msra.mxu0 0.0
        %789 = vmatprep.subr.mxu0 0.0
        %790 = vmatpush2.msra.mxu0 0.0
        %791 = vmatprep.mubr.f32.mxu0 0.0
        %792 = vmatmul.mubr.f32.gmra.mxu0 %v633
        %v793 = vpop.f32.mrf.mxu0
        %v794 = vadd.f32 %v624, %v793
        %v795 = vpop.f32.mrf.mxu0
        %v796 = vadd.f32 %v624, %v795
        %797 = vmatprep.mubr.f32.mxu0 0.0
        %798 = vmatmul.mubr.f32.gmra.mxu0 %v636
        %v799 = vpop.f32.mrf.mxu0
        %v800 = vadd.f32 %v629, %v799
        %v801 = vpop.f32.mrf.mxu0
        %v802 = vadd.f32 %v629, %v801
        %803 = vdwg.mxu0
        %v804 = vmax.f32 %v717, 0.0
        %v805 = vmax.f32 %v719, 0.0
        %v806 = vmax.f32 %v794, 0.0
        %v807 = vmax.f32 %v796, 0.0
        %v808 = vmax.f32 %v723, 0.0
        %v809 = vmax.f32 %v725, 0.0
        %v810 = vmax.f32 %v800, 0.0
        %v811 = vmax.f32 %v802, 0.0
        %v812 = vld [vmem:[%s3] sm:$0xff]
        %v813 = vld [vmem:[%s3 + $0x8] sm:$0xff]
        %815 = vset.pattern.permute.xlu0 0
        %816 = vperm.xlu0 %815, %v812
        %v817 = vpop.permute.xlu0 %816
        %820 = vset.pattern.permute.xlu0 0
        %821 = vperm.xlu0 %820, %v813
        %v822 = vpop.permute.xlu0 %821
        %v824 = vmul.f32 %v804, %v817
        %v825 = vmul.f32 %v805, %v817
        %v826 = vmul.f32 %v806, %v817
        %v827 = vmul.f32 %v807, %v817
        %v828 = vmul.f32 %v808, %v822
        %v829 = vmul.f32 %v809, %v822
        %v830 = vmul.f32 %v810, %v822
        %v831 = vmul.f32 %v811, %v822
        %v832 = vld [vmem:[%s4] sm:$0xff]
        %v833 = vld [vmem:[%s4 + $0x8] sm:$0xff]
        %835 = vset.pattern.permute.xlu0 0
        %836 = vperm.xlu0 %835, %v832
        %v837 = vpop.permute.xlu0 %836
        %840 = vset.pattern.permute.xlu0 0
        %841 = vperm.xlu0 %840, %v833
        %v842 = vpop.permute.xlu0 %841
        %v844 = vadd.f32 %v824, %v837
        %v845 = vadd.f32 %v825, %v837
        %v846 = vadd.f32 %v826, %v837
        %v847 = vadd.f32 %v827, %v837
        %v848 = vadd.f32 %v828, %v842
        %v849 = vadd.f32 %v829, %v842
        %v850 = vadd.f32 %v830, %v842
        %v851 = vadd.f32 %v831, %v842
        %852 = vst [vmem:[#allocation2] sm:$0xff] %v844
        %853 = vst [vmem:[#allocation2 + $0x8] sm:$0xff] %v845
        %854 = vst [vmem:[#allocation2 + $0x10] sm:$0xff] %v846
        %855 = vst [vmem:[#allocation2 + $0x18] sm:$0xff] %v847
        %856 = vst [vmem:[#allocation2 + $0x20] sm:$0xff] %v848
        %857 = vst [vmem:[#allocation2 + $0x28] sm:$0xff] %v849
        %858 = vst [vmem:[#allocation2 + $0x30] sm:$0xff] %v850
        %859 = vst [vmem:[#allocation2 + $0x38] sm:$0xff] %v851
        %860 = vrot.lane.b32.xlu0 %v844, 127
        %v861 = vpop.permute.xlu0 %860
        %862 = vrot.lane.b32.xlu0 %v848, 127
        %v863 = vpop.permute.xlu0 %862
        %864 = vrot.lane.b32.xlu0 %v845, 127
        %v865 = vpop.permute.xlu0 %864
        %866 = vrot.lane.b32.xlu0 %v849, 127
        %v867 = vpop.permute.xlu0 %866
        %868 = vrot.lane.b32.xlu0 %v846, 127
        %v869 = vpop.permute.xlu0 %868
        %870 = vrot.lane.b32.xlu0 %v850, 127
        %v871 = vpop.permute.xlu0 %870
        %872 = vrot.lane.b32.xlu0 %v847, 127
        %v873 = vpop.permute.xlu0 %872
        %874 = vrot.lane.b32.xlu0 %v851, 127
        %v875 = vpop.permute.xlu0 %874
        %v876 = vsel %vm402, %v869, %v873
        %v877 = vsel %vm402, %v871, %v875
        %v878 = vsel %vm402, %v865, %v869
        %v879 = vsel %vm402, %v867, %v871
        %v880 = vsel %vm402, %v861, %v865
        %v881 = vsel %vm402, %v863, %v867
        %v882 = vsel %vm402, %v873, %v861
        %v883 = vsel %vm402, %v875, %v863
        %884 = vst [vmem:[#allocation2 + $0x40] sm:$0xff] %v880
        %885 = vst [vmem:[#allocation2 + $0x48] sm:$0xff] %v878
        %886 = vst [vmem:[#allocation2 + $0x50] sm:$0xff] %v876
        %887 = vst [vmem:[#allocation2 + $0x58] sm:$0xff] %v882
        %888 = vst [vmem:[#allocation2 + $0x60] sm:$0xff] %v881
        %889 = vst [vmem:[#allocation2 + $0x68] sm:$0xff] %v879
        %890 = vst [vmem:[#allocation2 + $0x70] sm:$0xff] %v877
        %891 = vst [vmem:[#allocation2 + $0x78] sm:$0xff] %v883
        %892 = vrot.lane.b32.xlu0 %v844, 126
        %v893 = vpop.permute.xlu0 %892
        %894 = vrot.lane.b32.xlu0 %v848, 126
        %v895 = vpop.permute.xlu0 %894
        %896 = vrot.lane.b32.xlu0 %v845, 126
        %v897 = vpop.permute.xlu0 %896
        %898 = vrot.lane.b32.xlu0 %v849, 126
        %v899 = vpop.permute.xlu0 %898
        %900 = vrot.lane.b32.xlu0 %v846, 126
        %v901 = vpop.permute.xlu0 %900
        %902 = vrot.lane.b32.xlu0 %v850, 126
        %v903 = vpop.permute.xlu0 %902
        %904 = vrot.lane.b32.xlu0 %v847, 126
        %v905 = vpop.permute.xlu0 %904
        %906 = vrot.lane.b32.xlu0 %v851, 126
        %v907 = vpop.permute.xlu0 %906
        %v908 = vsel %vm415, %v901, %v905
        %v909 = vsel %vm415, %v903, %v907
        %v910 = vsel %vm415, %v897, %v901
        %v911 = vsel %vm415, %v899, %v903
        %v912 = vsel %vm415, %v893, %v897
        %v913 = vsel %vm415, %v895, %v899
        %v914 = vsel %vm415, %v905, %v893
        %v915 = vsel %vm415, %v907, %v895
        %916 = vst [vmem:[#allocation2 + $0x80] sm:$0xff] %v912
        %917 = vst [vmem:[#allocation2 + $0x88] sm:$0xff] %v910
        %918 = vst [vmem:[#allocation2 + $0x90] sm:$0xff] %v908
        %919 = vst [vmem:[#allocation2 + $0x98] sm:$0xff] %v914
        %920 = vst [vmem:[#allocation2 + $0xa0] sm:$0xff] %v913
        %921 = vst [vmem:[#allocation2 + $0xa8] sm:$0xff] %v911
        %922 = vst [vmem:[#allocation2 + $0xb0] sm:$0xff] %v909
        %923 = vst [vmem:[#allocation2 + $0xb8] sm:$0xff] %v915
        %924 = vrot.lane.b32.xlu0 %v844, 125
        %v925 = vpop.permute.xlu0 %924
        %926 = vrot.lane.b32.xlu0 %v848, 125
        %v927 = vpop.permute.xlu0 %926
        %928 = vrot.lane.b32.xlu0 %v845, 125
        %v929 = vpop.permute.xlu0 %928
        %930 = vrot.lane.b32.xlu0 %v849, 125
        %v931 = vpop.permute.xlu0 %930
        %932 = vrot.lane.b32.xlu0 %v846, 125
        %v933 = vpop.permute.xlu0 %932
        %934 = vrot.lane.b32.xlu0 %v850, 125
        %v935 = vpop.permute.xlu0 %934
        %936 = vrot.lane.b32.xlu0 %v847, 125
        %v937 = vpop.permute.xlu0 %936
        %938 = vrot.lane.b32.xlu0 %v851, 125
        %v939 = vpop.permute.xlu0 %938
        %vm940 = vcmp.lt.s32.totalorder %v401, 125
        %v941 = vsel %vm940, %v933, %v937
        %v942 = vsel %vm940, %v935, %v939
        %v943 = vsel %vm940, %v929, %v933
        %v944 = vsel %vm940, %v931, %v935
        %v945 = vsel %vm940, %v925, %v929
        %v946 = vsel %vm940, %v927, %v931
        %v947 = vsel %vm940, %v937, %v925
        %v948 = vsel %vm940, %v939, %v927
        %949 = vst [vmem:[#allocation2 + $0xc0] sm:$0xff] %v945
        %950 = vst [vmem:[#allocation2 + $0xc8] sm:$0xff] %v943
        %951 = vst [vmem:[#allocation2 + $0xd0] sm:$0xff] %v941
        %952 = vst [vmem:[#allocation2 + $0xd8] sm:$0xff] %v947
        %953 = vst [vmem:[#allocation2 + $0xe0] sm:$0xff] %v946
        %954 = vst [vmem:[#allocation2 + $0xe8] sm:$0xff] %v944
        %955 = vst [vmem:[#allocation2 + $0xf0] sm:$0xff] %v942
        %956 = vst [vmem:[#allocation2 + $0xf8] sm:$0xff] %v948
        %957 = vrot.lane.b32.xlu0 %v844, 124
        %v958 = vpop.permute.xlu0 %957
        %959 = vrot.lane.b32.xlu0 %v848, 124
        %v960 = vpop.permute.xlu0 %959
        %961 = vrot.lane.b32.xlu0 %v845, 124
        %v962 = vpop.permute.xlu0 %961
        %963 = vrot.lane.b32.xlu0 %v849, 124
        %v964 = vpop.permute.xlu0 %963
        %965 = vrot.lane.b32.xlu0 %v846, 124
        %v966 = vpop.permute.xlu0 %965
        %967 = vrot.lane.b32.xlu0 %v850, 124
        %v968 = vpop.permute.xlu0 %967
        %969 = vrot.lane.b32.xlu0 %v847, 124
        %v970 = vpop.permute.xlu0 %969
        %971 = vrot.lane.b32.xlu0 %v851, 124
        %v972 = vpop.permute.xlu0 %971
        %vm973 = vcmp.lt.s32.totalorder %v401, 124
        %v974 = vsel %vm973, %v966, %v970
        %v975 = vsel %vm973, %v968, %v972
        %v976 = vsel %vm973, %v962, %v966
        %v977 = vsel %vm973, %v964, %v968
        %v978 = vsel %vm973, %v958, %v962
        %v979 = vsel %vm973, %v960, %v964
        %v980 = vsel %vm973, %v970, %v958
        %v981 = vsel %vm973, %v972, %v960
        %982 = vst [vmem:[#allocation2 + $0x100] sm:$0xff] %v978
        %983 = vst [vmem:[#allocation2 + $0x108] sm:$0xff] %v976
        %984 = vst [vmem:[#allocation2 + $0x110] sm:$0xff] %v974
        %985 = vst [vmem:[#allocation2 + $0x118] sm:$0xff] %v980
        %986 = vst [vmem:[#allocation2 + $0x120] sm:$0xff] %v979
        %987 = vst [vmem:[#allocation2 + $0x128] sm:$0xff] %v977
        %988 = vst [vmem:[#allocation2 + $0x130] sm:$0xff] %v975
        %989 = vst [vmem:[#allocation2 + $0x138] sm:$0xff] %v981
        %990 = vrot.lane.b32.xlu0 %v844, 108
        %v991 = vpop.permute.xlu0 %990
        %992 = vrot.lane.b32.xlu0 %v848, 108
        %v993 = vpop.permute.xlu0 %992
        %994 = vrot.lane.b32.xlu0 %v845, 108
        %v995 = vpop.permute.xlu0 %994
        %996 = vrot.lane.b32.xlu0 %v849, 108
        %v997 = vpop.permute.xlu0 %996
        %998 = vrot.lane.b32.xlu0 %v846, 108
        %v999 = vpop.permute.xlu0 %998
        %1000 = vrot.lane.b32.xlu0 %v850, 108
        %v1001 = vpop.permute.xlu0 %1000
        %1002 = vrot.lane.b32.xlu0 %v847, 108
        %v1003 = vpop.permute.xlu0 %1002
        %1004 = vrot.lane.b32.xlu0 %v851, 108
        %v1005 = vpop.permute.xlu0 %1004
        %v1006 = vsel %vm428, %v999, %v1003
        %v1007 = vsel %vm428, %v1001, %v1005
        %v1008 = vsel %vm428, %v995, %v999
        %v1009 = vsel %vm428, %v997, %v1001
        %v1010 = vsel %vm428, %v991, %v995
        %v1011 = vsel %vm428, %v993, %v997
        %v1012 = vsel %vm428, %v1003, %v991
        %v1013 = vsel %vm428, %v1005, %v993
        %1014 = vst [vmem:[#allocation2 + $0x140] sm:$0xff] %v1010
        %1015 = vst [vmem:[#allocation2 + $0x148] sm:$0xff] %v1008
        %1016 = vst [vmem:[#allocation2 + $0x150] sm:$0xff] %v1006
        %1017 = vst [vmem:[#allocation2 + $0x158] sm:$0xff] %v1012
        %1018 = vst [vmem:[#allocation2 + $0x160] sm:$0xff] %v1011
        %1019 = vst [vmem:[#allocation2 + $0x168] sm:$0xff] %v1009
        %1020 = vst [vmem:[#allocation2 + $0x170] sm:$0xff] %v1007
        %1021 = vst [vmem:[#allocation2 + $0x178] sm:$0xff] %v1013
        %1022 = vrot.lane.b32.xlu0 %v844, 107
        %v1023 = vpop.permute.xlu0 %1022
        %1024 = vrot.lane.b32.xlu0 %v848, 107
        %v1025 = vpop.permute.xlu0 %1024
        %1026 = vrot.lane.b32.xlu0 %v845, 107
        %v1027 = vpop.permute.xlu0 %1026
        %1028 = vrot.lane.b32.xlu0 %v849, 107
        %v1029 = vpop.permute.xlu0 %1028
        %1030 = vrot.lane.b32.xlu0 %v846, 107
        %v1031 = vpop.permute.xlu0 %1030
        %1032 = vrot.lane.b32.xlu0 %v850, 107
        %v1033 = vpop.permute.xlu0 %1032
        %1034 = vrot.lane.b32.xlu0 %v847, 107
        %v1035 = vpop.permute.xlu0 %1034
        %1036 = vrot.lane.b32.xlu0 %v851, 107
        %v1037 = vpop.permute.xlu0 %1036
        %v1038 = vsel %vm441, %v1031, %v1035
        %v1039 = vsel %vm441, %v1033, %v1037
        %v1040 = vsel %vm441, %v1027, %v1031
        %v1041 = vsel %vm441, %v1029, %v1033
        %v1042 = vsel %vm441, %v1023, %v1027
        %v1043 = vsel %vm441, %v1025, %v1029
        %v1044 = vsel %vm441, %v1035, %v1023
        %v1045 = vsel %vm441, %v1037, %v1025
        %1046 = vst [vmem:[#allocation2 + $0x180] sm:$0xff] %v1042
        %1047 = vst [vmem:[#allocation2 + $0x188] sm:$0xff] %v1040
        %1048 = vst [vmem:[#allocation2 + $0x190] sm:$0xff] %v1038
        %1049 = vst [vmem:[#allocation2 + $0x198] sm:$0xff] %v1044
        %1050 = vst [vmem:[#allocation2 + $0x1a0] sm:$0xff] %v1043
        %1051 = vst [vmem:[#allocation2 + $0x1a8] sm:$0xff] %v1041
        %1052 = vst [vmem:[#allocation2 + $0x1b0] sm:$0xff] %v1039
        %1053 = vst [vmem:[#allocation2 + $0x1b8] sm:$0xff] %v1045
        %1054 = vrot.lane.b32.xlu0 %v844, 106
        %v1055 = vpop.permute.xlu0 %1054
        %1056 = vrot.lane.b32.xlu0 %v848, 106
        %v1057 = vpop.permute.xlu0 %1056
        %1058 = vrot.lane.b32.xlu0 %v845, 106
        %v1059 = vpop.permute.xlu0 %1058
        %1060 = vrot.lane.b32.xlu0 %v849, 106
        %v1061 = vpop.permute.xlu0 %1060
        %1062 = vrot.lane.b32.xlu0 %v846, 106
        %v1063 = vpop.permute.xlu0 %1062
        %1064 = vrot.lane.b32.xlu0 %v850, 106
        %v1065 = vpop.permute.xlu0 %1064
        %1066 = vrot.lane.b32.xlu0 %v847, 106
        %v1067 = vpop.permute.xlu0 %1066
        %1068 = vrot.lane.b32.xlu0 %v851, 106
        %v1069 = vpop.permute.xlu0 %1068
        %v1070 = vsel %vm454, %v1063, %v1067
        %v1071 = vsel %vm454, %v1065, %v1069
        %v1072 = vsel %vm454, %v1059, %v1063
        %v1073 = vsel %vm454, %v1061, %v1065
        %v1074 = vsel %vm454, %v1055, %v1059
        %v1075 = vsel %vm454, %v1057, %v1061
        %v1076 = vsel %vm454, %v1067, %v1055
        %v1077 = vsel %vm454, %v1069, %v1057
        %1078 = vst [vmem:[#allocation2 + $0x1c0] sm:$0xff] %v1074
        %1079 = vst [vmem:[#allocation2 + $0x1c8] sm:$0xff] %v1072
        %1080 = vst [vmem:[#allocation2 + $0x1d0] sm:$0xff] %v1070
        %1081 = vst [vmem:[#allocation2 + $0x1d8] sm:$0xff] %v1076
        %1082 = vst [vmem:[#allocation2 + $0x1e0] sm:$0xff] %v1075
        %1083 = vst [vmem:[#allocation2 + $0x1e8] sm:$0xff] %v1073
        %1084 = vst [vmem:[#allocation2 + $0x1f0] sm:$0xff] %v1071
        %1085 = vst [vmem:[#allocation2 + $0x1f8] sm:$0xff] %v1077
        %1086 = vrot.lane.b32.xlu0 %v844, 105
        %v1087 = vpop.permute.xlu0 %1086
        %1088 = vrot.lane.b32.xlu0 %v848, 105
        %v1089 = vpop.permute.xlu0 %1088
        %1090 = vrot.lane.b32.xlu0 %v845, 105
        %v1091 = vpop.permute.xlu0 %1090
        %1092 = vrot.lane.b32.xlu0 %v849, 105
        %v1093 = vpop.permute.xlu0 %1092
        %1094 = vrot.lane.b32.xlu0 %v846, 105
        %v1095 = vpop.permute.xlu0 %1094
        %1096 = vrot.lane.b32.xlu0 %v850, 105
        %v1097 = vpop.permute.xlu0 %1096
        %1098 = vrot.lane.b32.xlu0 %v847, 105
        %v1099 = vpop.permute.xlu0 %1098
        %1100 = vrot.lane.b32.xlu0 %v851, 105
        %v1101 = vpop.permute.xlu0 %1100
        %vm1102 = vcmp.lt.s32.totalorder %v401, 105
        %v1103 = vsel %vm1102, %v1095, %v1099
        %v1104 = vsel %vm1102, %v1097, %v1101
        %v1105 = vsel %vm1102, %v1091, %v1095
        %v1106 = vsel %vm1102, %v1093, %v1097
        %v1107 = vsel %vm1102, %v1087, %v1091
        %v1108 = vsel %vm1102, %v1089, %v1093
        %v1109 = vsel %vm1102, %v1099, %v1087
        %v1110 = vsel %vm1102, %v1101, %v1089
        %1111 = vst [vmem:[#allocation2 + $0x200] sm:$0xff] %v1107
        %1112 = vst [vmem:[#allocation2 + $0x208] sm:$0xff] %v1105
        %1113 = vst [vmem:[#allocation2 + $0x210] sm:$0xff] %v1103
        %1114 = vst [vmem:[#allocation2 + $0x218] sm:$0xff] %v1109
        %1115 = vst [vmem:[#allocation2 + $0x220] sm:$0xff] %v1108
        %1116 = vst [vmem:[#allocation2 + $0x228] sm:$0xff] %v1106
        %1117 = vst [vmem:[#allocation2 + $0x230] sm:$0xff] %v1104
        %1118 = vst [vmem:[#allocation2 + $0x238] sm:$0xff] %v1110
        %1119 = vrot.lane.b32.xlu0 %v844, 104
        %v1120 = vpop.permute.xlu0 %1119
        %1121 = vrot.lane.b32.xlu0 %v848, 104
        %v1122 = vpop.permute.xlu0 %1121
        %1123 = vrot.lane.b32.xlu0 %v845, 104
        %v1124 = vpop.permute.xlu0 %1123
        %1125 = vrot.lane.b32.xlu0 %v849, 104
        %v1126 = vpop.permute.xlu0 %1125
        %1127 = vrot.lane.b32.xlu0 %v846, 104
        %v1128 = vpop.permute.xlu0 %1127
        %1129 = vrot.lane.b32.xlu0 %v850, 104
        %v1130 = vpop.permute.xlu0 %1129
        %1131 = vrot.lane.b32.xlu0 %v847, 104
        %v1132 = vpop.permute.xlu0 %1131
        %1133 = vrot.lane.b32.xlu0 %v851, 104
        %v1134 = vpop.permute.xlu0 %1133
        %vm1135 = vcmp.lt.s32.totalorder %v401, 104
        %v1136 = vsel %vm1135, %v1128, %v1132
        %v1137 = vsel %vm1135, %v1130, %v1134
        %v1138 = vsel %vm1135, %v1124, %v1128
        %v1139 = vsel %vm1135, %v1126, %v1130
        %v1140 = vsel %vm1135, %v1120, %v1124
        %v1141 = vsel %vm1135, %v1122, %v1126
        %v1142 = vsel %vm1135, %v1132, %v1120
        %v1143 = vsel %vm1135, %v1134, %v1122
        %1144 = vst [vmem:[#allocation2 + $0x240] sm:$0xff] %v1140
        %1145 = vst [vmem:[#allocation2 + $0x248] sm:$0xff] %v1138
        %1146 = vst [vmem:[#allocation2 + $0x250] sm:$0xff] %v1136
        %1147 = vst [vmem:[#allocation2 + $0x258] sm:$0xff] %v1142
        %1148 = vst [vmem:[#allocation2 + $0x260] sm:$0xff] %v1141
        %1149 = vst [vmem:[#allocation2 + $0x268] sm:$0xff] %v1139
        %1150 = vst [vmem:[#allocation2 + $0x270] sm:$0xff] %v1137
        %1151 = vst [vmem:[#allocation2 + $0x278] sm:$0xff] %v1143
        %1152 = vrot.lane.b32.xlu0 %v844, 88
        %v1153 = vpop.permute.xlu0 %1152
        %1154 = vrot.lane.b32.xlu0 %v848, 88
        %v1155 = vpop.permute.xlu0 %1154
        %1156 = vrot.lane.b32.xlu0 %v845, 88
        %v1157 = vpop.permute.xlu0 %1156
        %1158 = vrot.lane.b32.xlu0 %v849, 88
        %v1159 = vpop.permute.xlu0 %1158
        %1160 = vrot.lane.b32.xlu0 %v846, 88
        %v1161 = vpop.permute.xlu0 %1160
        %1162 = vrot.lane.b32.xlu0 %v850, 88
        %v1163 = vpop.permute.xlu0 %1162
        %1164 = vrot.lane.b32.xlu0 %v847, 88
        %v1165 = vpop.permute.xlu0 %1164
        %1166 = vrot.lane.b32.xlu0 %v851, 88
        %v1167 = vpop.permute.xlu0 %1166
        %v1168 = vsel %vm467, %v1161, %v1165
        %v1169 = vsel %vm467, %v1163, %v1167
        %v1170 = vsel %vm467, %v1157, %v1161
        %v1171 = vsel %vm467, %v1159, %v1163
        %v1172 = vsel %vm467, %v1153, %v1157
        %v1173 = vsel %vm467, %v1155, %v1159
        %v1174 = vsel %vm467, %v1165, %v1153
        %v1175 = vsel %vm467, %v1167, %v1155
        %1176 = vst [vmem:[#allocation2 + $0x280] sm:$0xff] %v1172
        %1177 = vst [vmem:[#allocation2 + $0x288] sm:$0xff] %v1170
        %1178 = vst [vmem:[#allocation2 + $0x290] sm:$0xff] %v1168
        %1179 = vst [vmem:[#allocation2 + $0x298] sm:$0xff] %v1174
        %1180 = vst [vmem:[#allocation2 + $0x2a0] sm:$0xff] %v1173
        %1181 = vst [vmem:[#allocation2 + $0x2a8] sm:$0xff] %v1171
        %1182 = vst [vmem:[#allocation2 + $0x2b0] sm:$0xff] %v1169
        %1183 = vst [vmem:[#allocation2 + $0x2b8] sm:$0xff] %v1175
        %1184 = vrot.lane.b32.xlu0 %v844, 87
        %v1185 = vpop.permute.xlu0 %1184
        %1186 = vrot.lane.b32.xlu0 %v848, 87
        %v1187 = vpop.permute.xlu0 %1186
        %1188 = vrot.lane.b32.xlu0 %v845, 87
        %v1189 = vpop.permute.xlu0 %1188
        %1190 = vrot.lane.b32.xlu0 %v849, 87
        %v1191 = vpop.permute.xlu0 %1190
        %1192 = vrot.lane.b32.xlu0 %v846, 87
        %v1193 = vpop.permute.xlu0 %1192
        %1194 = vrot.lane.b32.xlu0 %v850, 87
        %v1195 = vpop.permute.xlu0 %1194
        %1196 = vrot.lane.b32.xlu0 %v847, 87
        %v1197 = vpop.permute.xlu0 %1196
        %1198 = vrot.lane.b32.xlu0 %v851, 87
        %v1199 = vpop.permute.xlu0 %1198
        %v1200 = vsel %vm480, %v1193, %v1197
        %v1201 = vsel %vm480, %v1195, %v1199
        %v1202 = vsel %vm480, %v1189, %v1193
        %v1203 = vsel %vm480, %v1191, %v1195
        %v1204 = vsel %vm480, %v1185, %v1189
        %v1205 = vsel %vm480, %v1187, %v1191
        %v1206 = vsel %vm480, %v1197, %v1185
        %v1207 = vsel %vm480, %v1199, %v1187
        %1208 = vst [vmem:[#allocation2 + $0x2c0] sm:$0xff] %v1204
        %1209 = vst [vmem:[#allocation2 + $0x2c8] sm:$0xff] %v1202
        %1210 = vst [vmem:[#allocation2 + $0x2d0] sm:$0xff] %v1200
        %1211 = vst [vmem:[#allocation2 + $0x2d8] sm:$0xff] %v1206
        %1212 = vst [vmem:[#allocation2 + $0x2e0] sm:$0xff] %v1205
        %1213 = vst [vmem:[#allocation2 + $0x2e8] sm:$0xff] %v1203
        %1214 = vst [vmem:[#allocation2 + $0x2f0] sm:$0xff] %v1201
        %1215 = vst [vmem:[#allocation2 + $0x2f8] sm:$0xff] %v1207
        %1216 = vrot.lane.b32.xlu0 %v844, 86
        %v1217 = vpop.permute.xlu0 %1216
        %1218 = vrot.lane.b32.xlu0 %v848, 86
        %v1219 = vpop.permute.xlu0 %1218
        %1220 = vrot.lane.b32.xlu0 %v845, 86
        %v1221 = vpop.permute.xlu0 %1220
        %1222 = vrot.lane.b32.xlu0 %v849, 86
        %v1223 = vpop.permute.xlu0 %1222
        %1224 = vrot.lane.b32.xlu0 %v846, 86
        %v1225 = vpop.permute.xlu0 %1224
        %1226 = vrot.lane.b32.xlu0 %v850, 86
        %v1227 = vpop.permute.xlu0 %1226
        %1228 = vrot.lane.b32.xlu0 %v847, 86
        %v1229 = vpop.permute.xlu0 %1228
        %1230 = vrot.lane.b32.xlu0 %v851, 86
        %v1231 = vpop.permute.xlu0 %1230
        %v1232 = vsel %vm493, %v1225, %v1229
        %v1233 = vsel %vm493, %v1227, %v1231
        %v1234 = vsel %vm493, %v1221, %v1225
        %v1235 = vsel %vm493, %v1223, %v1227
        %v1236 = vsel %vm493, %v1217, %v1221
        %v1237 = vsel %vm493, %v1219, %v1223
        %v1238 = vsel %vm493, %v1229, %v1217
        %v1239 = vsel %vm493, %v1231, %v1219
        %1240 = vst [vmem:[#allocation2 + $0x300] sm:$0xff] %v1236
        %1241 = vst [vmem:[#allocation2 + $0x308] sm:$0xff] %v1234
        %1242 = vst [vmem:[#allocation2 + $0x310] sm:$0xff] %v1232
        %1243 = vst [vmem:[#allocation2 + $0x318] sm:$0xff] %v1238
        %1244 = vst [vmem:[#allocation2 + $0x320] sm:$0xff] %v1237
        %1245 = vst [vmem:[#allocation2 + $0x328] sm:$0xff] %v1235
        %1246 = vst [vmem:[#allocation2 + $0x330] sm:$0xff] %v1233
        %1247 = vst [vmem:[#allocation2 + $0x338] sm:$0xff] %v1239
        %1248 = vrot.lane.b32.xlu0 %v844, 85
        %v1249 = vpop.permute.xlu0 %1248
        %1250 = vrot.lane.b32.xlu0 %v848, 85
        %v1251 = vpop.permute.xlu0 %1250
        %1252 = vrot.lane.b32.xlu0 %v845, 85
        %v1253 = vpop.permute.xlu0 %1252
        %1254 = vrot.lane.b32.xlu0 %v849, 85
        %v1255 = vpop.permute.xlu0 %1254
        %1256 = vrot.lane.b32.xlu0 %v846, 85
        %v1257 = vpop.permute.xlu0 %1256
        %1258 = vrot.lane.b32.xlu0 %v850, 85
        %v1259 = vpop.permute.xlu0 %1258
        %1260 = vrot.lane.b32.xlu0 %v847, 85
        %v1261 = vpop.permute.xlu0 %1260
        %1262 = vrot.lane.b32.xlu0 %v851, 85
        %v1263 = vpop.permute.xlu0 %1262
        %vm1264 = vcmp.lt.s32.totalorder %v401, 85
        %v1265 = vsel %vm1264, %v1257, %v1261
        %v1266 = vsel %vm1264, %v1259, %v1263
        %v1267 = vsel %vm1264, %v1253, %v1257
        %v1268 = vsel %vm1264, %v1255, %v1259
        %v1269 = vsel %vm1264, %v1249, %v1253
        %v1270 = vsel %vm1264, %v1251, %v1255
        %v1271 = vsel %vm1264, %v1261, %v1249
        %v1272 = vsel %vm1264, %v1263, %v1251
        %1273 = vst [vmem:[#allocation2 + $0x340] sm:$0xff] %v1269
        %1274 = vst [vmem:[#allocation2 + $0x348] sm:$0xff] %v1267
        %1275 = vst [vmem:[#allocation2 + $0x350] sm:$0xff] %v1265
        %1276 = vst [vmem:[#allocation2 + $0x358] sm:$0xff] %v1271
        %1277 = vst [vmem:[#allocation2 + $0x360] sm:$0xff] %v1270
        %1278 = vst [vmem:[#allocation2 + $0x368] sm:$0xff] %v1268
        %1279 = vst [vmem:[#allocation2 + $0x370] sm:$0xff] %v1266
        %1280 = vst [vmem:[#allocation2 + $0x378] sm:$0xff] %v1272
        %1281 = vrot.lane.b32.xlu0 %v844, 84
        %v1282 = vpop.permute.xlu0 %1281
        %1283 = vrot.lane.b32.xlu0 %v848, 84
        %v1284 = vpop.permute.xlu0 %1283
        %1285 = vrot.lane.b32.xlu0 %v845, 84
        %v1286 = vpop.permute.xlu0 %1285
        %1287 = vrot.lane.b32.xlu0 %v849, 84
        %v1288 = vpop.permute.xlu0 %1287
        %1289 = vrot.lane.b32.xlu0 %v846, 84
        %v1290 = vpop.permute.xlu0 %1289
        %1291 = vrot.lane.b32.xlu0 %v850, 84
        %v1292 = vpop.permute.xlu0 %1291
        %1293 = vrot.lane.b32.xlu0 %v847, 84
        %v1294 = vpop.permute.xlu0 %1293
        %1295 = vrot.lane.b32.xlu0 %v851, 84
        %v1296 = vpop.permute.xlu0 %1295
        %vm1297 = vcmp.lt.s32.totalorder %v401, 84
        %v1298 = vsel %vm1297, %v1290, %v1294
        %v1299 = vsel %vm1297, %v1292, %v1296
        %v1300 = vsel %vm1297, %v1286, %v1290
        %v1301 = vsel %vm1297, %v1288, %v1292
        %v1302 = vsel %vm1297, %v1282, %v1286
        %v1303 = vsel %vm1297, %v1284, %v1288
        %v1304 = vsel %vm1297, %v1294, %v1282
        %v1305 = vsel %vm1297, %v1296, %v1284
        %1306 = vst [vmem:[#allocation2 + $0x380] sm:$0xff] %v1302
        %1307 = vst [vmem:[#allocation2 + $0x388] sm:$0xff] %v1300
        %1308 = vst [vmem:[#allocation2 + $0x390] sm:$0xff] %v1298
        %1309 = vst [vmem:[#allocation2 + $0x398] sm:$0xff] %v1304
        %1310 = vst [vmem:[#allocation2 + $0x3a0] sm:$0xff] %v1303
        %1311 = vst [vmem:[#allocation2 + $0x3a8] sm:$0xff] %v1301
        %1312 = vst [vmem:[#allocation2 + $0x3b0] sm:$0xff] %v1299
        %1313 = vst [vmem:[#allocation2 + $0x3b8] sm:$0xff] %v1305
        %1314 = vrot.lane.b32.xlu0 %v844, 68
        %v1315 = vpop.permute.xlu0 %1314
        %1316 = vrot.lane.b32.xlu0 %v848, 68
        %v1317 = vpop.permute.xlu0 %1316
        %1318 = vrot.lane.b32.xlu0 %v845, 68
        %v1319 = vpop.permute.xlu0 %1318
        %1320 = vrot.lane.b32.xlu0 %v849, 68
        %v1321 = vpop.permute.xlu0 %1320
        %1322 = vrot.lane.b32.xlu0 %v846, 68
        %v1323 = vpop.permute.xlu0 %1322
        %1324 = vrot.lane.b32.xlu0 %v850, 68
        %v1325 = vpop.permute.xlu0 %1324
        %1326 = vrot.lane.b32.xlu0 %v847, 68
        %v1327 = vpop.permute.xlu0 %1326
        %1328 = vrot.lane.b32.xlu0 %v851, 68
        %v1329 = vpop.permute.xlu0 %1328
        %vm1330 = vcmp.lt.s32.totalorder %v401, 68
        %v1331 = vsel %vm1330, %v1323, %v1327
        %v1332 = vsel %vm1330, %v1325, %v1329
        %v1333 = vsel %vm1330, %v1319, %v1323
        %v1334 = vsel %vm1330, %v1321, %v1325
        %v1335 = vsel %vm1330, %v1315, %v1319
        %v1336 = vsel %vm1330, %v1317, %v1321
        %v1337 = vsel %vm1330, %v1327, %v1315
        %v1338 = vsel %vm1330, %v1329, %v1317
        %1339 = vst [vmem:[#allocation2 + $0x3c0] sm:$0xff] %v1335
        %1340 = vst [vmem:[#allocation2 + $0x3c8] sm:$0xff] %v1333
        %1341 = vst [vmem:[#allocation2 + $0x3d0] sm:$0xff] %v1331
        %1342 = vst [vmem:[#allocation2 + $0x3d8] sm:$0xff] %v1337
        %1343 = vst [vmem:[#allocation2 + $0x3e0] sm:$0xff] %v1336
        %1344 = vst [vmem:[#allocation2 + $0x3e8] sm:$0xff] %v1334
        %1345 = vst [vmem:[#allocation2 + $0x3f0] sm:$0xff] %v1332
        %1346 = vst [vmem:[#allocation2 + $0x3f8] sm:$0xff] %v1338
        %1347 = vrot.lane.b32.xlu0 %v844, 67
        %v1348 = vpop.permute.xlu0 %1347
        %1349 = vrot.lane.b32.xlu0 %v848, 67
        %v1350 = vpop.permute.xlu0 %1349
        %1351 = vrot.lane.b32.xlu0 %v845, 67
        %v1352 = vpop.permute.xlu0 %1351
        %1353 = vrot.lane.b32.xlu0 %v849, 67
        %v1354 = vpop.permute.xlu0 %1353
        %1355 = vrot.lane.b32.xlu0 %v846, 67
        %v1356 = vpop.permute.xlu0 %1355
        %1357 = vrot.lane.b32.xlu0 %v850, 67
        %v1358 = vpop.permute.xlu0 %1357
        %1359 = vrot.lane.b32.xlu0 %v847, 67
        %v1360 = vpop.permute.xlu0 %1359
        %1361 = vrot.lane.b32.xlu0 %v851, 67
        %v1362 = vpop.permute.xlu0 %1361
        %vm1363 = vcmp.lt.s32.totalorder %v401, 67
        %v1364 = vsel %vm1363, %v1356, %v1360
        %v1365 = vsel %vm1363, %v1358, %v1362
        %v1366 = vsel %vm1363, %v1352, %v1356
        %v1367 = vsel %vm1363, %v1354, %v1358
        %v1368 = vsel %vm1363, %v1348, %v1352
        %v1369 = vsel %vm1363, %v1350, %v1354
        %v1370 = vsel %vm1363, %v1360, %v1348
        %v1371 = vsel %vm1363, %v1362, %v1350
        %1372 = vst [vmem:[#allocation2 + $0x400] sm:$0xff] %v1368
        %1373 = vst [vmem:[#allocation2 + $0x408] sm:$0xff] %v1366
        %1374 = vst [vmem:[#allocation2 + $0x410] sm:$0xff] %v1364
        %1375 = vst [vmem:[#allocation2 + $0x418] sm:$0xff] %v1370
        %1376 = vst [vmem:[#allocation2 + $0x420] sm:$0xff] %v1369
        %1377 = vst [vmem:[#allocation2 + $0x428] sm:$0xff] %v1367
        %1378 = vst [vmem:[#allocation2 + $0x430] sm:$0xff] %v1365
        %1379 = vst [vmem:[#allocation2 + $0x438] sm:$0xff] %v1371
        %1380 = vrot.lane.b32.xlu0 %v844, 66
        %v1381 = vpop.permute.xlu0 %1380
        %1382 = vrot.lane.b32.xlu0 %v848, 66
        %v1383 = vpop.permute.xlu0 %1382
        %1384 = vrot.lane.b32.xlu0 %v845, 66
        %v1385 = vpop.permute.xlu0 %1384
        %1386 = vrot.lane.b32.xlu0 %v849, 66
        %v1387 = vpop.permute.xlu0 %1386
        %1388 = vrot.lane.b32.xlu0 %v846, 66
        %v1389 = vpop.permute.xlu0 %1388
        %1390 = vrot.lane.b32.xlu0 %v850, 66
        %v1391 = vpop.permute.xlu0 %1390
        %1392 = vrot.lane.b32.xlu0 %v847, 66
        %v1393 = vpop.permute.xlu0 %1392
        %1394 = vrot.lane.b32.xlu0 %v851, 66
        %v1395 = vpop.permute.xlu0 %1394
        %vm1396 = vcmp.lt.s32.totalorder %v401, 66
        %v1397 = vsel %vm1396, %v1389, %v1393
        %v1398 = vsel %vm1396, %v1391, %v1395
        %v1399 = vsel %vm1396, %v1385, %v1389
        %v1400 = vsel %vm1396, %v1387, %v1391
        %v1401 = vsel %vm1396, %v1381, %v1385
        %v1402 = vsel %vm1396, %v1383, %v1387
        %v1403 = vsel %vm1396, %v1393, %v1381
        %v1404 = vsel %vm1396, %v1395, %v1383
        %1405 = vst [vmem:[#allocation2 + $0x440] sm:$0xff] %v1401
        %1406 = vst [vmem:[#allocation2 + $0x448] sm:$0xff] %v1399
        %1407 = vst [vmem:[#allocation2 + $0x450] sm:$0xff] %v1397
        %1408 = vst [vmem:[#allocation2 + $0x458] sm:$0xff] %v1403
        %1409 = vst [vmem:[#allocation2 + $0x460] sm:$0xff] %v1402
        %1410 = vst [vmem:[#allocation2 + $0x468] sm:$0xff] %v1400
        %1411 = vst [vmem:[#allocation2 + $0x470] sm:$0xff] %v1398
        %1412 = vst [vmem:[#allocation2 + $0x478] sm:$0xff] %v1404
        %1413 = vrot.lane.b32.xlu0 %v844, 65
        %v1414 = vpop.permute.xlu0 %1413
        %1415 = vrot.lane.b32.xlu0 %v848, 65
        %v1416 = vpop.permute.xlu0 %1415
        %1417 = vrot.lane.b32.xlu0 %v845, 65
        %v1418 = vpop.permute.xlu0 %1417
        %1419 = vrot.lane.b32.xlu0 %v849, 65
        %v1420 = vpop.permute.xlu0 %1419
        %1421 = vrot.lane.b32.xlu0 %v846, 65
        %v1422 = vpop.permute.xlu0 %1421
        %1423 = vrot.lane.b32.xlu0 %v850, 65
        %v1424 = vpop.permute.xlu0 %1423
        %1425 = vrot.lane.b32.xlu0 %v847, 65
        %v1426 = vpop.permute.xlu0 %1425
        %1427 = vrot.lane.b32.xlu0 %v851, 65
        %v1428 = vpop.permute.xlu0 %1427
        %vm1429 = vcmp.lt.s32.totalorder %v401, 65
        %v1430 = vsel %vm1429, %v1422, %v1426
        %v1431 = vsel %vm1429, %v1424, %v1428
        %v1432 = vsel %vm1429, %v1418, %v1422
        %v1433 = vsel %vm1429, %v1420, %v1424
        %v1434 = vsel %vm1429, %v1414, %v1418
        %v1435 = vsel %vm1429, %v1416, %v1420
        %v1436 = vsel %vm1429, %v1426, %v1414
        %v1437 = vsel %vm1429, %v1428, %v1416
        %1438 = vst [vmem:[#allocation2 + $0x480] sm:$0xff] %v1434
        %1439 = vst [vmem:[#allocation2 + $0x488] sm:$0xff] %v1432
        %1440 = vst [vmem:[#allocation2 + $0x490] sm:$0xff] %v1430
        %1441 = vst [vmem:[#allocation2 + $0x498] sm:$0xff] %v1436
        %1442 = vst [vmem:[#allocation2 + $0x4a0] sm:$0xff] %v1435
        %1443 = vst [vmem:[#allocation2 + $0x4a8] sm:$0xff] %v1433
        %1444 = vst [vmem:[#allocation2 + $0x4b0] sm:$0xff] %v1431
        %1445 = vst [vmem:[#allocation2 + $0x4b8] sm:$0xff] %v1437
        %1446 = vrot.lane.b32.xlu0 %v844, 64
        %v1447 = vpop.permute.xlu0 %1446
        %1448 = vrot.lane.b32.xlu0 %v848, 64
        %v1449 = vpop.permute.xlu0 %1448
        %1450 = vrot.lane.b32.xlu0 %v845, 64
        %v1451 = vpop.permute.xlu0 %1450
        %1452 = vrot.lane.b32.xlu0 %v849, 64
        %v1453 = vpop.permute.xlu0 %1452
        %1454 = vrot.lane.b32.xlu0 %v846, 64
        %v1455 = vpop.permute.xlu0 %1454
        %1456 = vrot.lane.b32.xlu0 %v850, 64
        %v1457 = vpop.permute.xlu0 %1456
        %1458 = vrot.lane.b32.xlu0 %v847, 64
        %v1459 = vpop.permute.xlu0 %1458
        %1460 = vrot.lane.b32.xlu0 %v851, 64
        %v1461 = vpop.permute.xlu0 %1460
        %vm1462 = vcmp.lt.s32.totalorder %v401, 64
        %v1463 = vsel %vm1462, %v1455, %v1459
        %v1464 = vsel %vm1462, %v1457, %v1461
        %v1465 = vsel %vm1462, %v1451, %v1455
        %v1466 = vsel %vm1462, %v1453, %v1457
        %v1467 = vsel %vm1462, %v1447, %v1451
        %v1468 = vsel %vm1462, %v1449, %v1453
        %v1469 = vsel %vm1462, %v1459, %v1447
        %v1470 = vsel %vm1462, %v1461, %v1449
        %1471 = vst [vmem:[#allocation2 + $0x4c0] sm:$0xff] %v1467
        %1472 = vst [vmem:[#allocation2 + $0x4c8] sm:$0xff] %v1465
        %1473 = vst [vmem:[#allocation2 + $0x4d0] sm:$0xff] %v1463
        %1474 = vst [vmem:[#allocation2 + $0x4d8] sm:$0xff] %v1469
        %1475 = vst [vmem:[#allocation2 + $0x4e0] sm:$0xff] %v1468
        %1476 = vst [vmem:[#allocation2 + $0x4e8] sm:$0xff] %v1466
        %1477 = vst [vmem:[#allocation2 + $0x4f0] sm:$0xff] %v1464
        %1478 = vst [vmem:[#allocation2 + $0x4f8] sm:$0xff] %v1470
        %1479 = vrot.lane.b32.xlu0 %v844, 48
        %v1480 = vpop.permute.xlu0 %1479
        %1481 = vrot.lane.b32.xlu0 %v848, 48
        %v1482 = vpop.permute.xlu0 %1481
        %1483 = vrot.lane.b32.xlu0 %v845, 48
        %v1484 = vpop.permute.xlu0 %1483
        %1485 = vrot.lane.b32.xlu0 %v849, 48
        %v1486 = vpop.permute.xlu0 %1485
        %1487 = vrot.lane.b32.xlu0 %v846, 48
        %v1488 = vpop.permute.xlu0 %1487
        %1489 = vrot.lane.b32.xlu0 %v850, 48
        %v1490 = vpop.permute.xlu0 %1489
        %1491 = vrot.lane.b32.xlu0 %v847, 48
        %v1492 = vpop.permute.xlu0 %1491
        %1493 = vrot.lane.b32.xlu0 %v851, 48
        %v1494 = vpop.permute.xlu0 %1493
        %vm1495 = vcmp.lt.s32.totalorder %v401, 48
        %v1496 = vsel %vm1495, %v1488, %v1492
        %v1497 = vsel %vm1495, %v1490, %v1494
        %v1498 = vsel %vm1495, %v1484, %v1488
        %v1499 = vsel %vm1495, %v1486, %v1490
        %v1500 = vsel %vm1495, %v1480, %v1484
        %v1501 = vsel %vm1495, %v1482, %v1486
        %v1502 = vsel %vm1495, %v1492, %v1480
        %v1503 = vsel %vm1495, %v1494, %v1482
        %1504 = vst [vmem:[#allocation2 + $0x500] sm:$0xff] %v1500
        %1505 = vst [vmem:[#allocation2 + $0x508] sm:$0xff] %v1498
        %1506 = vst [vmem:[#allocation2 + $0x510] sm:$0xff] %v1496
        %1507 = vst [vmem:[#allocation2 + $0x518] sm:$0xff] %v1502
        %1508 = vst [vmem:[#allocation2 + $0x520] sm:$0xff] %v1501
        %1509 = vst [vmem:[#allocation2 + $0x528] sm:$0xff] %v1499
        %1510 = vst [vmem:[#allocation2 + $0x530] sm:$0xff] %v1497
        %1511 = vst [vmem:[#allocation2 + $0x538] sm:$0xff] %v1503
        %1512 = vrot.lane.b32.xlu0 %v844, 47
        %v1513 = vpop.permute.xlu0 %1512
        %1514 = vrot.lane.b32.xlu0 %v848, 47
        %v1515 = vpop.permute.xlu0 %1514
        %1516 = vrot.lane.b32.xlu0 %v845, 47
        %v1517 = vpop.permute.xlu0 %1516
        %1518 = vrot.lane.b32.xlu0 %v849, 47
        %v1519 = vpop.permute.xlu0 %1518
        %1520 = vrot.lane.b32.xlu0 %v846, 47
        %v1521 = vpop.permute.xlu0 %1520
        %1522 = vrot.lane.b32.xlu0 %v850, 47
        %v1523 = vpop.permute.xlu0 %1522
        %1524 = vrot.lane.b32.xlu0 %v847, 47
        %v1525 = vpop.permute.xlu0 %1524
        %1526 = vrot.lane.b32.xlu0 %v851, 47
        %v1527 = vpop.permute.xlu0 %1526
        %vm1528 = vcmp.lt.s32.totalorder %v401, 47
        %v1529 = vsel %vm1528, %v1521, %v1525
        %v1530 = vsel %vm1528, %v1523, %v1527
        %v1531 = vsel %vm1528, %v1517, %v1521
        %v1532 = vsel %vm1528, %v1519, %v1523
        %v1533 = vsel %vm1528, %v1513, %v1517
        %v1534 = vsel %vm1528, %v1515, %v1519
        %v1535 = vsel %vm1528, %v1525, %v1513
        %v1536 = vsel %vm1528, %v1527, %v1515
        %1537 = vst [vmem:[#allocation2 + $0x540] sm:$0xff] %v1533
        %1538 = vst [vmem:[#allocation2 + $0x548] sm:$0xff] %v1531
        %1539 = vst [vmem:[#allocation2 + $0x550] sm:$0xff] %v1529
        %1540 = vst [vmem:[#allocation2 + $0x558] sm:$0xff] %v1535
        %1541 = vst [vmem:[#allocation2 + $0x560] sm:$0xff] %v1534
        %1542 = vst [vmem:[#allocation2 + $0x568] sm:$0xff] %v1532
        %1543 = vst [vmem:[#allocation2 + $0x570] sm:$0xff] %v1530
        %1544 = vst [vmem:[#allocation2 + $0x578] sm:$0xff] %v1536
        %1545 = vrot.lane.b32.xlu0 %v844, 46
        %v1546 = vpop.permute.xlu0 %1545
        %1547 = vrot.lane.b32.xlu0 %v848, 46
        %v1548 = vpop.permute.xlu0 %1547
        %1549 = vrot.lane.b32.xlu0 %v845, 46
        %v1550 = vpop.permute.xlu0 %1549
        %1551 = vrot.lane.b32.xlu0 %v849, 46
        %v1552 = vpop.permute.xlu0 %1551
        %1553 = vrot.lane.b32.xlu0 %v846, 46
        %v1554 = vpop.permute.xlu0 %1553
        %1555 = vrot.lane.b32.xlu0 %v850, 46
        %v1556 = vpop.permute.xlu0 %1555
        %1557 = vrot.lane.b32.xlu0 %v847, 46
        %v1558 = vpop.permute.xlu0 %1557
        %1559 = vrot.lane.b32.xlu0 %v851, 46
        %v1560 = vpop.permute.xlu0 %1559
        %vm1561 = vcmp.lt.s32.totalorder %v401, 46
        %v1562 = vsel %vm1561, %v1554, %v1558
        %v1563 = vsel %vm1561, %v1556, %v1560
        %v1564 = vsel %vm1561, %v1550, %v1554
        %v1565 = vsel %vm1561, %v1552, %v1556
        %v1566 = vsel %vm1561, %v1546, %v1550
        %v1567 = vsel %vm1561, %v1548, %v1552
        %v1568 = vsel %vm1561, %v1558, %v1546
        %v1569 = vsel %vm1561, %v1560, %v1548
        %1570 = vst [vmem:[#allocation2 + $0x580] sm:$0xff] %v1566
        %1571 = vst [vmem:[#allocation2 + $0x588] sm:$0xff] %v1564
        %1572 = vst [vmem:[#allocation2 + $0x590] sm:$0xff] %v1562
        %1573 = vst [vmem:[#allocation2 + $0x598] sm:$0xff] %v1568
        %1574 = vst [vmem:[#allocation2 + $0x5a0] sm:$0xff] %v1567
        %1575 = vst [vmem:[#allocation2 + $0x5a8] sm:$0xff] %v1565
        %1576 = vst [vmem:[#allocation2 + $0x5b0] sm:$0xff] %v1563
        %1577 = vst [vmem:[#allocation2 + $0x5b8] sm:$0xff] %v1569
        %1578 = vrot.lane.b32.xlu0 %v844, 45
        %v1579 = vpop.permute.xlu0 %1578
        %1580 = vrot.lane.b32.xlu0 %v848, 45
        %v1581 = vpop.permute.xlu0 %1580
        %1582 = vrot.lane.b32.xlu0 %v845, 45
        %v1583 = vpop.permute.xlu0 %1582
        %1584 = vrot.lane.b32.xlu0 %v849, 45
        %v1585 = vpop.permute.xlu0 %1584
        %1586 = vrot.lane.b32.xlu0 %v846, 45
        %v1587 = vpop.permute.xlu0 %1586
        %1588 = vrot.lane.b32.xlu0 %v850, 45
        %v1589 = vpop.permute.xlu0 %1588
        %1590 = vrot.lane.b32.xlu0 %v847, 45
        %v1591 = vpop.permute.xlu0 %1590
        %1592 = vrot.lane.b32.xlu0 %v851, 45
        %v1593 = vpop.permute.xlu0 %1592
        %vm1594 = vcmp.lt.s32.totalorder %v401, 45
        %v1595 = vsel %vm1594, %v1587, %v1591
        %v1596 = vsel %vm1594, %v1589, %v1593
        %v1597 = vsel %vm1594, %v1583, %v1587
        %v1598 = vsel %vm1594, %v1585, %v1589
        %v1599 = vsel %vm1594, %v1579, %v1583
        %v1600 = vsel %vm1594, %v1581, %v1585
        %v1601 = vsel %vm1594, %v1591, %v1579
        %v1602 = vsel %vm1594, %v1593, %v1581
        %1603 = vst [vmem:[#allocation2 + $0x5c0] sm:$0xff] %v1599
        %1604 = vst [vmem:[#allocation2 + $0x5c8] sm:$0xff] %v1597
        %1605 = vst [vmem:[#allocation2 + $0x5d0] sm:$0xff] %v1595
        %1606 = vst [vmem:[#allocation2 + $0x5d8] sm:$0xff] %v1601
        %1607 = vst [vmem:[#allocation2 + $0x5e0] sm:$0xff] %v1600
        %1608 = vst [vmem:[#allocation2 + $0x5e8] sm:$0xff] %v1598
        %1609 = vst [vmem:[#allocation2 + $0x5f0] sm:$0xff] %v1596
        %1610 = vst [vmem:[#allocation2 + $0x5f8] sm:$0xff] %v1602
        %1611 = vrot.lane.b32.xlu0 %v844, 44
        %v1612 = vpop.permute.xlu0 %1611
        %1613 = vrot.lane.b32.xlu0 %v848, 44
        %v1614 = vpop.permute.xlu0 %1613
        %1615 = vrot.lane.b32.xlu0 %v845, 44
        %v1616 = vpop.permute.xlu0 %1615
        %1617 = vrot.lane.b32.xlu0 %v849, 44
        %v1618 = vpop.permute.xlu0 %1617
        %1619 = vrot.lane.b32.xlu0 %v846, 44
        %v1620 = vpop.permute.xlu0 %1619
        %1621 = vrot.lane.b32.xlu0 %v850, 44
        %v1622 = vpop.permute.xlu0 %1621
        %1623 = vrot.lane.b32.xlu0 %v847, 44
        %v1624 = vpop.permute.xlu0 %1623
        %1625 = vrot.lane.b32.xlu0 %v851, 44
        %v1626 = vpop.permute.xlu0 %1625
        %vm1627 = vcmp.lt.s32.totalorder %v401, 44
        %v1628 = vsel %vm1627, %v1620, %v1624
        %v1629 = vsel %vm1627, %v1622, %v1626
        %v1630 = vsel %vm1627, %v1616, %v1620
        %v1631 = vsel %vm1627, %v1618, %v1622
        %v1632 = vsel %vm1627, %v1612, %v1616
        %v1633 = vsel %vm1627, %v1614, %v1618
        %v1634 = vsel %vm1627, %v1624, %v1612
        %v1635 = vsel %vm1627, %v1626, %v1614
        %1636 = vst [vmem:[#allocation2 + $0x600] sm:$0xff] %v1632
        %1637 = vst [vmem:[#allocation2 + $0x608] sm:$0xff] %v1630
        %1638 = vst [vmem:[#allocation2 + $0x610] sm:$0xff] %v1628
        %1639 = vst [vmem:[#allocation2 + $0x618] sm:$0xff] %v1634
        %1640 = vst [vmem:[#allocation2 + $0x620] sm:$0xff] %v1633
        %1641 = vst [vmem:[#allocation2 + $0x628] sm:$0xff] %v1631
        %1642 = vst [vmem:[#allocation2 + $0x630] sm:$0xff] %v1629
        %1643 = vst [vmem:[#allocation2 + $0x638] sm:$0xff] %v1635
        %v1644 = vld [vmem:[%s5] sm:$0xff]
        %v1645 = vld [vmem:[%s5 + $0x8] sm:$0xff]
        %v1646 = vld [vmem:[%s5 + $0x10] sm:$0xff]
        %v1647 = vld [vmem:[%s5 + $0x18] sm:$0xff]
        %v1648 = vld [vmem:[%s5 + $0x20] sm:$0xff]
        %v1649 = vld [vmem:[%s5 + $0x28] sm:$0xff]
        %v1650 = vld [vmem:[%s5 + $0x30] sm:$0xff]
        %v1651 = vld [vmem:[%s5 + $0x38] sm:$0xff]
        %v1652 = vld [vmem:[%s5 + $0x40] sm:$0xff]
        %v1653 = vld [vmem:[%s5 + $0x48] sm:$0xff]
        %v1654 = vld [vmem:[%s5 + $0x50] sm:$0xff]
        %v1655 = vld [vmem:[%s5 + $0x58] sm:$0xff]
        %v1656 = vld [vmem:[%s5 + $0x60] sm:$0xff]
        %v1657 = vld [vmem:[%s5 + $0x68] sm:$0xff]
        %v1658 = vld [vmem:[%s5 + $0x70] sm:$0xff]
        %v1659 = vld [vmem:[%s5 + $0x78] sm:$0xff]
        %v1660 = vld [vmem:[#allocation2] sm:$0xff]
        %v1661 = vld [vmem:[#allocation2 + $0x8] sm:$0xff]
        %v1662 = vld [vmem:[#allocation2 + $0x10] sm:$0xff]
        %v1663 = vld [vmem:[#allocation2 + $0x18] sm:$0xff]
        %v1664 = vld [vmem:[#allocation2 + $0x20] sm:$0xff]
        %v1665 = vld [vmem:[#allocation2 + $0x28] sm:$0xff]
        %v1666 = vld [vmem:[#allocation2 + $0x30] sm:$0xff]
        %v1667 = vld [vmem:[#allocation2 + $0x38] sm:$0xff]
        %v1668 = vld [vmem:[#allocation2 + $0x40] sm:$0xff]
        %v1669 = vld [vmem:[#allocation2 + $0x48] sm:$0xff]
        %v1670 = vld [vmem:[#allocation2 + $0x50] sm:$0xff]
        %v1671 = vld [vmem:[#allocation2 + $0x58] sm:$0xff]
        %v1672 = vld [vmem:[#allocation2 + $0x60] sm:$0xff]
        %v1673 = vld [vmem:[#allocation2 + $0x68] sm:$0xff]
        %v1674 = vld [vmem:[#allocation2 + $0x70] sm:$0xff]
        %v1675 = vld [vmem:[#allocation2 + $0x78] sm:$0xff]
        %v1676 = vld [vmem:[#allocation2 + $0x80] sm:$0xff]
        %v1677 = vld [vmem:[#allocation2 + $0x88] sm:$0xff]
        %v1678 = vld [vmem:[#allocation2 + $0x90] sm:$0xff]
        %v1679 = vld [vmem:[#allocation2 + $0x98] sm:$0xff]
        %v1680 = vld [vmem:[#allocation2 + $0xa0] sm:$0xff]
        %v1681 = vld [vmem:[#allocation2 + $0xa8] sm:$0xff]
        %v1682 = vld [vmem:[#allocation2 + $0xb0] sm:$0xff]
        %v1683 = vld [vmem:[#allocation2 + $0xb8] sm:$0xff]
        %v1684 = vld [vmem:[#allocation2 + $0xc0] sm:$0xff]
        %v1685 = vld [vmem:[#allocation2 + $0xc8] sm:$0xff]
        %v1686 = vld [vmem:[#allocation2 + $0xd0] sm:$0xff]
        %v1687 = vld [vmem:[#allocation2 + $0xd8] sm:$0xff]
        %v1688 = vld [vmem:[#allocation2 + $0xe0] sm:$0xff]
        %v1689 = vld [vmem:[#allocation2 + $0xe8] sm:$0xff]
        %v1690 = vld [vmem:[#allocation2 + $0xf0] sm:$0xff]
        %v1691 = vld [vmem:[#allocation2 + $0xf8] sm:$0xff]
        %v1692 = vld [vmem:[#allocation2 + $0x100] sm:$0xff]
        %v1693 = vld [vmem:[#allocation2 + $0x108] sm:$0xff]
        %v1694 = vld [vmem:[#allocation2 + $0x110] sm:$0xff]
        %v1695 = vld [vmem:[#allocation2 + $0x118] sm:$0xff]
        %v1696 = vld [vmem:[#allocation2 + $0x120] sm:$0xff]
        %v1697 = vld [vmem:[#allocation2 + $0x128] sm:$0xff]
        %v1698 = vld [vmem:[#allocation2 + $0x130] sm:$0xff]
        %v1699 = vld [vmem:[#allocation2 + $0x138] sm:$0xff]
        %v1700 = vld [vmem:[#allocation2 + $0x140] sm:$0xff]
        %v1701 = vld [vmem:[#allocation2 + $0x148] sm:$0xff]
        %v1702 = vld [vmem:[#allocation2 + $0x150] sm:$0xff]
        %v1703 = vld [vmem:[#allocation2 + $0x158] sm:$0xff]
        %v1704 = vld [vmem:[#allocation2 + $0x160] sm:$0xff]
        %v1705 = vld [vmem:[#allocation2 + $0x168] sm:$0xff]
        %v1706 = vld [vmem:[#allocation2 + $0x170] sm:$0xff]
        %v1707 = vld [vmem:[#allocation2 + $0x178] sm:$0xff]
        %v1708 = vld [vmem:[#allocation2 + $0x180] sm:$0xff]
        %v1709 = vld [vmem:[#allocation2 + $0x188] sm:$0xff]
        %v1710 = vld [vmem:[#allocation2 + $0x190] sm:$0xff]
        %v1711 = vld [vmem:[#allocation2 + $0x198] sm:$0xff]
        %v1712 = vld [vmem:[#allocation2 + $0x1a0] sm:$0xff]
        %v1713 = vld [vmem:[#allocation2 + $0x1a8] sm:$0xff]
        %v1714 = vld [vmem:[#allocation2 + $0x1b0] sm:$0xff]
        %v1715 = vld [vmem:[#allocation2 + $0x1b8] sm:$0xff]
        %v1716 = vld [vmem:[#allocation2 + $0x1c0] sm:$0xff]
        %v1717 = vld [vmem:[#allocation2 + $0x1c8] sm:$0xff]
        %v1718 = vld [vmem:[#allocation2 + $0x1d0] sm:$0xff]
        %v1719 = vld [vmem:[#allocation2 + $0x1d8] sm:$0xff]
        %v1720 = vld [vmem:[#allocation2 + $0x1e0] sm:$0xff]
        %v1721 = vld [vmem:[#allocation2 + $0x1e8] sm:$0xff]
        %v1722 = vld [vmem:[#allocation2 + $0x1f0] sm:$0xff]
        %v1723 = vld [vmem:[#allocation2 + $0x1f8] sm:$0xff]
        %v1724 = vld [vmem:[#allocation2 + $0x200] sm:$0xff]
        %v1725 = vld [vmem:[#allocation2 + $0x208] sm:$0xff]
        %v1726 = vld [vmem:[#allocation2 + $0x210] sm:$0xff]
        %v1727 = vld [vmem:[#allocation2 + $0x218] sm:$0xff]
        %v1728 = vld [vmem:[#allocation2 + $0x220] sm:$0xff]
        %v1729 = vld [vmem:[#allocation2 + $0x228] sm:$0xff]
        %v1730 = vld [vmem:[#allocation2 + $0x230] sm:$0xff]
        %v1731 = vld [vmem:[#allocation2 + $0x238] sm:$0xff]
        %v1732 = vld [vmem:[#allocation2 + $0x240] sm:$0xff]
        %v1733 = vld [vmem:[#allocation2 + $0x248] sm:$0xff]
        %v1734 = vld [vmem:[#allocation2 + $0x250] sm:$0xff]
        %v1735 = vld [vmem:[#allocation2 + $0x258] sm:$0xff]
        %v1736 = vld [vmem:[#allocation2 + $0x260] sm:$0xff]
        %v1737 = vld [vmem:[#allocation2 + $0x268] sm:$0xff]
        %v1738 = vld [vmem:[#allocation2 + $0x270] sm:$0xff]
        %v1739 = vld [vmem:[#allocation2 + $0x278] sm:$0xff]
        %v1740 = vld [vmem:[#allocation2 + $0x280] sm:$0xff]
        %v1741 = vld [vmem:[#allocation2 + $0x288] sm:$0xff]
        %v1742 = vld [vmem:[#allocation2 + $0x290] sm:$0xff]
        %v1743 = vld [vmem:[#allocation2 + $0x298] sm:$0xff]
        %v1744 = vld [vmem:[#allocation2 + $0x2a0] sm:$0xff]
        %v1745 = vld [vmem:[#allocation2 + $0x2a8] sm:$0xff]
        %v1746 = vld [vmem:[#allocation2 + $0x2b0] sm:$0xff]
        %v1747 = vld [vmem:[#allocation2 + $0x2b8] sm:$0xff]
        %v1748 = vld [vmem:[#allocation2 + $0x2c0] sm:$0xff]
        %v1749 = vld [vmem:[#allocation2 + $0x2c8] sm:$0xff]
        %v1750 = vld [vmem:[#allocation2 + $0x2d0] sm:$0xff]
        %v1751 = vld [vmem:[#allocation2 + $0x2d8] sm:$0xff]
        %v1752 = vld [vmem:[#allocation2 + $0x2e0] sm:$0xff]
        %v1753 = vld [vmem:[#allocation2 + $0x2e8] sm:$0xff]
        %v1754 = vld [vmem:[#allocation2 + $0x2f0] sm:$0xff]
        %v1755 = vld [vmem:[#allocation2 + $0x2f8] sm:$0xff]
        %v1756 = vld [vmem:[#allocation2 + $0x300] sm:$0xff]
        %v1757 = vld [vmem:[#allocation2 + $0x308] sm:$0xff]
        %v1758 = vld [vmem:[#allocation2 + $0x310] sm:$0xff]
        %v1759 = vld [vmem:[#allocation2 + $0x318] sm:$0xff]
        %v1760 = vld [vmem:[#allocation2 + $0x320] sm:$0xff]
        %v1761 = vld [vmem:[#allocation2 + $0x328] sm:$0xff]
        %v1762 = vld [vmem:[#allocation2 + $0x330] sm:$0xff]
        %v1763 = vld [vmem:[#allocation2 + $0x338] sm:$0xff]
        %v1764 = vld [vmem:[#allocation2 + $0x340] sm:$0xff]
        %v1765 = vld [vmem:[#allocation2 + $0x348] sm:$0xff]
        %v1766 = vld [vmem:[#allocation2 + $0x350] sm:$0xff]
        %v1767 = vld [vmem:[#allocation2 + $0x358] sm:$0xff]
        %v1768 = vld [vmem:[#allocation2 + $0x360] sm:$0xff]
        %v1769 = vld [vmem:[#allocation2 + $0x368] sm:$0xff]
        %v1770 = vld [vmem:[#allocation2 + $0x370] sm:$0xff]
        %v1771 = vld [vmem:[#allocation2 + $0x378] sm:$0xff]
        %v1772 = vld [vmem:[#allocation2 + $0x380] sm:$0xff]
        %v1773 = vld [vmem:[#allocation2 + $0x388] sm:$0xff]
        %v1774 = vld [vmem:[#allocation2 + $0x390] sm:$0xff]
        %v1775 = vld [vmem:[#allocation2 + $0x398] sm:$0xff]
        %v1776 = vld [vmem:[#allocation2 + $0x3a0] sm:$0xff]
        %v1777 = vld [vmem:[#allocation2 + $0x3a8] sm:$0xff]
        %v1778 = vld [vmem:[#allocation2 + $0x3b0] sm:$0xff]
        %v1779 = vld [vmem:[#allocation2 + $0x3b8] sm:$0xff]
        %v1780 = vld [vmem:[#allocation2 + $0x3c0] sm:$0xff]
        %v1781 = vld [vmem:[#allocation2 + $0x3c8] sm:$0xff]
        %v1782 = vld [vmem:[#allocation2 + $0x3d0] sm:$0xff]
        %v1783 = vld [vmem:[#allocation2 + $0x3d8] sm:$0xff]
        %v1784 = vld [vmem:[#allocation2 + $0x3e0] sm:$0xff]
        %v1785 = vld [vmem:[#allocation2 + $0x3e8] sm:$0xff]
        %v1786 = vld [vmem:[#allocation2 + $0x3f0] sm:$0xff]
        %v1787 = vld [vmem:[#allocation2 + $0x3f8] sm:$0xff]
        %v1788 = vld [vmem:[#allocation2 + $0x400] sm:$0xff]
        %v1789 = vld [vmem:[#allocation2 + $0x408] sm:$0xff]
        %v1790 = vld [vmem:[#allocation2 + $0x410] sm:$0xff]
        %v1791 = vld [vmem:[#allocation2 + $0x418] sm:$0xff]
        %v1792 = vld [vmem:[#allocation2 + $0x420] sm:$0xff]
        %v1793 = vld [vmem:[#allocation2 + $0x428] sm:$0xff]
        %v1794 = vld [vmem:[#allocation2 + $0x430] sm:$0xff]
        %v1795 = vld [vmem:[#allocation2 + $0x438] sm:$0xff]
        %v1796 = vld [vmem:[#allocation2 + $0x440] sm:$0xff]
        %v1797 = vld [vmem:[#allocation2 + $0x448] sm:$0xff]
        %v1798 = vld [vmem:[#allocation2 + $0x450] sm:$0xff]
        %v1799 = vld [vmem:[#allocation2 + $0x458] sm:$0xff]
        %v1800 = vld [vmem:[#allocation2 + $0x460] sm:$0xff]
        %v1801 = vld [vmem:[#allocation2 + $0x468] sm:$0xff]
        %v1802 = vld [vmem:[#allocation2 + $0x470] sm:$0xff]
        %v1803 = vld [vmem:[#allocation2 + $0x478] sm:$0xff]
        %v1804 = vld [vmem:[#allocation2 + $0x480] sm:$0xff]
        %v1805 = vld [vmem:[#allocation2 + $0x488] sm:$0xff]
        %v1806 = vld [vmem:[#allocation2 + $0x490] sm:$0xff]
        %v1807 = vld [vmem:[#allocation2 + $0x498] sm:$0xff]
        %v1808 = vld [vmem:[#allocation2 + $0x4a0] sm:$0xff]
        %v1809 = vld [vmem:[#allocation2 + $0x4a8] sm:$0xff]
        %v1810 = vld [vmem:[#allocation2 + $0x4b0] sm:$0xff]
        %v1811 = vld [vmem:[#allocation2 + $0x4b8] sm:$0xff]
        %v1812 = vld [vmem:[#allocation2 + $0x4c0] sm:$0xff]
        %v1813 = vld [vmem:[#allocation2 + $0x4c8] sm:$0xff]
        %v1814 = vld [vmem:[#allocation2 + $0x4d0] sm:$0xff]
        %v1815 = vld [vmem:[#allocation2 + $0x4d8] sm:$0xff]
        %v1816 = vld [vmem:[#allocation2 + $0x4e0] sm:$0xff]
        %v1817 = vld [vmem:[#allocation2 + $0x4e8] sm:$0xff]
        %v1818 = vld [vmem:[#allocation2 + $0x4f0] sm:$0xff]
        %v1819 = vld [vmem:[#allocation2 + $0x4f8] sm:$0xff]
        %v1820 = vld [vmem:[#allocation2 + $0x500] sm:$0xff]
        %v1821 = vld [vmem:[#allocation2 + $0x508] sm:$0xff]
        %v1822 = vld [vmem:[#allocation2 + $0x510] sm:$0xff]
        %v1823 = vld [vmem:[#allocation2 + $0x518] sm:$0xff]
        %v1824 = vld [vmem:[#allocation2 + $0x520] sm:$0xff]
        %v1825 = vld [vmem:[#allocation2 + $0x528] sm:$0xff]
        %v1826 = vld [vmem:[#allocation2 + $0x530] sm:$0xff]
        %v1827 = vld [vmem:[#allocation2 + $0x538] sm:$0xff]
        %v1828 = vld [vmem:[#allocation2 + $0x540] sm:$0xff]
        %v1829 = vld [vmem:[#allocation2 + $0x548] sm:$0xff]
        %v1830 = vld [vmem:[#allocation2 + $0x550] sm:$0xff]
        %v1831 = vld [vmem:[#allocation2 + $0x558] sm:$0xff]
        %v1832 = vld [vmem:[#allocation2 + $0x560] sm:$0xff]
        %v1833 = vld [vmem:[#allocation2 + $0x568] sm:$0xff]
        %v1834 = vld [vmem:[#allocation2 + $0x570] sm:$0xff]
        %v1835 = vld [vmem:[#allocation2 + $0x578] sm:$0xff]
        %v1836 = vld [vmem:[#allocation2 + $0x580] sm:$0xff]
        %v1837 = vld [vmem:[#allocation2 + $0x588] sm:$0xff]
        %v1838 = vld [vmem:[#allocation2 + $0x590] sm:$0xff]
        %v1839 = vld [vmem:[#allocation2 + $0x598] sm:$0xff]
        %v1840 = vld [vmem:[#allocation2 + $0x5a0] sm:$0xff]
        %v1841 = vld [vmem:[#allocation2 + $0x5a8] sm:$0xff]
        %v1842 = vld [vmem:[#allocation2 + $0x5b0] sm:$0xff]
        %v1843 = vld [vmem:[#allocation2 + $0x5b8] sm:$0xff]
        %v1844 = vld [vmem:[#allocation2 + $0x5c0] sm:$0xff]
        %v1845 = vld [vmem:[#allocation2 + $0x5c8] sm:$0xff]
        %v1846 = vld [vmem:[#allocation2 + $0x5d0] sm:$0xff]
        %v1847 = vld [vmem:[#allocation2 + $0x5d8] sm:$0xff]
        %v1848 = vld [vmem:[#allocation2 + $0x5e0] sm:$0xff]
        %v1849 = vld [vmem:[#allocation2 + $0x5e8] sm:$0xff]
        %v1850 = vld [vmem:[#allocation2 + $0x5f0] sm:$0xff]
        %v1851 = vld [vmem:[#allocation2 + $0x5f8] sm:$0xff]
        %v1852 = vld [vmem:[#allocation2 + $0x600] sm:$0xff]
        %v1853 = vld [vmem:[#allocation2 + $0x608] sm:$0xff]
        %v1854 = vld [vmem:[#allocation2 + $0x610] sm:$0xff]
        %v1855 = vld [vmem:[#allocation2 + $0x618] sm:$0xff]
        %v1856 = vld [vmem:[#allocation2 + $0x620] sm:$0xff]
        %v1857 = vld [vmem:[#allocation2 + $0x628] sm:$0xff]
        %v1858 = vld [vmem:[#allocation2 + $0x630] sm:$0xff]
        %v1859 = vld [vmem:[#allocation2 + $0x638] sm:$0xff]
        %v1860 = vld [vmem:[%s6] sm:$0xff]
        %v1861 = vld [vmem:[%s6 + $0x8] sm:$0xff]
        %v1862 = vld [vmem:[%s6 + $0x10] sm:$0xff]
        %v1863 = vld [vmem:[%s6 + $0x18] sm:$0xff]
        %1865 = vset.pattern.permute.xlu0 0
        %1866 = vperm.xlu0 %1865, %v1860
        %v1867 = vpop.permute.xlu0 %1866
        %1870 = vset.pattern.permute.xlu0 0
        %1871 = vperm.xlu0 %1870, %v1861
        %v1872 = vpop.permute.xlu0 %1871
        %1875 = vset.pattern.permute.xlu0 0
        %1876 = vperm.xlu0 %1875, %v1862
        %v1877 = vpop.permute.xlu0 %1876
        %1880 = vset.pattern.permute.xlu0 0
        %1881 = vperm.xlu0 %1880, %v1863
        %v1882 = vpop.permute.xlu0 %1881
        %vm1884 = vcmask 130048
        %v1886 = vsel %vm1884, %v1647, 0
        %v1889 = vsel %vm1884, %v1651, 0
        %v1892 = vsel %vm1884, %v1655, 0
        %v1895 = vsel %vm1884, %v1659, 0
        %1897 = vmatprep.subr.mxu0 %v1721
        %1898 = vmatpush1.msra.mxu0 %v1720
        %1899 = vmatprep.subr.mxu0 %v1717
        %1900 = vmatpush1.msra.mxu0 %v1716
        %1901 = vmatprep.subr.mxu0 %v1713
        %1902 = vmatpush1.msra.mxu0 %v1712
        %1903 = vmatprep.subr.mxu0 %v1709
        %1904 = vmatpush1.msra.mxu0 %v1708
        %1905 = vmatprep.subr.mxu0 %v1705
        %1906 = vmatpush1.msra.mxu0 %v1704
        %1907 = vmatprep.subr.mxu0 %v1701
        %1908 = vmatpush1.msra.mxu0 %v1700
        %1909 = vmatprep.subr.mxu0 %v1697
        %1910 = vmatpush1.msra.mxu0 %v1696
        %1911 = vmatprep.subr.mxu0 %v1693
        %1912 = vmatpush1.msra.mxu0 %v1692
        %1913 = vmatprep.subr.mxu0 %v1689
        %1914 = vmatpush1.msra.mxu0 %v1688
        %1915 = vmatprep.subr.mxu0 %v1685
        %1916 = vmatpush1.msra.mxu0 %v1684
        %1917 = vmatprep.subr.mxu0 %v1681
        %1918 = vmatpush1.msra.mxu0 %v1680
        %1919 = vmatprep.subr.mxu0 %v1677
        %1920 = vmatpush1.msra.mxu0 %v1676
        %1921 = vmatprep.subr.mxu0 %v1673
        %1922 = vmatpush1.msra.mxu0 %v1672
        %1923 = vmatprep.subr.mxu0 %v1669
        %1924 = vmatpush1.msra.mxu0 %v1668
        %1925 = vmatprep.subr.mxu0 %v1665
        %1926 = vmatpush1.msra.mxu0 %v1664
        %1927 = vmatprep.subr.mxu0 %v1661
        %1928 = vmatpush1.msra.mxu0 %v1660
        %1929 = vmatprep.subr.mxu0 %v1785
        %1930 = vmatpush2.msra.mxu0 %v1784
        %1931 = vmatprep.subr.mxu0 %v1781
        %1932 = vmatpush2.msra.mxu0 %v1780
        %1933 = vmatprep.subr.mxu0 %v1777
        %1934 = vmatpush2.msra.mxu0 %v1776
        %1935 = vmatprep.subr.mxu0 %v1773
        %1936 = vmatpush2.msra.mxu0 %v1772
        %1937 = vmatprep.subr.mxu0 %v1769
        %1938 = vmatpush2.msra.mxu0 %v1768
        %1939 = vmatprep.subr.mxu0 %v1765
        %1940 = vmatpush2.msra.mxu0 %v1764
        %1941 = vmatprep.subr.mxu0 %v1761
        %1942 = vmatpush2.msra.mxu0 %v1760
        %1943 = vmatprep.subr.mxu0 %v1757
        %1944 = vmatpush2.msra.mxu0 %v1756
        %1945 = vmatprep.subr.mxu0 %v1753
        %1946 = vmatpush2.msra.mxu0 %v1752
        %1947 = vmatprep.subr.mxu0 %v1749
        %1948 = vmatpush2.msra.mxu0 %v1748
        %1949 = vmatprep.subr.mxu0 %v1745
        %1950 = vmatpush2.msra.mxu0 %v1744
        %1951 = vmatprep.subr.mxu0 %v1741
        %1952 = vmatpush2.msra.mxu0 %v1740
        %1953 = vmatprep.subr.mxu0 %v1737
        %1954 = vmatpush2.msra.mxu0 %v1736
        %1955 = vmatprep.subr.mxu0 %v1733
        %1956 = vmatpush2.msra.mxu0 %v1732
        %1957 = vmatprep.subr.mxu0 %v1729
        %1958 = vmatpush2.msra.mxu0 %v1728
        %1959 = vmatprep.subr.mxu0 %v1725
        %1960 = vmatpush2.msra.mxu0 %v1724
        %1961 = vmatprep.mubr.f32.mxu0 %v1645
        %1962 = vmatmul.mubr.f32.gmra.mxu0 %v1644
        %v1963 = vpop.f32.mrf.mxu0
        %v1964 = vadd.f32 %v1867, %v1963
        %v1965 = vpop.f32.mrf.mxu0
        %v1966 = vadd.f32 %v1867, %v1965
        %1967 = vmatprep.mubr.f32.mxu0 %v1649
        %1968 = vmatmul.mubr.f32.gmra.mxu0 %v1648
        %v1969 = vpop.f32.mrf.mxu0
        %v1970 = vadd.f32 %v1872, %v1969
        %v1971 = vpop.f32.mrf.mxu0
        %v1972 = vadd.f32 %v1872, %v1971
        %1973 = vmatprep.mubr.f32.mxu0 %v1653
        %1974 = vmatmul.mubr.f32.gmra.mxu0 %v1652
        %v1975 = vpop.f32.mrf.mxu0
        %v1976 = vadd.f32 %v1877, %v1975
        %v1977 = vpop.f32.mrf.mxu0
        %v1978 = vadd.f32 %v1877, %v1977
        %1979 = vmatprep.mubr.f32.mxu0 %v1657
        %1980 = vmatmul.mubr.f32.gmra.mxu0 %v1656
        %v1981 = vpop.f32.mrf.mxu0
        %v1982 = vadd.f32 %v1882, %v1981
        %v1983 = vpop.f32.mrf.mxu0
        %v1984 = vadd.f32 %v1882, %v1983
        %1985 = vdwg.mxu0
        %1986 = vmatprep.subr.mxu0 %v1849
        %1987 = vmatpush1.msra.mxu0 %v1848
        %1988 = vmatprep.subr.mxu0 %v1845
        %1989 = vmatpush1.msra.mxu0 %v1844
        %1990 = vmatprep.subr.mxu0 %v1841
        %1991 = vmatpush1.msra.mxu0 %v1840
        %1992 = vmatprep.subr.mxu0 %v1837
        %1993 = vmatpush1.msra.mxu0 %v1836
        %1994 = vmatprep.subr.mxu0 %v1833
        %1995 = vmatpush1.msra.mxu0 %v1832
        %1996 = vmatprep.subr.mxu0 %v1829
        %1997 = vmatpush1.msra.mxu0 %v1828
        %1998 = vmatprep.subr.mxu0 %v1825
        %1999 = vmatpush1.msra.mxu0 %v1824
        %2000 = vmatprep.subr.mxu0 %v1821
        %2001 = vmatpush1.msra.mxu0 %v1820
        %2002 = vmatprep.subr.mxu0 %v1817
        %2003 = vmatpush1.msra.mxu0 %v1816
        %2004 = vmatprep.subr.mxu0 %v1813
        %2005 = vmatpush1.msra.mxu0 %v1812
        %2006 = vmatprep.subr.mxu0 %v1809
        %2007 = vmatpush1.msra.mxu0 %v1808
        %2008 = vmatprep.subr.mxu0 %v1805
        %2009 = vmatpush1.msra.mxu0 %v1804
        %2010 = vmatprep.subr.mxu0 %v1801
        %2011 = vmatpush1.msra.mxu0 %v1800
        %2012 = vmatprep.subr.mxu0 %v1797
        %2013 = vmatpush1.msra.mxu0 %v1796
        %2014 = vmatprep.subr.mxu0 %v1793
        %2015 = vmatpush1.msra.mxu0 %v1792
        %2016 = vmatprep.subr.mxu0 %v1789
        %2017 = vmatpush1.msra.mxu0 %v1788
        %2018 = vmatprep.subr.mxu0 0.0
        %2019 = vmatpush2.msra.mxu0 0.0
        %2020 = vmatprep.subr.mxu0 0.0
        %2021 = vmatpush2.msra.mxu0 0.0
        %2022 = vmatprep.subr.mxu0 0.0
        %2023 = vmatpush2.msra.mxu0 0.0
        %2024 = vmatprep.subr.mxu0 0.0
        %2025 = vmatpush2.msra.mxu0 0.0
        %2026 = vmatprep.subr.mxu0 0.0
        %2027 = vmatpush2.msra.mxu0 0.0
        %2028 = vmatprep.subr.mxu0 0.0
        %2029 = vmatpush2.msra.mxu0 0.0
        %2030 = vmatprep.subr.mxu0 0.0
        %2031 = vmatpush2.msra.mxu0 0.0
        %2032 = vmatprep.subr.mxu0 0.0
        %2033 = vmatpush2.msra.mxu0 0.0
        %2034 = vmatprep.subr.mxu0 0.0
        %2035 = vmatpush2.msra.mxu0 0.0
        %2036 = vmatprep.subr.mxu0 0.0
        %2037 = vmatpush2.msra.mxu0 0.0
        %2038 = vmatprep.subr.mxu0 0.0
        %2039 = vmatpush2.msra.mxu0 0.0
        %2040 = vmatprep.subr.mxu0 0.0
        %2041 = vmatpush2.msra.mxu0 0.0
        %2042 = vmatprep.subr.mxu0 0.0
        %2043 = vmatpush2.msra.mxu0 0.0
        %2044 = vmatprep.subr.mxu0 0.0
        %2045 = vmatpush2.msra.mxu0 0.0
        %2046 = vmatprep.subr.mxu0 %v1857
        %2047 = vmatpush2.msra.mxu0 %v1856
        %2048 = vmatprep.subr.mxu0 %v1853
        %2049 = vmatpush2.msra.mxu0 %v1852
        %2050 = vmatprep.mubr.f32.mxu0 %v1886
        %2051 = vmatmul.mubr.f32.gmra.mxu0 %v1646
        %v2052 = vpop.f32.mrf.mxu0
        %v2053 = vadd.f32 %v1964, %v2052
        %v2054 = vpop.f32.mrf.mxu0
        %v2055 = vadd.f32 %v1966, %v2054
        %2056 = vmatprep.mubr.f32.mxu0 %v1889
        %2057 = vmatmul.mubr.f32.gmra.mxu0 %v1650
        %v2058 = vpop.f32.mrf.mxu0
        %v2059 = vadd.f32 %v1970, %v2058
        %v2060 = vpop.f32.mrf.mxu0
        %v2061 = vadd.f32 %v1972, %v2060
        %2062 = vmatprep.mubr.f32.mxu0 %v1892
        %2063 = vmatmul.mubr.f32.gmra.mxu0 %v1654
        %v2064 = vpop.f32.mrf.mxu0
        %v2065 = vadd.f32 %v1976, %v2064
        %v2066 = vpop.f32.mrf.mxu0
        %v2067 = vadd.f32 %v1978, %v2066
        %2068 = vmatprep.mubr.f32.mxu0 %v1895
        %2069 = vmatmul.mubr.f32.gmra.mxu0 %v1658
        %v2070 = vpop.f32.mrf.mxu0
        %v2071 = vadd.f32 %v1982, %v2070
        %v2072 = vpop.f32.mrf.mxu0
        %v2073 = vadd.f32 %v1984, %v2072
        %2074 = vdwg.mxu0
        %2075 = vmatprep.subr.mxu0 %v1723
        %2076 = vmatpush1.msra.mxu0 %v1722
        %2077 = vmatprep.subr.mxu0 %v1719
        %2078 = vmatpush1.msra.mxu0 %v1718
        %2079 = vmatprep.subr.mxu0 %v1715
        %2080 = vmatpush1.msra.mxu0 %v1714
        %2081 = vmatprep.subr.mxu0 %v1711
        %2082 = vmatpush1.msra.mxu0 %v1710
        %2083 = vmatprep.subr.mxu0 %v1707
        %2084 = vmatpush1.msra.mxu0 %v1706
        %2085 = vmatprep.subr.mxu0 %v1703
        %2086 = vmatpush1.msra.mxu0 %v1702
        %2087 = vmatprep.subr.mxu0 %v1699
        %2088 = vmatpush1.msra.mxu0 %v1698
        %2089 = vmatprep.subr.mxu0 %v1695
        %2090 = vmatpush1.msra.mxu0 %v1694
        %2091 = vmatprep.subr.mxu0 %v1691
        %2092 = vmatpush1.msra.mxu0 %v1690
        %2093 = vmatprep.subr.mxu0 %v1687
        %2094 = vmatpush1.msra.mxu0 %v1686
        %2095 = vmatprep.subr.mxu0 %v1683
        %2096 = vmatpush1.msra.mxu0 %v1682
        %2097 = vmatprep.subr.mxu0 %v1679
        %2098 = vmatpush1.msra.mxu0 %v1678
        %2099 = vmatprep.subr.mxu0 %v1675
        %2100 = vmatpush1.msra.mxu0 %v1674
        %2101 = vmatprep.subr.mxu0 %v1671
        %2102 = vmatpush1.msra.mxu0 %v1670
        %2103 = vmatprep.subr.mxu0 %v1667
        %2104 = vmatpush1.msra.mxu0 %v1666
        %2105 = vmatprep.subr.mxu0 %v1663
        %2106 = vmatpush1.msra.mxu0 %v1662
        %2107 = vmatprep.subr.mxu0 %v1787
        %2108 = vmatpush2.msra.mxu0 %v1786
        %2109 = vmatprep.subr.mxu0 %v1783
        %2110 = vmatpush2.msra.mxu0 %v1782
        %2111 = vmatprep.subr.mxu0 %v1779
        %2112 = vmatpush2.msra.mxu0 %v1778
        %2113 = vmatprep.subr.mxu0 %v1775
        %2114 = vmatpush2.msra.mxu0 %v1774
        %2115 = vmatprep.subr.mxu0 %v1771
        %2116 = vmatpush2.msra.mxu0 %v1770
        %2117 = vmatprep.subr.mxu0 %v1767
        %2118 = vmatpush2.msra.mxu0 %v1766
        %2119 = vmatprep.subr.mxu0 %v1763
        %2120 = vmatpush2.msra.mxu0 %v1762
        %2121 = vmatprep.subr.mxu0 %v1759
        %2122 = vmatpush2.msra.mxu0 %v1758
        %2123 = vmatprep.subr.mxu0 %v1755
        %2124 = vmatpush2.msra.mxu0 %v1754
        %2125 = vmatprep.subr.mxu0 %v1751
        %2126 = vmatpush2.msra.mxu0 %v1750
        %2127 = vmatprep.subr.mxu0 %v1747
        %2128 = vmatpush2.msra.mxu0 %v1746
        %2129 = vmatprep.subr.mxu0 %v1743
        %2130 = vmatpush2.msra.mxu0 %v1742
        %2131 = vmatprep.subr.mxu0 %v1739
        %2132 = vmatpush2.msra.mxu0 %v1738
        %2133 = vmatprep.subr.mxu0 %v1735
        %2134 = vmatpush2.msra.mxu0 %v1734
        %2135 = vmatprep.subr.mxu0 %v1731
        %2136 = vmatpush2.msra.mxu0 %v1730
        %2137 = vmatprep.subr.mxu0 %v1727
        %2138 = vmatpush2.msra.mxu0 %v1726
        %2139 = vmatprep.mubr.f32.mxu0 %v1645
        %2140 = vmatmul.mubr.f32.gmra.mxu0 %v1644
        %v2141 = vpop.f32.mrf.mxu0
        %v2142 = vadd.f32 %v1867, %v2141
        %v2143 = vpop.f32.mrf.mxu0
        %v2144 = vadd.f32 %v1867, %v2143
        %2145 = vmatprep.mubr.f32.mxu0 %v1649
        %2146 = vmatmul.mubr.f32.gmra.mxu0 %v1648
        %v2147 = vpop.f32.mrf.mxu0
        %v2148 = vadd.f32 %v1872, %v2147
        %v2149 = vpop.f32.mrf.mxu0
        %v2150 = vadd.f32 %v1872, %v2149
        %2151 = vmatprep.mubr.f32.mxu0 %v1653
        %2152 = vmatmul.mubr.f32.gmra.mxu0 %v1652
        %v2153 = vpop.f32.mrf.mxu0
        %v2154 = vadd.f32 %v1877, %v2153
        %v2155 = vpop.f32.mrf.mxu0
        %v2156 = vadd.f32 %v1877, %v2155
        %2157 = vmatprep.mubr.f32.mxu0 %v1657
        %2158 = vmatmul.mubr.f32.gmra.mxu0 %v1656
        %v2159 = vpop.f32.mrf.mxu0
        %v2160 = vadd.f32 %v1882, %v2159
        %v2161 = vpop.f32.mrf.mxu0
        %v2162 = vadd.f32 %v1882, %v2161
        %2163 = vdwg.mxu0
        %2164 = vmatprep.subr.mxu0 %v1851
        %2165 = vmatpush1.msra.mxu0 %v1850
        %2166 = vmatprep.subr.mxu0 %v1847
        %2167 = vmatpush1.msra.mxu0 %v1846
        %2168 = vmatprep.subr.mxu0 %v1843
        %2169 = vmatpush1.msra.mxu0 %v1842
        %2170 = vmatprep.subr.mxu0 %v1839
        %2171 = vmatpush1.msra.mxu0 %v1838
        %2172 = vmatprep.subr.mxu0 %v1835
        %2173 = vmatpush1.msra.mxu0 %v1834
        %2174 = vmatprep.subr.mxu0 %v1831
        %2175 = vmatpush1.msra.mxu0 %v1830
        %2176 = vmatprep.subr.mxu0 %v1827
        %2177 = vmatpush1.msra.mxu0 %v1826
        %2178 = vmatprep.subr.mxu0 %v1823
        %2179 = vmatpush1.msra.mxu0 %v1822
        %2180 = vmatprep.subr.mxu0 %v1819
        %2181 = vmatpush1.msra.mxu0 %v1818
        %2182 = vmatprep.subr.mxu0 %v1815
        %2183 = vmatpush1.msra.mxu0 %v1814
        %2184 = vmatprep.subr.mxu0 %v1811
        %2185 = vmatpush1.msra.mxu0 %v1810
        %2186 = vmatprep.subr.mxu0 %v1807
        %2187 = vmatpush1.msra.mxu0 %v1806
        %2188 = vmatprep.subr.mxu0 %v1803
        %2189 = vmatpush1.msra.mxu0 %v1802
        %2190 = vmatprep.subr.mxu0 %v1799
        %2191 = vmatpush1.msra.mxu0 %v1798
        %2192 = vmatprep.subr.mxu0 %v1795
        %2193 = vmatpush1.msra.mxu0 %v1794
        %2194 = vmatprep.subr.mxu0 %v1791
        %2195 = vmatpush1.msra.mxu0 %v1790
        %2196 = vmatprep.subr.mxu0 0.0
        %2197 = vmatpush2.msra.mxu0 0.0
        %2198 = vmatprep.subr.mxu0 0.0
        %2199 = vmatpush2.msra.mxu0 0.0
        %2200 = vmatprep.subr.mxu0 0.0
        %2201 = vmatpush2.msra.mxu0 0.0
        %2202 = vmatprep.subr.mxu0 0.0
        %2203 = vmatpush2.msra.mxu0 0.0
        %2204 = vmatprep.subr.mxu0 0.0
        %2205 = vmatpush2.msra.mxu0 0.0
        %2206 = vmatprep.subr.mxu0 0.0
        %2207 = vmatpush2.msra.mxu0 0.0
        %2208 = vmatprep.subr.mxu0 0.0
        %2209 = vmatpush2.msra.mxu0 0.0
        %2210 = vmatprep.subr.mxu0 0.0
        %2211 = vmatpush2.msra.mxu0 0.0
        %2212 = vmatprep.subr.mxu0 0.0
        %2213 = vmatpush2.msra.mxu0 0.0
        %2214 = vmatprep.subr.mxu0 0.0
        %2215 = vmatpush2.msra.mxu0 0.0
        %2216 = vmatprep.subr.mxu0 0.0
        %2217 = vmatpush2.msra.mxu0 0.0
        %2218 = vmatprep.subr.mxu0 0.0
        %2219 = vmatpush2.msra.mxu0 0.0
        %2220 = vmatprep.subr.mxu0 0.0
        %2221 = vmatpush2.msra.mxu0 0.0
        %2222 = vmatprep.subr.mxu0 0.0
        %2223 = vmatpush2.msra.mxu0 0.0
        %2224 = vmatprep.subr.mxu0 %v1859
        %2225 = vmatpush2.msra.mxu0 %v1858
        %2226 = vmatprep.subr.mxu0 %v1855
        %2227 = vmatpush2.msra.mxu0 %v1854
        %2228 = vmatprep.mubr.f32.mxu0 %v1886
        %2229 = vmatmul.mubr.f32.gmra.mxu0 %v1646
        %v2230 = vpop.f32.mrf.mxu0
        %v2231 = vadd.f32 %v2142, %v2230
        %v2232 = vpop.f32.mrf.mxu0
        %v2233 = vadd.f32 %v2144, %v2232
        %2234 = vmatprep.mubr.f32.mxu0 %v1889
        %2235 = vmatmul.mubr.f32.gmra.mxu0 %v1650
        %v2236 = vpop.f32.mrf.mxu0
        %v2237 = vadd.f32 %v2148, %v2236
        %v2238 = vpop.f32.mrf.mxu0
        %v2239 = vadd.f32 %v2150, %v2238
        %2240 = vmatprep.mubr.f32.mxu0 %v1892
        %2241 = vmatmul.mubr.f32.gmra.mxu0 %v1654
        %v2242 = vpop.f32.mrf.mxu0
        %v2243 = vadd.f32 %v2154, %v2242
        %v2244 = vpop.f32.mrf.mxu0
        %v2245 = vadd.f32 %v2156, %v2244
        %2246 = vmatprep.mubr.f32.mxu0 %v1895
        %2247 = vmatmul.mubr.f32.gmra.mxu0 %v1658
        %v2248 = vpop.f32.mrf.mxu0
        %v2249 = vadd.f32 %v2160, %v2248
        %v2250 = vpop.f32.mrf.mxu0
        %v2251 = vadd.f32 %v2162, %v2250
        %2252 = vdwg.mxu0
        %v2253 = vmax.f32 %v2053, 0.0
        %v2254 = vmax.f32 %v2055, 0.0
        %v2255 = vmax.f32 %v2231, 0.0
        %v2256 = vmax.f32 %v2233, 0.0
        %v2257 = vmax.f32 %v2059, 0.0
        %v2258 = vmax.f32 %v2061, 0.0
        %v2259 = vmax.f32 %v2237, 0.0
        %v2260 = vmax.f32 %v2239, 0.0
        %v2261 = vmax.f32 %v2065, 0.0
        %v2262 = vmax.f32 %v2067, 0.0
        %v2263 = vmax.f32 %v2243, 0.0
        %v2264 = vmax.f32 %v2245, 0.0
        %v2265 = vmax.f32 %v2071, 0.0
        %v2266 = vmax.f32 %v2073, 0.0
        %v2267 = vmax.f32 %v2249, 0.0
        %v2268 = vmax.f32 %v2251, 0.0
        %v2269 = vld [vmem:[%s7] sm:$0xff]
        %v2270 = vld [vmem:[%s7 + $0x8] sm:$0xff]
        %v2271 = vld [vmem:[%s7 + $0x10] sm:$0xff]
        %v2272 = vld [vmem:[%s7 + $0x18] sm:$0xff]
        %2274 = vset.pattern.permute.xlu0 0
        %2275 = vperm.xlu0 %2274, %v2269
        %v2276 = vpop.permute.xlu0 %2275
        %2279 = vset.pattern.permute.xlu0 0
        %2280 = vperm.xlu0 %2279, %v2270
        %v2281 = vpop.permute.xlu0 %2280
        %2284 = vset.pattern.permute.xlu0 0
        %2285 = vperm.xlu0 %2284, %v2271
        %v2286 = vpop.permute.xlu0 %2285
        %2289 = vset.pattern.permute.xlu0 0
        %2290 = vperm.xlu0 %2289, %v2272
        %v2291 = vpop.permute.xlu0 %2290
        %v2293 = vmul.f32 %v2253, %v2276
        %v2294 = vmul.f32 %v2254, %v2276
        %v2295 = vmul.f32 %v2255, %v2276
        %v2296 = vmul.f32 %v2256, %v2276
        %v2297 = vmul.f32 %v2257, %v2281
        %v2298 = vmul.f32 %v2258, %v2281
        %v2299 = vmul.f32 %v2259, %v2281
        %v2300 = vmul.f32 %v2260, %v2281
        %v2301 = vmul.f32 %v2261, %v2286
        %v2302 = vmul.f32 %v2262, %v2286
        %v2303 = vmul.f32 %v2263, %v2286
        %v2304 = vmul.f32 %v2264, %v2286
        %v2305 = vmul.f32 %v2265, %v2291
        %v2306 = vmul.f32 %v2266, %v2291
        %v2307 = vmul.f32 %v2267, %v2291
        %v2308 = vmul.f32 %v2268, %v2291
        %v2309 = vld [vmem:[%s8] sm:$0xff]
        %v2310 = vld [vmem:[%s8 + $0x8] sm:$0xff]
        %v2311 = vld [vmem:[%s8 + $0x10] sm:$0xff]
        %v2312 = vld [vmem:[%s8 + $0x18] sm:$0xff]
        %2314 = vset.pattern.permute.xlu0 0
        %2315 = vperm.xlu0 %2314, %v2309
        %v2316 = vpop.permute.xlu0 %2315
        %2319 = vset.pattern.permute.xlu0 0
        %2320 = vperm.xlu0 %2319, %v2310
        %v2321 = vpop.permute.xlu0 %2320
        %2324 = vset.pattern.permute.xlu0 0
        %2325 = vperm.xlu0 %2324, %v2311
        %v2326 = vpop.permute.xlu0 %2325
        %2329 = vset.pattern.permute.xlu0 0
        %2330 = vperm.xlu0 %2329, %v2312
        %v2331 = vpop.permute.xlu0 %2330
        %v2333 = vadd.f32 %v2293, %v2316
        %v2334 = vadd.f32 %v2294, %v2316
        %v2335 = vadd.f32 %v2295, %v2316
        %v2336 = vadd.f32 %v2296, %v2316
        %v2337 = vadd.f32 %v2297, %v2321
        %v2338 = vadd.f32 %v2298, %v2321
        %v2339 = vadd.f32 %v2299, %v2321
        %v2340 = vadd.f32 %v2300, %v2321
        %v2341 = vadd.f32 %v2301, %v2326
        %v2342 = vadd.f32 %v2302, %v2326
        %v2343 = vadd.f32 %v2303, %v2326
        %v2344 = vadd.f32 %v2304, %v2326
        %v2345 = vadd.f32 %v2305, %v2331
        %v2346 = vadd.f32 %v2306, %v2331
        %v2347 = vadd.f32 %v2307, %v2331
        %v2348 = vadd.f32 %v2308, %v2331
        %2349 = vrot.lane.b32.xlu0 %v2333, 127
        %v2350 = vpop.permute.xlu0 %2349
        %2351 = vrot.lane.b32.xlu0 %v2337, 127
        %v2352 = vpop.permute.xlu0 %2351
        %2353 = vrot.lane.b32.xlu0 %v2341, 127
        %v2354 = vpop.permute.xlu0 %2353
        %2355 = vrot.lane.b32.xlu0 %v2345, 127
        %v2356 = vpop.permute.xlu0 %2355
        %2357 = vrot.lane.b32.xlu0 %v2334, 127
        %v2358 = vpop.permute.xlu0 %2357
        %2359 = vrot.lane.b32.xlu0 %v2338, 127
        %v2360 = vpop.permute.xlu0 %2359
        %2361 = vrot.lane.b32.xlu0 %v2342, 127
        %v2362 = vpop.permute.xlu0 %2361
        %2363 = vrot.lane.b32.xlu0 %v2346, 127
        %v2364 = vpop.permute.xlu0 %2363
        %2365 = vrot.lane.b32.xlu0 %v2335, 127
        %v2366 = vpop.permute.xlu0 %2365
        %2367 = vrot.lane.b32.xlu0 %v2339, 127
        %v2368 = vpop.permute.xlu0 %2367
        %2369 = vrot.lane.b32.xlu0 %v2343, 127
        %v2370 = vpop.permute.xlu0 %2369
        %2371 = vrot.lane.b32.xlu0 %v2347, 127
        %v2372 = vpop.permute.xlu0 %2371
        %2373 = vrot.lane.b32.xlu0 %v2336, 127
        %v2374 = vpop.permute.xlu0 %2373
        %2375 = vrot.lane.b32.xlu0 %v2340, 127
        %v2376 = vpop.permute.xlu0 %2375
        %2377 = vrot.lane.b32.xlu0 %v2344, 127
        %v2378 = vpop.permute.xlu0 %2377
        %2379 = vrot.lane.b32.xlu0 %v2348, 127
        %v2380 = vpop.permute.xlu0 %2379
        %v2381 = vsel %vm402, %v2366, %v2374
        %v2382 = vsel %vm402, %v2368, %v2376
        %v2383 = vsel %vm402, %v2370, %v2378
        %v2384 = vsel %vm402, %v2372, %v2380
        %v2385 = vsel %vm402, %v2358, %v2366
        %v2386 = vsel %vm402, %v2360, %v2368
        %v2387 = vsel %vm402, %v2362, %v2370
        %v2388 = vsel %vm402, %v2364, %v2372
        %v2389 = vsel %vm402, %v2350, %v2358
        %v2390 = vsel %vm402, %v2352, %v2360
        %v2391 = vsel %vm402, %v2354, %v2362
        %v2392 = vsel %vm402, %v2356, %v2364
        %v2393 = vsel %vm402, %v2374, %v2350
        %v2394 = vsel %vm402, %v2376, %v2352
        %v2395 = vsel %vm402, %v2378, %v2354
        %v2396 = vsel %vm402, %v2380, %v2356
        %v2397 = vmax.f32 %v2333, %v2389
        %v2398 = vmax.f32 %v2334, %v2385
        %v2399 = vmax.f32 %v2335, %v2381
        %v2400 = vmax.f32 %v2336, %v2393
        %v2401 = vmax.f32 %v2337, %v2390
        %v2402 = vmax.f32 %v2338, %v2386
        %v2403 = vmax.f32 %v2339, %v2382
        %v2404 = vmax.f32 %v2340, %v2394
        %v2405 = vmax.f32 %v2341, %v2391
        %v2406 = vmax.f32 %v2342, %v2387
        %v2407 = vmax.f32 %v2343, %v2383
        %v2408 = vmax.f32 %v2344, %v2395
        %v2409 = vmax.f32 %v2345, %v2392
        %v2410 = vmax.f32 %v2346, %v2388
        %v2411 = vmax.f32 %v2347, %v2384
        %v2412 = vmax.f32 %v2348, %v2396
        %2413 = vrot.lane.b32.xlu0 %v2397, 108
        %v2414 = vpop.permute.xlu0 %2413
        %2415 = vrot.lane.b32.xlu0 %v2401, 108
        %v2416 = vpop.permute.xlu0 %2415
        %2417 = vrot.lane.b32.xlu0 %v2405, 108
        %v2418 = vpop.permute.xlu0 %2417
        %2419 = vrot.lane.b32.xlu0 %v2409, 108
        %v2420 = vpop.permute.xlu0 %2419
        %2421 = vrot.lane.b32.xlu0 %v2398, 108
        %v2422 = vpop.permute.xlu0 %2421
        %2423 = vrot.lane.b32.xlu0 %v2402, 108
        %v2424 = vpop.permute.xlu0 %2423
        %2425 = vrot.lane.b32.xlu0 %v2406, 108
        %v2426 = vpop.permute.xlu0 %2425
        %2427 = vrot.lane.b32.xlu0 %v2410, 108
        %v2428 = vpop.permute.xlu0 %2427
        %2429 = vrot.lane.b32.xlu0 %v2399, 108
        %v2430 = vpop.permute.xlu0 %2429
        %2431 = vrot.lane.b32.xlu0 %v2403, 108
        %v2432 = vpop.permute.xlu0 %2431
        %2433 = vrot.lane.b32.xlu0 %v2407, 108
        %v2434 = vpop.permute.xlu0 %2433
        %2435 = vrot.lane.b32.xlu0 %v2411, 108
        %v2436 = vpop.permute.xlu0 %2435
        %2437 = vrot.lane.b32.xlu0 %v2400, 108
        %v2438 = vpop.permute.xlu0 %2437
        %2439 = vrot.lane.b32.xlu0 %v2404, 108
        %v2440 = vpop.permute.xlu0 %2439
        %2441 = vrot.lane.b32.xlu0 %v2408, 108
        %v2442 = vpop.permute.xlu0 %2441
        %2443 = vrot.lane.b32.xlu0 %v2412, 108
        %v2444 = vpop.permute.xlu0 %2443
        %v2445 = vsel %vm428, %v2430, %v2438
        %v2446 = vsel %vm428, %v2432, %v2440
        %v2447 = vsel %vm428, %v2434, %v2442
        %v2448 = vsel %vm428, %v2436, %v2444
        %v2449 = vsel %vm428, %v2422, %v2430
        %v2450 = vsel %vm428, %v2424, %v2432
        %v2451 = vsel %vm428, %v2426, %v2434
        %v2452 = vsel %vm428, %v2428, %v2436
        %v2453 = vsel %vm428, %v2414, %v2422
        %v2454 = vsel %vm428, %v2416, %v2424
        %v2455 = vsel %vm428, %v2418, %v2426
        %v2456 = vsel %vm428, %v2420, %v2428
        %v2457 = vsel %vm428, %v2438, %v2414
        %v2458 = vsel %vm428, %v2440, %v2416
        %v2459 = vsel %vm428, %v2442, %v2418
        %v2460 = vsel %vm428, %v2444, %v2420
        %v2461 = vmax.f32 %v2397, %v2453
        %v2462 = vmax.f32 %v2398, %v2449
        %v2463 = vmax.f32 %v2399, %v2445
        %v2464 = vmax.f32 %v2400, %v2457
        %v2465 = vmax.f32 %v2401, %v2454
        %v2466 = vmax.f32 %v2402, %v2450
        %v2467 = vmax.f32 %v2403, %v2446
        %v2468 = vmax.f32 %v2404, %v2458
        %v2469 = vmax.f32 %v2405, %v2455
        %v2470 = vmax.f32 %v2406, %v2451
        %v2471 = vmax.f32 %v2407, %v2447
        %v2472 = vmax.f32 %v2408, %v2459
        %v2473 = vmax.f32 %v2409, %v2456
        %v2474 = vmax.f32 %v2410, %v2452
        %v2475 = vmax.f32 %v2411, %v2448
        %v2476 = vmax.f32 %v2412, %v2460
        %v2477 = vld [vmem:[#allocation3] sm:$0xff]
        %v2478 = vld [vmem:[#allocation3 + $0x8] sm:$0xff]
        %v2479 = vld [vmem:[#allocation3 + $0x10] sm:$0xff]
        %v2480 = vld [vmem:[#allocation3 + $0x18] sm:$0xff]
        %v2481 = vld [vmem:[#allocation3 + $0x20] sm:$0xff]
        %v2482 = vld [vmem:[#allocation3 + $0x28] sm:$0xff]
        %v2483 = vld [vmem:[#allocation3 + $0x30] sm:$0xff]
        %v2484 = vld [vmem:[#allocation3 + $0x38] sm:$0xff]
        %v2485 = vld [vmem:[#allocation3 + $0x40] sm:$0xff]
        %v2486 = vld [vmem:[#allocation3 + $0x48] sm:$0xff]
        %v2487 = vld [vmem:[#allocation3 + $0x50] sm:$0xff]
        %v2488 = vld [vmem:[#allocation3 + $0x58] sm:$0xff]
        %v2489 = vld [vmem:[#allocation3 + $0x60] sm:$0xff]
        %v2490 = vld [vmem:[#allocation3 + $0x68] sm:$0xff]
        %v2491 = vld [vmem:[#allocation3 + $0x70] sm:$0xff]
        %v2492 = vld [vmem:[#allocation3 + $0x78] sm:$0xff]
        %v2493 = vld [vmem:[#allocation3 + $0x80] sm:$0xff]
        %v2494 = vld [vmem:[#allocation3 + $0x88] sm:$0xff]
        %v2495 = vld [vmem:[#allocation3 + $0x90] sm:$0xff]
        %v2496 = vld [vmem:[#allocation3 + $0x98] sm:$0xff]
        %v2497 = vld [vmem:[#allocation3 + $0xa0] sm:$0xff]
        %v2498 = vld [vmem:[#allocation3 + $0xa8] sm:$0xff]
        %v2499 = vld [vmem:[#allocation3 + $0xb0] sm:$0xff]
        %v2500 = vld [vmem:[#allocation3 + $0xb8] sm:$0xff]
        %v2501 = vld [vmem:[#allocation3 + $0xc0] sm:$0xff]
        %v2502 = vld [vmem:[#allocation3 + $0xc8] sm:$0xff]
        %v2503 = vld [vmem:[#allocation3 + $0xd0] sm:$0xff]
        %v2504 = vld [vmem:[#allocation3 + $0xd8] sm:$0xff]
        %v2505 = vld [vmem:[#allocation3 + $0xe0] sm:$0xff]
        %v2506 = vld [vmem:[#allocation3 + $0xe8] sm:$0xff]
        %v2507 = vld [vmem:[#allocation3 + $0xf0] sm:$0xff]
        %v2508 = vld [vmem:[#allocation3 + $0xf8] sm:$0xff]
        %v2509 = vld [vmem:[#allocation3 + $0x100] sm:$0xff]
        %v2510 = vld [vmem:[#allocation3 + $0x108] sm:$0xff]
        %v2511 = vld [vmem:[#allocation3 + $0x110] sm:$0xff]
        %v2512 = vld [vmem:[#allocation3 + $0x118] sm:$0xff]
        %v2513 = vld [vmem:[#allocation3 + $0x120] sm:$0xff]
        %v2514 = vld [vmem:[#allocation3 + $0x128] sm:$0xff]
        %v2515 = vld [vmem:[#allocation3 + $0x130] sm:$0xff]
        %v2516 = vld [vmem:[#allocation3 + $0x138] sm:$0xff]
        %v2517 = vld [vmem:[#allocation3 + $0x140] sm:$0xff]
        %v2518 = vld [vmem:[#allocation3 + $0x148] sm:$0xff]
        %v2519 = vld [vmem:[#allocation3 + $0x150] sm:$0xff]
        %v2520 = vld [vmem:[#allocation3 + $0x158] sm:$0xff]
        %v2521 = vld [vmem:[#allocation3 + $0x160] sm:$0xff]
        %v2522 = vld [vmem:[#allocation3 + $0x168] sm:$0xff]
        %v2523 = vld [vmem:[#allocation3 + $0x170] sm:$0xff]
        %v2524 = vld [vmem:[#allocation3 + $0x178] sm:$0xff]
        %v2525 = vld [vmem:[#allocation3 + $0x180] sm:$0xff]
        %v2526 = vld [vmem:[#allocation3 + $0x188] sm:$0xff]
        %v2527 = vld [vmem:[#allocation3 + $0x190] sm:$0xff]
        %v2528 = vld [vmem:[#allocation3 + $0x198] sm:$0xff]
        %v2529 = vld [vmem:[#allocation3 + $0x1a0] sm:$0xff]
        %v2530 = vld [vmem:[#allocation3 + $0x1a8] sm:$0xff]
        %v2531 = vld [vmem:[#allocation3 + $0x1b0] sm:$0xff]
        %v2532 = vld [vmem:[#allocation3 + $0x1b8] sm:$0xff]
        %v2533 = vld [vmem:[#allocation3 + $0x1c0] sm:$0xff]
        %v2534 = vld [vmem:[#allocation3 + $0x1c8] sm:$0xff]
        %v2535 = vld [vmem:[#allocation3 + $0x1d0] sm:$0xff]
        %v2536 = vld [vmem:[#allocation3 + $0x1d8] sm:$0xff]
        %v2537 = vld [vmem:[#allocation3 + $0x1e0] sm:$0xff]
        %v2538 = vld [vmem:[#allocation3 + $0x1e8] sm:$0xff]
        %v2539 = vld [vmem:[#allocation3 + $0x1f0] sm:$0xff]
        %v2540 = vld [vmem:[#allocation3 + $0x1f8] sm:$0xff]
        %2541 = vmatprep.subr.mxu0 0.0
        %2542 = vmatpush1.msra.mxu0 %v2492
        %2543 = vmatprep.subr.mxu0 0.0
        %2544 = vmatpush1.msra.mxu0 %v2491
        %2545 = vmatprep.subr.mxu0 0.0
        %2546 = vmatpush1.msra.mxu0 %v2490
        %2547 = vmatprep.subr.mxu0 0.0
        %2548 = vmatpush1.msra.mxu0 %v2489
        %2549 = vmatprep.subr.mxu0 0.0
        %2550 = vmatpush1.msra.mxu0 %v2488
        %2551 = vmatprep.subr.mxu0 0.0
        %2552 = vmatpush1.msra.mxu0 %v2487
        %2553 = vmatprep.subr.mxu0 0.0
        %2554 = vmatpush1.msra.mxu0 %v2486
        %2555 = vmatprep.subr.mxu0 0.0
        %2556 = vmatpush1.msra.mxu0 %v2485
        %2557 = vmatprep.subr.mxu0 0.0
        %2558 = vmatpush1.msra.mxu0 %v2484
        %2559 = vmatprep.subr.mxu0 0.0
        %2560 = vmatpush1.msra.mxu0 %v2483
        %2561 = vmatprep.subr.mxu0 0.0
        %2562 = vmatpush1.msra.mxu0 %v2482
        %2563 = vmatprep.subr.mxu0 0.0
        %2564 = vmatpush1.msra.mxu0 %v2481
        %2565 = vmatprep.subr.mxu0 0.0
        %2566 = vmatpush1.msra.mxu0 %v2480
        %2567 = vmatprep.subr.mxu0 0.0
        %2568 = vmatpush1.msra.mxu0 %v2479
        %2569 = vmatprep.subr.mxu0 0.0
        %2570 = vmatpush1.msra.mxu0 %v2478
        %2571 = vmatprep.subr.mxu0 0.0
        %2572 = vmatpush1.msra.mxu0 %v2477
        %2573 = vmatprep.subr.mxu0 0.0
        %2574 = vmatpush2.msra.mxu0 %v2508
        %2575 = vmatprep.subr.mxu0 0.0
        %2576 = vmatpush2.msra.mxu0 %v2507
        %2577 = vmatprep.subr.mxu0 0.0
        %2578 = vmatpush2.msra.mxu0 %v2506
        %2579 = vmatprep.subr.mxu0 0.0
        %2580 = vmatpush2.msra.mxu0 %v2505
        %2581 = vmatprep.subr.mxu0 0.0
        %2582 = vmatpush2.msra.mxu0 %v2504
        %2583 = vmatprep.subr.mxu0 0.0
        %2584 = vmatpush2.msra.mxu0 %v2503
        %2585 = vmatprep.subr.mxu0 0.0
        %2586 = vmatpush2.msra.mxu0 %v2502
        %2587 = vmatprep.subr.mxu0 0.0
        %2588 = vmatpush2.msra.mxu0 %v2501
        %2589 = vmatprep.subr.mxu0 0.0
        %2590 = vmatpush2.msra.mxu0 %v2500
        %2591 = vmatprep.subr.mxu0 0.0
        %2592 = vmatpush2.msra.mxu0 %v2499
        %2593 = vmatprep.subr.mxu0 0.0
        %2594 = vmatpush2.msra.mxu0 %v2498
        %2595 = vmatprep.subr.mxu0 0.0
        %2596 = vmatpush2.msra.mxu0 %v2497
        %2597 = vmatprep.subr.mxu0 0.0
        %2598 = vmatpush2.msra.mxu0 %v2496
        %2599 = vmatprep.subr.mxu0 0.0
        %2600 = vmatpush2.msra.mxu0 %v2495
        %2601 = vmatprep.subr.mxu0 0.0
        %2602 = vmatpush2.msra.mxu0 %v2494
        %2603 = vmatprep.subr.mxu0 0.0
        %2604 = vmatpush2.msra.mxu0 %v2493
        %2605 = vmatprep.mubr.f32.mxu0 %v2462
        %2606 = vmatmul.mubr.f32.gmra.mxu0 %v2461
        %v2607 = vpop.f32.mrf.mxu0
        %v2608 = vadd.f32 0.0, %v2607
        %v2609 = vpop.f32.mrf.mxu0
        %2610 = vmatprep.mubr.f32.mxu0 %v2466
        %2611 = vmatmul.mubr.f32.gmra.mxu0 %v2465
        %v2612 = vpop.f32.mrf.mxu0
        %v2613 = vadd.f32 0.0, %v2612
        %v2614 = vpop.f32.mrf.mxu0
        %2615 = vmatprep.mubr.f32.mxu0 %v2470
        %2616 = vmatmul.mubr.f32.gmra.mxu0 %v2469
        %v2617 = vpop.f32.mrf.mxu0
        %v2618 = vadd.f32 0.0, %v2617
        %v2619 = vpop.f32.mrf.mxu0
        %2620 = vmatprep.mubr.f32.mxu0 %v2474
        %2621 = vmatmul.mubr.f32.gmra.mxu0 %v2473
        %v2622 = vpop.f32.mrf.mxu0
        %v2623 = vadd.f32 0.0, %v2622
        %v2624 = vpop.f32.mrf.mxu0
        %2625 = vdwg.mxu0
        %2626 = vmatprep.subr.mxu0 0.0
        %2627 = vmatpush1.msra.mxu0 %v2524
        %2628 = vmatprep.subr.mxu0 0.0
        %2629 = vmatpush1.msra.mxu0 %v2523
        %2630 = vmatprep.subr.mxu0 0.0
        %2631 = vmatpush1.msra.mxu0 %v2522
        %2632 = vmatprep.subr.mxu0 0.0
        %2633 = vmatpush1.msra.mxu0 %v2521
        %2634 = vmatprep.subr.mxu0 0.0
        %2635 = vmatpush1.msra.mxu0 %v2520
        %2636 = vmatprep.subr.mxu0 0.0
        %2637 = vmatpush1.msra.mxu0 %v2519
        %2638 = vmatprep.subr.mxu0 0.0
        %2639 = vmatpush1.msra.mxu0 %v2518
        %2640 = vmatprep.subr.mxu0 0.0
        %2641 = vmatpush1.msra.mxu0 %v2517
        %2642 = vmatprep.subr.mxu0 0.0
        %2643 = vmatpush1.msra.mxu0 %v2516
        %2644 = vmatprep.subr.mxu0 0.0
        %2645 = vmatpush1.msra.mxu0 %v2515
        %2646 = vmatprep.subr.mxu0 0.0
        %2647 = vmatpush1.msra.mxu0 %v2514
        %2648 = vmatprep.subr.mxu0 0.0
        %2649 = vmatpush1.msra.mxu0 %v2513
        %2650 = vmatprep.subr.mxu0 0.0
        %2651 = vmatpush1.msra.mxu0 %v2512
        %2652 = vmatprep.subr.mxu0 0.0
        %2653 = vmatpush1.msra.mxu0 %v2511
        %2654 = vmatprep.subr.mxu0 0.0
        %2655 = vmatpush1.msra.mxu0 %v2510
        %2656 = vmatprep.subr.mxu0 0.0
        %2657 = vmatpush1.msra.mxu0 %v2509
        %2658 = vmatprep.subr.mxu0 0.0
        %2659 = vmatpush2.msra.mxu0 %v2540
        %2660 = vmatprep.subr.mxu0 0.0
        %2661 = vmatpush2.msra.mxu0 %v2539
        %2662 = vmatprep.subr.mxu0 0.0
        %2663 = vmatpush2.msra.mxu0 %v2538
        %2664 = vmatprep.subr.mxu0 0.0
        %2665 = vmatpush2.msra.mxu0 %v2537
        %2666 = vmatprep.subr.mxu0 0.0
        %2667 = vmatpush2.msra.mxu0 %v2536
        %2668 = vmatprep.subr.mxu0 0.0
        %2669 = vmatpush2.msra.mxu0 %v2535
        %2670 = vmatprep.subr.mxu0 0.0
        %2671 = vmatpush2.msra.mxu0 %v2534
        %2672 = vmatprep.subr.mxu0 0.0
        %2673 = vmatpush2.msra.mxu0 %v2533
        %2674 = vmatprep.subr.mxu0 0.0
        %2675 = vmatpush2.msra.mxu0 %v2532
        %2676 = vmatprep.subr.mxu0 0.0
        %2677 = vmatpush2.msra.mxu0 %v2531
        %2678 = vmatprep.subr.mxu0 0.0
        %2679 = vmatpush2.msra.mxu0 %v2530
        %2680 = vmatprep.subr.mxu0 0.0
        %2681 = vmatpush2.msra.mxu0 %v2529
        %2682 = vmatprep.subr.mxu0 0.0
        %2683 = vmatpush2.msra.mxu0 %v2528
        %2684 = vmatprep.subr.mxu0 0.0
        %2685 = vmatpush2.msra.mxu0 %v2527
        %2686 = vmatprep.subr.mxu0 0.0
        %2687 = vmatpush2.msra.mxu0 %v2526
        %2688 = vmatprep.subr.mxu0 0.0
        %2689 = vmatpush2.msra.mxu0 %v2525
        %2690 = vmatprep.mubr.f32.mxu0 %v2464
        %2691 = vmatmul.mubr.f32.gmra.mxu0 %v2463
        %v2692 = vpop.f32.mrf.mxu0
        %v2693 = vadd.f32 %v2608, %v2692
        %v2694 = vpop.f32.mrf.mxu0
        %2695 = vmatprep.mubr.f32.mxu0 %v2468
        %2696 = vmatmul.mubr.f32.gmra.mxu0 %v2467
        %v2697 = vpop.f32.mrf.mxu0
        %v2698 = vadd.f32 %v2613, %v2697
        %v2699 = vpop.f32.mrf.mxu0
        %2700 = vmatprep.mubr.f32.mxu0 %v2472
        %2701 = vmatmul.mubr.f32.gmra.mxu0 %v2471
        %v2702 = vpop.f32.mrf.mxu0
        %v2703 = vadd.f32 %v2618, %v2702
        %v2704 = vpop.f32.mrf.mxu0
        %2705 = vmatprep.mubr.f32.mxu0 %v2476
        %2706 = vmatmul.mubr.f32.gmra.mxu0 %v2475
        %v2707 = vpop.f32.mrf.mxu0
        %v2708 = vadd.f32 %v2623, %v2707
        %v2709 = vpop.f32.mrf.mxu0
        %2710 = vdwg.mxu0
        %2711 = vst [vmem:[%s365] sm:$0xff] %v2693
        %2712 = vst [vmem:[%s365 + $0x8] sm:$0xff] %v2698
        %2713 = vst [vmem:[%s365 + $0x10] sm:$0xff] %v2703
        %2714 = vst [vmem:[%s365 + $0x18] sm:$0xff] %v2708
        %s2715 = sand.u32 %s248, 1
        %s2716 = scalar_lea.sflag [#allocation5], %s2715
        %s2717 = sand.u32 %s248, 1
        %s2718 = smul.addr %s2717, 32
        %s2719 = scalar_lea.vmem [#allocation6], %s2718
        // Predicated region
        $region65: #{tpu_custom_call.1} parent=59 // pred_check
          %p2720 = pneg %p258
        $region66: #{tpu_custom_call.1} parent=59 // pred_check_branch
          %2722 = sbr.rel (%p2720) target = $region68
        $region67: #{tpu_custom_call.1} parent=59 // pred_region
          %s2724 = ssub.s32 512, 512
          %2725 = vsyncadd %s2716, %s2724
          %s2726 = smul.addr %s25, 4
          %s2727 = smul.addr %s2726, 128
          %s2728 = scalar_lea.hbm %s10, %s2727
          %s2729 = sshll.u32 %s2719, 4
          %s2730 = int_to_ptr.vmem [resolvable:$true] %s2729
          %2735 = dma.vmem_to_hbm [thread:$0]  %s2730, 512, %s2728, %s2716, 128, 128, 8
        $region68: #{tpu_custom_call.1} parent=59 // pred_fallthru
          _
      $region60: #{tpu_custom_call.1} parent=5 // pred_fallthru
        _
      %p2736 = scmp.le.s32.totalorder 2, %s20
      // Predicated region
      $region69: #{tpu_custom_call.1} parent=5 // pred_check
        %p2737 = pneg %p2736
      $region70: #{tpu_custom_call.1} parent=5 // pred_check_branch
        %2739 = sbr.rel (%p2737) target = $region72
      $region71: #{tpu_custom_call.1} parent=5 // pred_region
        %s2740 = ssub.s32 %s20, 2
        // Predicated region
        $region73: #{tpu_custom_call.1} parent=71 // pred_check
          %p2741 = pneg %p264
        $region74: #{tpu_custom_call.1} parent=71 // pred_check_branch
          %2743 = sbr.rel (%p2741) target = $region76
        $region75: #{tpu_custom_call.1} parent=71 // pred_region
          %s2744 = sand.u32 %s249, 1
          %s2745 = scalar_lea.sflag [#allocation5], %s2744
          %s2746 = sand.u32 %s249, 1
          %s2747 = smul.addr %s2746, 32
          %s2748 = scalar_lea.vmem [#allocation6], %s2747
          %2749 = dma.done %s2745, 512
        $region76: #{tpu_custom_call.1} parent=71 // pred_fallthru
          _
      $region72: #{tpu_custom_call.1} parent=5 // pred_fallthru
        _
    $region6: #{tpu_custom_call.1} parent=1 // loop_footer
      %s24 = sadd.s32 1, %s20
    $region7: #{tpu_custom_call.1} parent=1 // loop_footer_branch
      %19 = sbr.rel target = $region3
    $region8: #{tpu_custom_call.1} parent=1 // loop_exit
      _
    %2750 = vsyncpa [#allocation4], 1
    %s2751 = scalar_lea.sflag [#allocation4], 1
    %2752 = vsyncpa %s2751, 1
    %2753 = vsyncpa [#allocation5], 1
    %s2754 = scalar_lea.sflag [#allocation5], 1
    %2755 = vsyncpa %s2754, 1

</llo_original>
